<compile_context>
chip_gen: v6e
topology: v6e:2x2x1
jax: 0.10.0
libtpu: 0.0.40
codegen_flags: <defaults>
</compile_context>

<pallas_src>
import functools

import jax
import jax.numpy as jnp
from jax import lax
from jax.experimental import pallas as pl
from jax.experimental.pallas import tpu as pltpu


def _conv_bn_lrelu_kernel(
    x_ref, w_ref, scale_ref, bias_ref, o_ref, xpad_ref, *,
    kernel_size, stride, dilation, pad, height, width,
    h_out, w_out, c_in, c_out, negative_slope,
):
    """One batch image per grid step, channels-last (C on the 128-lane axis).

    x_ref    : (1, H, W, C_in)        unpadded NHWC slice
    w_ref    : (K*K, C_in, C_out)     conv weight, taps flattened
    scale_ref: (1, C_out)             folded BN scale  = gamma / sqrt(var + eps)
    bias_ref : (1, C_out)             folded BN bias   = beta - mean * scale
    o_ref    : (1, H_out, W_out, C_out)
    xpad_ref : (H+2p, W+2p, C_in)     VMEM scratch for in-kernel zero padding
    """
    if pad > 0:
        # Zero-pad inside the kernel: no extra HBM pass for a padded copy.
        xpad_ref[...] = jnp.zeros_like(xpad_ref)
        xpad_ref[pad:pad + height, pad:pad + width, :] = x_ref[0]
        x = xpad_ref[...]
    else:
        x = x_ref[0]

    acc = jnp.zeros((h_out * w_out, c_out), jnp.float32)
    for kh in range(kernel_size):
        for kw in range(kernel_size):
            r0 = kh * dilation
            c0 = kw * dilation
            # TODO(synk): stride > 1 uses a strided slice on H/W (sublane/outer
            # dims only; C stays on lanes so no cross-lane shuffles).
            patch = lax.slice(
                x,
                (r0, c0, 0),
                (r0 + (h_out - 1) * stride + 1,
                 c0 + (w_out - 1) * stride + 1,
                 c_in),
                (stride, stride, 1) if stride > 1 else None,
            )  # (h_out, w_out, c_in)
            acc = acc + jnp.dot(
                patch.reshape(h_out * w_out, c_in),
                w_ref[kh * kernel_size + kw],
                preferred_element_type=jnp.float32,
            )

    # Fused BN (inference) + LeakyReLU epilogue.
    y = acc * scale_ref[...] + bias_ref[...]
    y = jnp.where(y >= 0, y, y * negative_slope)
    o_ref[0] = y.reshape(h_out, w_out, c_out).astype(o_ref.dtype)


def basic_conv2d(x, weight, gamma, beta, running_mean, running_var, *,
                 stride=1, dilation=1, eps=1e-5, negative_slope=0.1):
    """Forward of Darknet BasicConv2d: conv(bias=False) + BN(inference) + LeakyReLU(0.1).

    x: (N, C_in, H, W) NCHW (PyTorch layout); weight: (C_out, C_in, K, K).
    Returns (N, C_out, H_out, W_out).
    """
    n, c_in, h, w = x.shape
    c_out, c_in_w, k, k2 = weight.shape
    assert c_in_w == c_in and k == k2
    pad = (k - 1) // 2
    h_out = (h + 2 * pad - dilation * (k - 1) - 1) // stride + 1
    w_out = (w + 2 * pad - dilation * (k - 1) - 1) // stride + 1

    # Fold BatchNorm (inference mode) into per-channel scale/bias.
    scale = (gamma / jnp.sqrt(running_var + eps)).astype(jnp.float32)
    bias = (beta - running_mean * scale).astype(jnp.float32)

    # Channels-last so C maps to the 128-lane axis inside the kernel.
    x_nhwc = jnp.transpose(x, (0, 2, 3, 1))
    # (C_out, C_in, K, K) -> (K*K, C_in, C_out): one (C_in, C_out) matmul per tap.
    w_taps = jnp.transpose(weight, (2, 3, 1, 0)).reshape(k * k, c_in, c_out)

    kernel = functools.partial(
        _conv_bn_lrelu_kernel,
        kernel_size=k, stride=stride, dilation=dilation, pad=pad,
        height=h, width=w, h_out=h_out, w_out=w_out,
        c_in=c_in, c_out=c_out, negative_slope=negative_slope,
    )

    # TODO(synk): for very large feature maps, tile H with a halo (manual DMA)
    # so per-step blocks stay inside v7x's 64 MiB VMEM; whole-image blocks are
    # fine at Darknet-224 sizes and for this test.
    out_nhwc = pl.pallas_call(
        kernel,
        out_shape=jax.ShapeDtypeStruct((n, h_out, w_out, c_out), x.dtype),
        grid=(n,),
        in_specs=[
            pl.BlockSpec((1, h, w, c_in), lambda i: (i, 0, 0, 0)),
            pl.BlockSpec((k * k, c_in, c_out), lambda i: (0, 0, 0)),
            pl.BlockSpec((1, c_out), lambda i: (0, 0)),
            pl.BlockSpec((1, c_out), lambda i: (0, 0)),
        ],
        out_specs=pl.BlockSpec((1, h_out, w_out, c_out), lambda i: (i, 0, 0, 0)),
        scratch_shapes=[pltpu.VMEM((h + 2 * pad, w + 2 * pad, c_in), x.dtype)],
        compiler_params=pltpu.CompilerParams(dimension_semantics=("parallel",)),
    )(x_nhwc, w_taps, scale.reshape(1, c_out), bias.reshape(1, c_out))

    return jnp.transpose(out_nhwc, (0, 3, 1, 2))


def _reference(x, weight, gamma, beta, mean, var, *, stride, dilation,
               eps=1e-5, negative_slope=0.1):
    """Pure-JAX reference: conv + BN(inference) + LeakyReLU, NCHW."""
    k = weight.shape[2]
    pad = (k - 1) // 2
    y = lax.conv_general_dilated(
        x, weight,
        window_strides=(stride, stride),
        padding=[(pad, pad), (pad, pad)],
        rhs_dilation=(dilation, dilation),
        dimension_numbers=("NCHW", "OIHW", "NCHW"),
    )
    s = gamma / jnp.sqrt(var + eps)
    b = beta - mean * s
    y = y * s[None, :, None, None] + b[None, :, None, None]
    return jnp.where(y >= 0, y, negative_slope * y)


if __name__ == "__main__":
    key = jax.random.PRNGKey(0)
    n, c_in, c_out = 2, 4, 8
    configs = [
        dict(k=3, stride=1, dilation=1, hw=16),   # typical Darknet 3x3 conv
        dict(k=1, stride=1, dilation=1, hw=16),   # 1x1 conv (pad=0 path)
        dict(k=3, stride=1, dilation=2, hw=18),   # dilated conv
    ]
    for cfg in configs:
        key, kx, kw_, kg, kb, km, kv = jax.random.split(key, 7)
        hw, k = cfg["hw"], cfg["k"]
        # Quantize conv operands to bf16-exact values so the Pallas MXU matmul
        # and the XLA reference conv see identical products -> tight tolerance.
        x = jax.random.normal(kx, (n, c_in, hw, hw), jnp.float32)
        x = x.astype(jnp.bfloat16).astype(jnp.float32)
        w = 0.3 * jax.random.normal(kw_, (c_out, c_in, k, k), jnp.float32)
        w = w.astype(jnp.bfloat16).astype(jnp.float32)
        gamma = 1.0 + 0.1 * jax.random.normal(kg, (c_out,), jnp.float32)
        beta = 0.1 * jax.random.normal(kb, (c_out,), jnp.float32)
        mean = 0.1 * jax.random.normal(km, (c_out,), jnp.float32)
        var = jax.random.uniform(kv, (c_out,), jnp.float32, 0.5, 1.5)

        out = basic_conv2d(x, w, gamma, beta, mean, var,
                           stride=cfg["stride"], dilation=cfg["dilation"])
        out = jax.block_until_ready(out)
        ref = _reference(x, w, gamma, beta, mean, var,
                         stride=cfg["stride"], dilation=cfg["dilation"])
        assert out.shape == ref.shape, (cfg, out.shape, ref.shape)
        max_err = float(jnp.max(jnp.abs(out - ref)))
        assert jnp.allclose(out, ref, atol=1e-3, rtol=1e-3), (cfg, max_err)

    print("KERNEL_OK")
</pallas_src>

<mosaic_0001>
module attributes {stable_mosaic.version = 11 : i64} {
  func.func @_conv_bn_lrelu_kernel(%arg0: i32, %arg1: memref<1x16x16x4xf32, #tpu.memory_space<vmem>>, %arg2: memref<9x4x8xf32, #tpu.memory_space<vmem>>, %arg3: memref<1x8xf32, #tpu.memory_space<vmem>>, %arg4: memref<1x8xf32, #tpu.memory_space<vmem>>, %arg5: memref<1x16x16x8xf32, #tpu.memory_space<vmem>>, %arg6: memref<18x18x4xf32, #tpu.memory_space<vmem>>) attributes {dimension_semantics = [#tpu.dimension_semantics<parallel>], iteration_bounds = array<i64: 2>, scalar_prefetch = 0 : i64, scratch_operands = 1 : i64, tpu.core_type = #tpu.core_type<tc>, window_params = [{transform_indices = @transform_0, window_bounds = array<i64: 1, 16, 16, 4>}, {pipeline_mode = #tpu.pipeline_mode<synchronous>, transform_indices = @transform_1, window_bounds = array<i64: 9, 4, 8>}, {pipeline_mode = #tpu.pipeline_mode<synchronous>, transform_indices = @transform_2, window_bounds = array<i64: 1, 8>}, {pipeline_mode = #tpu.pipeline_mode<synchronous>, transform_indices = @transform_3, window_bounds = array<i64: 1, 8>}, {transform_indices = @transform_4, window_bounds = array<i64: 1, 16, 16, 8>}]} {
    %cst = arith.constant 0.000000e+00 : f32
    %0 = vector.broadcast %cst : f32 to vector<18x18x4xf32>
    %c0 = arith.constant 0 : index
    %c0_0 = arith.constant 0 : index
    %c0_1 = arith.constant 0 : index
    %1 = vector.load %arg6[%c0, %c0_0, %c0_1] : memref<18x18x4xf32, #tpu.memory_space<vmem>>, vector<18x18x4xf32>
    tpu.vector_store %arg6[%c0, %c0_0, %c0_1], %0 {strides = array<i32>} : memref<18x18x4xf32, #tpu.memory_space<vmem>>, vector<18x18x4xf32>,
    %c0_2 = arith.constant 0 : index
    %c0_3 = arith.constant 0 : index
    %c0_4 = arith.constant 0 : index
    %c0_5 = arith.constant 0 : index
    %2 = vector.load %arg1[%c0_2, %c0_3, %c0_4, %c0_5] : memref<1x16x16x4xf32, #tpu.memory_space<vmem>>, vector<1x16x16x4xf32>
    %3 = vector.shape_cast %2 : vector<1x16x16x4xf32> to vector<16x16x4xf32>
    %c1 = arith.constant 1 : index
    %c1_6 = arith.constant 1 : index
    %c0_7 = arith.constant 0 : index
    %4 = vector.load %arg6[%c1, %c1_6, %c0_7] : memref<18x18x4xf32, #tpu.memory_space<vmem>>, vector<16x16x4xf32>
    tpu.vector_store %arg6[%c1, %c1_6, %c0_7], %3 {strides = array<i32>} : memref<18x18x4xf32, #tpu.memory_space<vmem>>, vector<16x16x4xf32>,
    %c0_8 = arith.constant 0 : index
    %c0_9 = arith.constant 0 : index
    %c0_10 = arith.constant 0 : index
    %5 = vector.load %arg6[%c0_8, %c0_9, %c0_10] : memref<18x18x4xf32, #tpu.memory_space<vmem>>, vector<18x18x4xf32>
    %cst_11 = arith.constant 0.000000e+00 : f32
    %6 = vector.broadcast %cst_11 : f32 to vector<256x8xf32>
    %7 = vector.extract_strided_slice %5 {offsets = [0, 0, 0], sizes = [16, 16, 4], strides = [1, 1, 1]} : vector<18x18x4xf32> to vector<16x16x4xf32>
    %8 = vector.shape_cast %7 : vector<16x16x4xf32> to vector<256x4xf32>
    %c0_12 = arith.constant 0 : index
    %c0_13 = arith.constant 0 : index
    %c0_14 = arith.constant 0 : index
    %9 = vector.load %arg2[%c0_12, %c0_13, %c0_14] : memref<9x4x8xf32, #tpu.memory_space<vmem>>, vector<1x4x8xf32>
    %10 = vector.shape_cast %9 : vector<1x4x8xf32> to vector<4x8xf32>
    %cst_15 = arith.constant dense<0.000000e+00> : vector<256x8xf32>
    %11 = tpu.matmul %8, %10, %cst_15 {dimension_numbers = #tpu.dot_dimension_numbers<[1], [0], [0], [1], [0, 0, 1, 1], [], []>} : vector<256x4xf32>, vector<4x8xf32>, vector<256x8xf32> -> vector<256x8xf32>
    %12 = arith.addf %6, %11 : vector<256x8xf32>
    %13 = vector.extract_strided_slice %5 {offsets = [0, 1, 0], sizes = [16, 16, 4], strides = [1, 1, 1]} : vector<18x18x4xf32> to vector<16x16x4xf32>
    %14 = vector.shape_cast %13 : vector<16x16x4xf32> to vector<256x4xf32>
    %c1_16 = arith.constant 1 : index
    %c0_17 = arith.constant 0 : index
    %c0_18 = arith.constant 0 : index
    %15 = vector.load %arg2[%c1_16, %c0_17, %c0_18] : memref<9x4x8xf32, #tpu.memory_space<vmem>>, vector<1x4x8xf32>
    %16 = vector.shape_cast %15 : vector<1x4x8xf32> to vector<4x8xf32>
    %cst_19 = arith.constant dense<0.000000e+00> : vector<256x8xf32>
    %17 = tpu.matmul %14, %16, %cst_19 {dimension_numbers = #tpu.dot_dimension_numbers<[1], [0], [0], [1], [0, 0, 1, 1], [], []>} : vector<256x4xf32>, vector<4x8xf32>, vector<256x8xf32> -> vector<256x8xf32>
    %18 = arith.addf %12, %17 : vector<256x8xf32>
    %19 = vector.extract_strided_slice %5 {offsets = [0, 2, 0], sizes = [16, 16, 4], strides = [1, 1, 1]} : vector<18x18x4xf32> to vector<16x16x4xf32>
    %20 = vector.shape_cast %19 : vector<16x16x4xf32> to vector<256x4xf32>
    %c2 = arith.constant 2 : index
    %c0_20 = arith.constant 0 : index
    %c0_21 = arith.constant 0 : index
    %21 = vector.load %arg2[%c2, %c0_20, %c0_21] : memref<9x4x8xf32, #tpu.memory_space<vmem>>, vector<1x4x8xf32>
    %22 = vector.shape_cast %21 : vector<1x4x8xf32> to vector<4x8xf32>
    %cst_22 = arith.constant dense<0.000000e+00> : vector<256x8xf32>
    %23 = tpu.matmul %20, %22, %cst_22 {dimension_numbers = #tpu.dot_dimension_numbers<[1], [0], [0], [1], [0, 0, 1, 1], [], []>} : vector<256x4xf32>, vector<4x8xf32>, vector<256x8xf32> -> vector<256x8xf32>
    %24 = arith.addf %18, %23 : vector<256x8xf32>
    %25 = vector.extract_strided_slice %5 {offsets = [1, 0, 0], sizes = [16, 16, 4], strides = [1, 1, 1]} : vector<18x18x4xf32> to vector<16x16x4xf32>
    %26 = vector.shape_cast %25 : vector<16x16x4xf32> to vector<256x4xf32>
    %c3 = arith.constant 3 : index
    %c0_23 = arith.constant 0 : index
    %c0_24 = arith.constant 0 : index
    %27 = vector.load %arg2[%c3, %c0_23, %c0_24] : memref<9x4x8xf32, #tpu.memory_space<vmem>>, vector<1x4x8xf32>
    %28 = vector.shape_cast %27 : vector<1x4x8xf32> to vector<4x8xf32>
    %cst_25 = arith.constant dense<0.000000e+00> : vector<256x8xf32>
    %29 = tpu.matmul %26, %28, %cst_25 {dimension_numbers = #tpu.dot_dimension_numbers<[1], [0], [0], [1], [0, 0, 1, 1], [], []>} : vector<256x4xf32>, vector<4x8xf32>, vector<256x8xf32> -> vector<256x8xf32>
    %30 = arith.addf %24, %29 : vector<256x8xf32>
    %31 = vector.extract_strided_slice %5 {offsets = [1, 1, 0], sizes = [16, 16, 4], strides = [1, 1, 1]} : vector<18x18x4xf32> to vector<16x16x4xf32>
    %32 = vector.shape_cast %31 : vector<16x16x4xf32> to vector<256x4xf32>
    %c4 = arith.constant 4 : index
    %c0_26 = arith.constant 0 : index
    %c0_27 = arith.constant 0 : index
    %33 = vector.load %arg2[%c4, %c0_26, %c0_27] : memref<9x4x8xf32, #tpu.memory_space<vmem>>, vector<1x4x8xf32>
    %34 = vector.shape_cast %33 : vector<1x4x8xf32> to vector<4x8xf32>
    %cst_28 = arith.constant dense<0.000000e+00> : vector<256x8xf32>
    %35 = tpu.matmul %32, %34, %cst_28 {dimension_numbers = #tpu.dot_dimension_numbers<[1], [0], [0], [1], [0, 0, 1, 1], [], []>} : vector<256x4xf32>, vector<4x8xf32>, vector<256x8xf32> -> vector<256x8xf32>
    %36 = arith.addf %30, %35 : vector<256x8xf32>
    %37 = vector.extract_strided_slice %5 {offsets = [1, 2, 0], sizes = [16, 16, 4], strides = [1, 1, 1]} : vector<18x18x4xf32> to vector<16x16x4xf32>
    %38 = vector.shape_cast %37 : vector<16x16x4xf32> to vector<256x4xf32>
    %c5 = arith.constant 5 : index
    %c0_29 = arith.constant 0 : index
    %c0_30 = arith.constant 0 : index
    %39 = vector.load %arg2[%c5, %c0_29, %c0_30] : memref<9x4x8xf32, #tpu.memory_space<vmem>>, vector<1x4x8xf32>
    %40 = vector.shape_cast %39 : vector<1x4x8xf32> to vector<4x8xf32>
    %cst_31 = arith.constant dense<0.000000e+00> : vector<256x8xf32>
    %41 = tpu.matmul %38, %40, %cst_31 {dimension_numbers = #tpu.dot_dimension_numbers<[1], [0], [0], [1], [0, 0, 1, 1], [], []>} : vector<256x4xf32>, vector<4x8xf32>, vector<256x8xf32> -> vector<256x8xf32>
    %42 = arith.addf %36, %41 : vector<256x8xf32>
    %43 = vector.extract_strided_slice %5 {offsets = [2, 0, 0], sizes = [16, 16, 4], strides = [1, 1, 1]} : vector<18x18x4xf32> to vector<16x16x4xf32>
    %44 = vector.shape_cast %43 : vector<16x16x4xf32> to vector<256x4xf32>
    %c6 = arith.constant 6 : index
    %c0_32 = arith.constant 0 : index
    %c0_33 = arith.constant 0 : index
    %45 = vector.load %arg2[%c6, %c0_32, %c0_33] : memref<9x4x8xf32, #tpu.memory_space<vmem>>, vector<1x4x8xf32>
    %46 = vector.shape_cast %45 : vector<1x4x8xf32> to vector<4x8xf32>
    %cst_34 = arith.constant dense<0.000000e+00> : vector<256x8xf32>
    %47 = tpu.matmul %44, %46, %cst_34 {dimension_numbers = #tpu.dot_dimension_numbers<[1], [0], [0], [1], [0, 0, 1, 1], [], []>} : vector<256x4xf32>, vector<4x8xf32>, vector<256x8xf32> -> vector<256x8xf32>
    %48 = arith.addf %42, %47 : vector<256x8xf32>
    %49 = vector.extract_strided_slice %5 {offsets = [2, 1, 0], sizes = [16, 16, 4], strides = [1, 1, 1]} : vector<18x18x4xf32> to vector<16x16x4xf32>
    %50 = vector.shape_cast %49 : vector<16x16x4xf32> to vector<256x4xf32>
    %c7 = arith.constant 7 : index
    %c0_35 = arith.constant 0 : index
    %c0_36 = arith.constant 0 : index
    %51 = vector.load %arg2[%c7, %c0_35, %c0_36] : memref<9x4x8xf32, #tpu.memory_space<vmem>>, vector<1x4x8xf32>
    %52 = vector.shape_cast %51 : vector<1x4x8xf32> to vector<4x8xf32>
    %cst_37 = arith.constant dense<0.000000e+00> : vector<256x8xf32>
    %53 = tpu.matmul %50, %52, %cst_37 {dimension_numbers = #tpu.dot_dimension_numbers<[1], [0], [0], [1], [0, 0, 1, 1], [], []>} : vector<256x4xf32>, vector<4x8xf32>, vector<256x8xf32> -> vector<256x8xf32>
    %54 = arith.addf %48, %53 : vector<256x8xf32>
    %55 = vector.extract_strided_slice %5 {offsets = [2, 2, 0], sizes = [16, 16, 4], strides = [1, 1, 1]} : vector<18x18x4xf32> to vector<16x16x4xf32>
    %56 = vector.shape_cast %55 : vector<16x16x4xf32> to vector<256x4xf32>
    %c8 = arith.constant 8 : index
    %c0_38 = arith.constant 0 : index
    %c0_39 = arith.constant 0 : index
    %57 = vector.load %arg2[%c8, %c0_38, %c0_39] : memref<9x4x8xf32, #tpu.memory_space<vmem>>, vector<1x4x8xf32>
    %58 = vector.shape_cast %57 : vector<1x4x8xf32> to vector<4x8xf32>
    %cst_40 = arith.constant dense<0.000000e+00> : vector<256x8xf32>
    %59 = tpu.matmul %56, %58, %cst_40 {dimension_numbers = #tpu.dot_dimension_numbers<[1], [0], [0], [1], [0, 0, 1, 1], [], []>} : vector<256x4xf32>, vector<4x8xf32>, vector<256x8xf32> -> vector<256x8xf32>
    %60 = arith.addf %54, %59 : vector<256x8xf32>
    %c0_41 = arith.constant 0 : index
    %c0_42 = arith.constant 0 : index
    %61 = vector.load %arg3[%c0_41, %c0_42] : memref<1x8xf32, #tpu.memory_space<vmem>>, vector<1x8xf32>
    %62 = vector.broadcast %61 : vector<1x8xf32> to vector<256x8xf32>
    %63 = arith.mulf %60, %62 : vector<256x8xf32>
    %c0_43 = arith.constant 0 : index
    %c0_44 = arith.constant 0 : index
    %64 = vector.load %arg4[%c0_43, %c0_44] : memref<1x8xf32, #tpu.memory_space<vmem>>, vector<1x8xf32>
    %65 = vector.broadcast %64 : vector<1x8xf32> to vector<256x8xf32>
    %66 = arith.addf %63, %65 : vector<256x8xf32>
    %cst_45 = arith.constant 0.000000e+00 : f32
    %67 = vector.broadcast %cst_45 : f32 to vector<256x8xf32>
    %68 = arith.cmpf oge, %66, %67 : vector<256x8xf32>
    %cst_46 = arith.constant 1.000000e-01 : f32
    %69 = vector.broadcast %cst_46 : f32 to vector<256x8xf32>
    %70 = arith.mulf %66, %69 : vector<256x8xf32>
    %71 = arith.select %68, %66, %70 : vector<256x8xi1>, vector<256x8xf32>
    %72 = vector.shape_cast %71 : vector<256x8xf32> to vector<16x16x8xf32>
    %c0_47 = arith.constant 0 : index
    %c0_48 = arith.constant 0 : index
    %c0_49 = arith.constant 0 : index
    %c0_50 = arith.constant 0 : index
    %73 = vector.load %arg5[%c0_47, %c0_48, %c0_49, %c0_50] : memref<1x16x16x8xf32, #tpu.memory_space<vmem>>, vector<1x16x16x8xf32>
    %74 = vector.shape_cast %73 : vector<1x16x16x8xf32> to vector<16x16x8xf32>
    %75 = vector.shape_cast %72 : vector<16x16x8xf32> to vector<1x16x16x8xf32>
    tpu.vector_store %arg5[%c0_47, %c0_48, %c0_49, %c0_50], %75 {strides = array<i32>} : memref<1x16x16x8xf32, #tpu.memory_space<vmem>>, vector<1x16x16x8xf32>,
    return
  }
  func.func @transform_0(%arg0: i32) -> (i32, i32, i32, i32) {
    %c0_i32 = arith.constant 0 : i32
    %c0_i32_0 = arith.constant 0 : i32
    %c0_i32_1 = arith.constant 0 : i32
    %c0_i32_2 = arith.constant 0 : i32
    return %arg0, %c0_i32, %c0_i32_0, %c0_i32_1 : i32, i32, i32, i32
  }
  func.func @transform_1(%arg0: i32) -> (i32, i32, i32) {
    %c0_i32 = arith.constant 0 : i32
    %c0_i32_0 = arith.constant 0 : i32
    %c0_i32_1 = arith.constant 0 : i32
    %c0_i32_2 = arith.constant 0 : i32
    return %c0_i32, %c0_i32_0, %c0_i32_1 : i32, i32, i32
  }
  func.func @transform_2(%arg0: i32) -> (i32, i32) {
    %c0_i32 = arith.constant 0 : i32
    %c0_i32_0 = arith.constant 0 : i32
    %c0_i32_1 = arith.constant 0 : i32
    return %c0_i32, %c0_i32_0 : i32, i32
  }
  func.func @transform_3(%arg0: i32) -> (i32, i32) {
    %c0_i32 = arith.constant 0 : i32
    %c0_i32_0 = arith.constant 0 : i32
    %c0_i32_1 = arith.constant 0 : i32
    return %c0_i32, %c0_i32_0 : i32, i32
  }
  func.func @transform_4(%arg0: i32) -> (i32, i32, i32, i32) {
    %c0_i32 = arith.constant 0 : i32
    %c0_i32_0 = arith.constant 0 : i32
    %c0_i32_1 = arith.constant 0 : i32
    %c0_i32_2 = arith.constant 0 : i32
    return %arg0, %c0_i32, %c0_i32_0, %c0_i32_1 : i32, i32, i32, i32
  }
}

</mosaic_0001>

<llo_original>
// kernel: tpu_custom_call.1
$region0: #{tpu_custom_call.1}
  #allocation0 [shape = 'u32[]', space=smem, size = 0x4, offset = 0x4, fixed_abs, tag = 'smem constant byte address 0x4 - core index']
  #allocation1 [shape = 'u32[144,128]{1,0:T(1,128)}', space=vmem, size = 0x12000, scoped, tag = 'internal scratch']
  #allocation2 [shape = 'f32[18,18,4]{2,1,0:T(8,128)}', space=vmem, size = 0x36000, scoped, tag = 'scratch operand']
  %s0 = inlined_call_operand.vmem [shape: f32[2,16,16,4], index: 0, kind: input, shape index: {}]
  %s1 = inlined_call_operand.vmem [shape: f32[9,4,8], index: 1, kind: input, shape index: {}]
  %s2 = inlined_call_operand.vmem [shape: f32[1,8], index: 2, kind: input, shape index: {}]
  %s3 = inlined_call_operand.vmem [shape: f32[1,8], index: 3, kind: input, shape index: {}]
  %s4 = inlined_call_operand.vmem [shape: f32[2,16,16,8], index: 4, kind: output, shape index: {}]
  %s5 = sld [smem:[#allocation0]]
  $region49: #{tpu_custom_call.1} parent=0
    _
  %s7 = ssub.s32 1, %s5
  %s8 = scalar_select 0, %s7, %s5
  loop: start=0, step=1, limit=4
  $region2: #{tpu_custom_call.1} parent=0 // loop_pre_header
    _
  $region3: #{tpu_custom_call.1} parent=0 // loop_header
    %s10 = sphi 0, %s14
    %p11 = scmp.ge.s32.totalorder %s10, 4
    %s20 = sphi 0, %s22
    %s23 = sphi 0, %s20
    %s24 = sphi 0, %s23
    %s40 = sphi 0, %s24
    %s44 = sphi 0, %s44
    %s46 = sphi 0, %s44
    %s47 = sphi 0, %s46
    %s61 = sphi 0, %s47
    %s65 = sphi 0, %s65
    %s67 = sphi 0, %s65
    %s68 = sphi 0, %s67
    %s82 = sphi 0, %s68
    %s86 = sphi 0, %s86
    %s88 = sphi 0, %s86
    %s89 = sphi 0, %s88
    %s103 = sphi 0, %s89
    %s109 = sphi 0, %s111
    %s112 = sphi 0, %s109
    %s113 = sphi 0, %s112
    %s129 = sphi 0, %s113
  $region4: #{tpu_custom_call.1} parent=0 // loop_header_branch
    %13 = sbr.rel (%p11) target = $region8
  $region5: #{tpu_custom_call.1} parent=0 // loop_body
    %s15 = ssub.s32 %s10, 1
    %s16 = ssub.s32 %s10, 2
    %s17 = sadd.s32 %s10, 1
    %s18 = ssub.s32 %s10, %s17
    %p19 = scmp.eq.s32.totalorder %s18, 0
    %s21 = sadd.s32 %s20, 1
    %s22 = scalar_select %p19, %s20, %s21
    %p25 = pneg %p19
    %p26 = scmp.eq.s32.totalorder %s10, 1
    %p27 = por %p25, %p26
    %p28 = scmp.ne.s32.totalorder %s20, %s23
    %p29 = scmp.eq.s32.totalorder %s10, 0
    %p30 = por %p28, %p29
    %p31 = scmp.ne.s32.totalorder %s20, %s23
    %p32 = scmp.eq.s32.totalorder %s15, 1
    %p33 = por %p31, %p32
    %p34 = scmp.ne.s32.totalorder %s23, %s24
    %p35 = scmp.eq.s32.totalorder %s15, 0
    %p36 = por %p34, %p35
    %p37 = scmp.ne.s32.totalorder %s23, %s24
    %p38 = scmp.eq.s32.totalorder %s16, 1
    %p39 = por %p37, %p38
    %p41 = scmp.ne.s32.totalorder %s24, %s40
    %p42 = scmp.eq.s32.totalorder %s16, 0
    %p43 = por %p41, %p42
    %s45 = sadd.s32 %s44, 1
    %p48 = scmp.eq.s32.totalorder %s10, 1
    %p49 = scmp.ne.s32.totalorder %s44, %s46
    %p50 = scmp.eq.s32.totalorder %s10, 0
    %p51 = por %p49, %p50
    %p52 = scmp.ne.s32.totalorder %s44, %s46
    %p53 = scmp.eq.s32.totalorder %s15, 1
    %p54 = por %p52, %p53
    %p55 = scmp.ne.s32.totalorder %s46, %s47
    %p56 = scmp.eq.s32.totalorder %s15, 0
    %p57 = por %p55, %p56
    %p58 = scmp.ne.s32.totalorder %s46, %s47
    %p59 = scmp.eq.s32.totalorder %s16, 1
    %p60 = por %p58, %p59
    %p62 = scmp.ne.s32.totalorder %s47, %s61
    %p63 = scmp.eq.s32.totalorder %s16, 0
    %p64 = por %p62, %p63
    %s66 = sadd.s32 %s65, 1
    %p69 = scmp.eq.s32.totalorder %s10, 1
    %p70 = scmp.ne.s32.totalorder %s65, %s67
    %p71 = scmp.eq.s32.totalorder %s10, 0
    %p72 = por %p70, %p71
    %p73 = scmp.ne.s32.totalorder %s65, %s67
    %p74 = scmp.eq.s32.totalorder %s15, 1
    %p75 = por %p73, %p74
    %p76 = scmp.ne.s32.totalorder %s67, %s68
    %p77 = scmp.eq.s32.totalorder %s15, 0
    %p78 = por %p76, %p77
    %p79 = scmp.ne.s32.totalorder %s67, %s68
    %p80 = scmp.eq.s32.totalorder %s16, 1
    %p81 = por %p79, %p80
    %p83 = scmp.ne.s32.totalorder %s68, %s82
    %p84 = scmp.eq.s32.totalorder %s16, 0
    %p85 = por %p83, %p84
    %s87 = sadd.s32 %s86, 1
    %p90 = scmp.eq.s32.totalorder %s10, 1
    %p91 = scmp.ne.s32.totalorder %s86, %s88
    %p92 = scmp.eq.s32.totalorder %s10, 0
    %p93 = por %p91, %p92
    %p94 = scmp.ne.s32.totalorder %s86, %s88
    %p95 = scmp.eq.s32.totalorder %s15, 1
    %p96 = por %p94, %p95
    %p97 = scmp.ne.s32.totalorder %s88, %s89
    %p98 = scmp.eq.s32.totalorder %s15, 0
    %p99 = por %p97, %p98
    %p100 = scmp.ne.s32.totalorder %s88, %s89
    %p101 = scmp.eq.s32.totalorder %s16, 1
    %p102 = por %p100, %p101
    %p104 = scmp.ne.s32.totalorder %s89, %s103
    %p105 = scmp.eq.s32.totalorder %s16, 0
    %p106 = por %p104, %p105
    %s107 = ssub.s32 %s10, %s17
    %p108 = scmp.eq.s32.totalorder %s107, 0
    %s110 = sadd.s32 %s109, 1
    %s111 = scalar_select %p108, %s109, %s110
    %p114 = pneg %p108
    %p115 = scmp.eq.s32.totalorder %s10, 1
    %p116 = por %p114, %p115
    %p117 = scmp.ne.s32.totalorder %s109, %s112
    %p118 = scmp.eq.s32.totalorder %s10, 0
    %p119 = por %p117, %p118
    %p120 = scmp.ne.s32.totalorder %s109, %s112
    %p121 = scmp.eq.s32.totalorder %s15, 1
    %p122 = por %p120, %p121
    %p123 = scmp.ne.s32.totalorder %s112, %s113
    %p124 = scmp.eq.s32.totalorder %s15, 0
    %p125 = por %p123, %p124
    %p126 = scmp.ne.s32.totalorder %s112, %s113
    %p127 = scmp.eq.s32.totalorder %s16, 1
    %p128 = por %p126, %p127
    %p130 = scmp.ne.s32.totalorder %s113, %s129
    %p131 = scmp.eq.s32.totalorder %s16, 0
    %p132 = por %p130, %p131
    %p133 = scmp.le.s32.totalorder 1, %s10
    %p134 = scmp.lt.s32.totalorder %s10, 3
    %p135 = pnand %p133, %p134
    %p136 = pneg %p135
    // Predicated region
    $region9: #{tpu_custom_call.1} parent=5 // pred_check
      _
    $region10: #{tpu_custom_call.1} parent=5 // pred_check_branch
      %138 = sbr.rel (%p135) target = $region12
    $region11: #{tpu_custom_call.1} parent=5 // pred_region
      %s139 = ssub.s32 %s10, 1
      // Predicated region
      $region13: #{tpu_custom_call.1} parent=11 // pred_check
        %p140 = pneg %p57
      $region14: #{tpu_custom_call.1} parent=11 // pred_check_branch
        %142 = sbr.rel (%p140) target = $region16
      $region15: #{tpu_custom_call.1} parent=11 // pred_region
        _
      $region16: #{tpu_custom_call.1} parent=11 // pred_fallthru
        _
      // Predicated region
      $region17: #{tpu_custom_call.1} parent=11 // pred_check
        %p143 = pneg %p78
      $region18: #{tpu_custom_call.1} parent=11 // pred_check_branch
        %145 = sbr.rel (%p143) target = $region20
      $region19: #{tpu_custom_call.1} parent=11 // pred_region
        _
      $region20: #{tpu_custom_call.1} parent=11 // pred_fallthru
        _
      // Predicated region
      $region21: #{tpu_custom_call.1} parent=11 // pred_check
        %p146 = pneg %p99
      $region22: #{tpu_custom_call.1} parent=11 // pred_check_branch
        %148 = sbr.rel (%p146) target = $region24
      $region23: #{tpu_custom_call.1} parent=11 // pred_region
        _
      $region24: #{tpu_custom_call.1} parent=11 // pred_fallthru
        _
    $region12: #{tpu_custom_call.1} parent=5 // pred_fallthru
      _
    %p149 = scmp.lt.s32.totalorder %s10, 2
    // Predicated region
    $region25: #{tpu_custom_call.1} parent=5 // pred_check
      %p150 = pneg %p149
    $region26: #{tpu_custom_call.1} parent=5 // pred_check_branch
      %152 = sbr.rel (%p150) target = $region28
    $region27: #{tpu_custom_call.1} parent=5 // pred_region
      // Predicated region
      $region29: #{tpu_custom_call.1} parent=27 // pred_check
        %p153 = pneg %p30
      $region30: #{tpu_custom_call.1} parent=27 // pred_check_branch
        %155 = sbr.rel (%p153) target = $region32
      $region31: #{tpu_custom_call.1} parent=27 // pred_region
        %p156 = scmp.lt.s32.totalorder %s10, 1
        %s157 = scalar_select %p156, %s10, 1
        %s158 = smul.addr %s157, 32
        %s159 = smul.addr %s158, 8
        %s160 = scalar_lea.vmem %s0, %s159
      $region32: #{tpu_custom_call.1} parent=27 // pred_fallthru
        _
    $region28: #{tpu_custom_call.1} parent=5 // pred_fallthru
      _
    %p161 = scmp.le.s32.totalorder 1, %s10
    %p162 = scmp.lt.s32.totalorder %s10, 3
    %p163 = pnand %p161, %p162
    %p164 = pneg %p163
    // Predicated region
    $region33: #{tpu_custom_call.1} parent=5 // pred_check
      _
    $region34: #{tpu_custom_call.1} parent=5 // pred_check_branch
      %166 = sbr.rel (%p163) target = $region36
    $region35: #{tpu_custom_call.1} parent=5 // pred_region
      %s167 = ssub.s32 %s10, 1
      %p168 = scmp.lt.s32.totalorder %s15, 1
      %s169 = scalar_select %p168, %s15, 1
      %s170 = smul.addr %s169, 32
      %s171 = smul.addr %s170, 8
      %s172 = scalar_lea.vmem %s0, %s171
      %p173 = pneg %p36
      %p174 = pneg %p33
      %p175 = pneg %p57
      %p176 = pneg %p54
      %p177 = pneg %p78
      %p178 = pneg %p75
      %p179 = pneg %p99
      %p180 = pneg %p96
      %p181 = pneg %p125
      %p182 = pneg %p122
      %p183 = scmp.lt.s32.totalorder %s15, 1
      %s184 = scalar_select %p183, %s15, 1
      %s185 = smul.addr %s184, 32
      %s186 = smul.addr %s185, 8
      %s187 = scalar_lea.vmem %s4, %s186
      %p188 = scmp.lt.s32.totalorder %s15, 1
      %s189 = scalar_select %p188, %s15, 1
      %s190 = smul.addr %s189, 32
      %s191 = smul.addr %s190, 8
      %s192 = scalar_lea.vmem %s0, %s191
      %p193 = scmp.lt.s32.totalorder %s15, 1
      %s194 = scalar_select %p193, %s15, 1
      %s195 = smul.addr %s194, 32
      %s196 = smul.addr %s195, 8
      %s197 = scalar_lea.vmem %s4, %s196
      %vm198 = vcmask 31744
      %199 = vst.msk [vmem:[#allocation2] sm:$0xff] %vm198, 0.0
      %200 = vst.msk [vmem:[#allocation2 + $0x8] sm:$0xff] %vm198, 0.0
      %vm201 = vcmask 25600
      %202 = vst.msk [vmem:[#allocation2 + $0x10] sm:$0x3] %vm201, 0.0
      %203 = vst.msk [vmem:[#allocation2 + $0x18] sm:$0xff] %vm198, 0.0
      %204 = vst.msk [vmem:[#allocation2 + $0x20] sm:$0xff] %vm198, 0.0
      %205 = vst.msk [vmem:[#allocation2 + $0x28] sm:$0x3] %vm201, 0.0
      %206 = vst.msk [vmem:[#allocation2 + $0x30] sm:$0xff] %vm198, 0.0
      %207 = vst.msk [vmem:[#allocation2 + $0x38] sm:$0xff] %vm198, 0.0
      %208 = vst.msk [vmem:[#allocation2 + $0x40] sm:$0x3] %vm201, 0.0
      %209 = vst.msk [vmem:[#allocation2 + $0x48] sm:$0xff] %vm198, 0.0
      %210 = vst.msk [vmem:[#allocation2 + $0x50] sm:$0xff] %vm198, 0.0
      %211 = vst.msk [vmem:[#allocation2 + $0x58] sm:$0x3] %vm201, 0.0
      %212 = vst.msk [vmem:[#allocation2 + $0x60] sm:$0xff] %vm198, 0.0
      %213 = vst.msk [vmem:[#allocation2 + $0x68] sm:$0xff] %vm198, 0.0
      %214 = vst.msk [vmem:[#allocation2 + $0x70] sm:$0x3] %vm201, 0.0
      %215 = vst.msk [vmem:[#allocation2 + $0x78] sm:$0xff] %vm198, 0.0
      %216 = vst.msk [vmem:[#allocation2 + $0x80] sm:$0xff] %vm198, 0.0
      %217 = vst.msk [vmem:[#allocation2 + $0x88] sm:$0x3] %vm201, 0.0
      %218 = vst.msk [vmem:[#allocation2 + $0x90] sm:$0xff] %vm198, 0.0
      %219 = vst.msk [vmem:[#allocation2 + $0x98] sm:$0xff] %vm198, 0.0
      %220 = vst.msk [vmem:[#allocation2 + $0xa0] sm:$0x3] %vm201, 0.0
      %221 = vst.msk [vmem:[#allocation2 + $0xa8] sm:$0xff] %vm198, 0.0
      %222 = vst.msk [vmem:[#allocation2 + $0xb0] sm:$0xff] %vm198, 0.0
      %223 = vst.msk [vmem:[#allocation2 + $0xb8] sm:$0x3] %vm201, 0.0
      %224 = vst.msk [vmem:[#allocation2 + $0xc0] sm:$0xff] %vm198, 0.0
      %225 = vst.msk [vmem:[#allocation2 + $0xc8] sm:$0xff] %vm198, 0.0
      %226 = vst.msk [vmem:[#allocation2 + $0xd0] sm:$0x3] %vm201, 0.0
      %227 = vst.msk [vmem:[#allocation2 + $0xd8] sm:$0xff] %vm198, 0.0
      %228 = vst.msk [vmem:[#allocation2 + $0xe0] sm:$0xff] %vm198, 0.0
      %229 = vst.msk [vmem:[#allocation2 + $0xe8] sm:$0x3] %vm201, 0.0
      %230 = vst.msk [vmem:[#allocation2 + $0xf0] sm:$0xff] %vm198, 0.0
      %231 = vst.msk [vmem:[#allocation2 + $0xf8] sm:$0xff] %vm198, 0.0
      %232 = vst.msk [vmem:[#allocation2 + $0x100] sm:$0x3] %vm201, 0.0
      %233 = vst.msk [vmem:[#allocation2 + $0x108] sm:$0xff] %vm198, 0.0
      %234 = vst.msk [vmem:[#allocation2 + $0x110] sm:$0xff] %vm198, 0.0
      %235 = vst.msk [vmem:[#allocation2 + $0x118] sm:$0x3] %vm201, 0.0
      %236 = vst.msk [vmem:[#allocation2 + $0x120] sm:$0xff] %vm198, 0.0
      %237 = vst.msk [vmem:[#allocation2 + $0x128] sm:$0xff] %vm198, 0.0
      %238 = vst.msk [vmem:[#allocation2 + $0x130] sm:$0x3] %vm201, 0.0
      %239 = vst.msk [vmem:[#allocation2 + $0x138] sm:$0xff] %vm198, 0.0
      %240 = vst.msk [vmem:[#allocation2 + $0x140] sm:$0xff] %vm198, 0.0
      %241 = vst.msk [vmem:[#allocation2 + $0x148] sm:$0x3] %vm201, 0.0
      %242 = vst.msk [vmem:[#allocation2 + $0x150] sm:$0xff] %vm198, 0.0
      %243 = vst.msk [vmem:[#allocation2 + $0x158] sm:$0xff] %vm198, 0.0
      %244 = vst.msk [vmem:[#allocation2 + $0x160] sm:$0x3] %vm201, 0.0
      %245 = vst.msk [vmem:[#allocation2 + $0x168] sm:$0xff] %vm198, 0.0
      %246 = vst.msk [vmem:[#allocation2 + $0x170] sm:$0xff] %vm198, 0.0
      %247 = vst.msk [vmem:[#allocation2 + $0x178] sm:$0x3] %vm201, 0.0
      %248 = vst.msk [vmem:[#allocation2 + $0x180] sm:$0xff] %vm198, 0.0
      %249 = vst.msk [vmem:[#allocation2 + $0x188] sm:$0xff] %vm198, 0.0
      %250 = vst.msk [vmem:[#allocation2 + $0x190] sm:$0x3] %vm201, 0.0
      %251 = vst.msk [vmem:[#allocation2 + $0x198] sm:$0xff] %vm198, 0.0
      %252 = vst.msk [vmem:[#allocation2 + $0x1a0] sm:$0xff] %vm198, 0.0
      %253 = vst.msk [vmem:[#allocation2 + $0x1a8] sm:$0x3] %vm201, 0.0
      %v254 = vld [vmem:[%s192] sm:$0xff]
      %v255 = vld [vmem:[%s192 + $0x8] sm:$0xff]
      %v256 = vld [vmem:[%s192 + $0x10] sm:$0xff]
      %v257 = vld [vmem:[%s192 + $0x18] sm:$0xff]
      %v258 = vld [vmem:[%s192 + $0x20] sm:$0xff]
      %v259 = vld [vmem:[%s192 + $0x28] sm:$0xff]
      %v260 = vld [vmem:[%s192 + $0x30] sm:$0xff]
      %v261 = vld [vmem:[%s192 + $0x38] sm:$0xff]
      %v262 = vld [vmem:[%s192 + $0x40] sm:$0xff]
      %v263 = vld [vmem:[%s192 + $0x48] sm:$0xff]
      %v264 = vld [vmem:[%s192 + $0x50] sm:$0xff]
      %v265 = vld [vmem:[%s192 + $0x58] sm:$0xff]
      %v266 = vld [vmem:[%s192 + $0x60] sm:$0xff]
      %v267 = vld [vmem:[%s192 + $0x68] sm:$0xff]
      %v268 = vld [vmem:[%s192 + $0x70] sm:$0xff]
      %v269 = vld [vmem:[%s192 + $0x78] sm:$0xff]
      %v270 = vld [vmem:[%s192 + $0x80] sm:$0xff]
      %v271 = vld [vmem:[%s192 + $0x88] sm:$0xff]
      %v272 = vld [vmem:[%s192 + $0x90] sm:$0xff]
      %v273 = vld [vmem:[%s192 + $0x98] sm:$0xff]
      %v274 = vld [vmem:[%s192 + $0xa0] sm:$0xff]
      %v275 = vld [vmem:[%s192 + $0xa8] sm:$0xff]
      %v276 = vld [vmem:[%s192 + $0xb0] sm:$0xff]
      %v277 = vld [vmem:[%s192 + $0xb8] sm:$0xff]
      %v278 = vld [vmem:[%s192 + $0xc0] sm:$0xff]
      %v279 = vld [vmem:[%s192 + $0xc8] sm:$0xff]
      %v280 = vld [vmem:[%s192 + $0xd0] sm:$0xff]
      %v281 = vld [vmem:[%s192 + $0xd8] sm:$0xff]
      %v282 = vld [vmem:[%s192 + $0xe0] sm:$0xff]
      %v283 = vld [vmem:[%s192 + $0xe8] sm:$0xff]
      %v284 = vld [vmem:[%s192 + $0xf0] sm:$0xff]
      %v285 = vld [vmem:[%s192 + $0xf8] sm:$0xff]
      %s286 = scalar_lea.vmem [#allocation2], 24
      %287 = vst.msk [vmem:[%s286 + $0x1] sm:$0xff] %vm198, %v254
      %288 = vst.msk [vmem:[%s286 + $0x9] sm:$0xff] %vm198, %v255
      %289 = vst.msk [vmem:[%s286 + $0x19] sm:$0xff] %vm198, %v256
      %290 = vst.msk [vmem:[%s286 + $0x21] sm:$0xff] %vm198, %v257
      %291 = vst.msk [vmem:[%s286 + $0x31] sm:$0xff] %vm198, %v258
      %292 = vst.msk [vmem:[%s286 + $0x39] sm:$0xff] %vm198, %v259
      %293 = vst.msk [vmem:[%s286 + $0x49] sm:$0xff] %vm198, %v260
      %294 = vst.msk [vmem:[%s286 + $0x51] sm:$0xff] %vm198, %v261
      %295 = vst.msk [vmem:[%s286 + $0x61] sm:$0xff] %vm198, %v262
      %296 = vst.msk [vmem:[%s286 + $0x69] sm:$0xff] %vm198, %v263
      %297 = vst.msk [vmem:[%s286 + $0x79] sm:$0xff] %vm198, %v264
      %298 = vst.msk [vmem:[%s286 + $0x81] sm:$0xff] %vm198, %v265
      %299 = vst.msk [vmem:[%s286 + $0x91] sm:$0xff] %vm198, %v266
      %300 = vst.msk [vmem:[%s286 + $0x99] sm:$0xff] %vm198, %v267
      %301 = vst.msk [vmem:[%s286 + $0xa9] sm:$0xff] %vm198, %v268
      %302 = vst.msk [vmem:[%s286 + $0xb1] sm:$0xff] %vm198, %v269
      %303 = vst.msk [vmem:[%s286 + $0xc1] sm:$0xff] %vm198, %v270
      %304 = vst.msk [vmem:[%s286 + $0xc9] sm:$0xff] %vm198, %v271
      %305 = vst.msk [vmem:[%s286 + $0xd9] sm:$0xff] %vm198, %v272
      %306 = vst.msk [vmem:[%s286 + $0xe1] sm:$0xff] %vm198, %v273
      %307 = vst.msk [vmem:[%s286 + $0xf1] sm:$0xff] %vm198, %v274
      %308 = vst.msk [vmem:[%s286 + $0xf9] sm:$0xff] %vm198, %v275
      %309 = vst.msk [vmem:[%s286 + $0x109] sm:$0xff] %vm198, %v276
      %310 = vst.msk [vmem:[%s286 + $0x111] sm:$0xff] %vm198, %v277
      %311 = vst.msk [vmem:[%s286 + $0x121] sm:$0xff] %vm198, %v278
      %312 = vst.msk [vmem:[%s286 + $0x129] sm:$0xff] %vm198, %v279
      %313 = vst.msk [vmem:[%s286 + $0x139] sm:$0xff] %vm198, %v280
      %314 = vst.msk [vmem:[%s286 + $0x141] sm:$0xff] %vm198, %v281
      %315 = vst.msk [vmem:[%s286 + $0x151] sm:$0xff] %vm198, %v282
      %316 = vst.msk [vmem:[%s286 + $0x159] sm:$0xff] %vm198, %v283
      %317 = vst.msk [vmem:[%s286 + $0x169] sm:$0xff] %vm198, %v284
      %318 = vst.msk [vmem:[%s286 + $0x171] sm:$0xff] %vm198, %v285
      %v319 = vld [vmem:[#allocation2] sm:$0xff]
      %v320 = vld [vmem:[#allocation2 + $0x8] sm:$0xff]
      %v321 = vld [vmem:[#allocation2 + $0x10] sm:$0x3]
      %v322 = vld [vmem:[#allocation2 + $0x18] sm:$0xff]
      %v323 = vld [vmem:[#allocation2 + $0x20] sm:$0xff]
      %v324 = vld [vmem:[#allocation2 + $0x28] sm:$0x3]
      %v325 = vld [vmem:[#allocation2 + $0x30] sm:$0xff]
      %v326 = vld [vmem:[#allocation2 + $0x38] sm:$0xff]
      %v327 = vld [vmem:[#allocation2 + $0x40] sm:$0x3]
      %v328 = vld [vmem:[#allocation2 + $0x48] sm:$0xff]
      %v329 = vld [vmem:[#allocation2 + $0x50] sm:$0xff]
      %v330 = vld [vmem:[#allocation2 + $0x58] sm:$0x3]
      %v331 = vld [vmem:[#allocation2 + $0x60] sm:$0xff]
      %v332 = vld [vmem:[#allocation2 + $0x68] sm:$0xff]
      %v333 = vld [vmem:[#allocation2 + $0x70] sm:$0x3]
      %v334 = vld [vmem:[#allocation2 + $0x78] sm:$0xff]
      %v335 = vld [vmem:[#allocation2 + $0x80] sm:$0xff]
      %v336 = vld [vmem:[#allocation2 + $0x88] sm:$0x3]
      %v337 = vld [vmem:[#allocation2 + $0x90] sm:$0xff]
      %v338 = vld [vmem:[#allocation2 + $0x98] sm:$0xff]
      %v339 = vld [vmem:[#allocation2 + $0xa0] sm:$0x3]
      %v340 = vld [vmem:[#allocation2 + $0xa8] sm:$0xff]
      %v341 = vld [vmem:[#allocation2 + $0xb0] sm:$0xff]
      %v342 = vld [vmem:[#allocation2 + $0xb8] sm:$0x3]
      %v343 = vld [vmem:[#allocation2 + $0xc0] sm:$0xff]
      %v344 = vld [vmem:[#allocation2 + $0xc8] sm:$0xff]
      %v345 = vld [vmem:[#allocation2 + $0xd0] sm:$0x3]
      %v346 = vld [vmem:[#allocation2 + $0xd8] sm:$0xff]
      %v347 = vld [vmem:[#allocation2 + $0xe0] sm:$0xff]
      %v348 = vld [vmem:[#allocation2 + $0xe8] sm:$0x3]
      %v349 = vld [vmem:[#allocation2 + $0xf0] sm:$0xff]
      %v350 = vld [vmem:[#allocation2 + $0xf8] sm:$0xff]
      %v351 = vld [vmem:[#allocation2 + $0x100] sm:$0x3]
      %v352 = vld [vmem:[#allocation2 + $0x108] sm:$0xff]
      %v353 = vld [vmem:[#allocation2 + $0x110] sm:$0xff]
      %v354 = vld [vmem:[#allocation2 + $0x118] sm:$0x3]
      %v355 = vld [vmem:[#allocation2 + $0x120] sm:$0xff]
      %v356 = vld [vmem:[#allocation2 + $0x128] sm:$0xff]
      %v357 = vld [vmem:[#allocation2 + $0x130] sm:$0x3]
      %v358 = vld [vmem:[#allocation2 + $0x138] sm:$0xff]
      %v359 = vld [vmem:[#allocation2 + $0x140] sm:$0xff]
      %v360 = vld [vmem:[#allocation2 + $0x148] sm:$0x3]
      %v361 = vld [vmem:[#allocation2 + $0x150] sm:$0xff]
      %v362 = vld [vmem:[#allocation2 + $0x158] sm:$0xff]
      %v363 = vld [vmem:[#allocation2 + $0x160] sm:$0x3]
      %v364 = vld [vmem:[#allocation2 + $0x168] sm:$0xff]
      %v365 = vld [vmem:[#allocation2 + $0x170] sm:$0xff]
      %v366 = vld [vmem:[#allocation2 + $0x178] sm:$0x3]
      %v367 = vld [vmem:[#allocation2 + $0x180] sm:$0xff]
      %v368 = vld [vmem:[#allocation2 + $0x188] sm:$0xff]
      %v369 = vld [vmem:[#allocation2 + $0x190] sm:$0x3]
      %v370 = vld [vmem:[#allocation2 + $0x198] sm:$0xff]
      %v371 = vld [vmem:[#allocation2 + $0x1a0] sm:$0xff]
      %v372 = vld [vmem:[#allocation2 + $0x1a8] sm:$0x3]
      %v373 = vld [vmem:[%s1] sm:$0xf]
      %vm422 = vcmask 1046528
      %v423 = vrot.slane %v319, 1
      %v424 = vrot.slane %v320, 1
      %v425 = vsel %vm422, %v423, %v424
      %v426 = vrot.slane %v321, 1
      %v427 = vsel %vm422, %v424, %v426
      %v428 = vrot.slane %v322, 1
      %v429 = vrot.slane %v323, 1
      %v430 = vsel %vm422, %v428, %v429
      %v431 = vrot.slane %v324, 1
      %v432 = vsel %vm422, %v429, %v431
      %v433 = vrot.slane %v325, 1
      %v434 = vrot.slane %v326, 1
      %v435 = vsel %vm422, %v433, %v434
      %v436 = vrot.slane %v327, 1
      %v437 = vsel %vm422, %v434, %v436
      %v438 = vrot.slane %v328, 1
      %v439 = vrot.slane %v329, 1
      %v440 = vsel %vm422, %v438, %v439
      %v441 = vrot.slane %v330, 1
      %v442 = vsel %vm422, %v439, %v441
      %v443 = vrot.slane %v331, 1
      %v444 = vrot.slane %v332, 1
      %v445 = vsel %vm422, %v443, %v444
      %v446 = vrot.slane %v333, 1
      %v447 = vsel %vm422, %v444, %v446
      %v448 = vrot.slane %v334, 1
      %v449 = vrot.slane %v335, 1
      %v450 = vsel %vm422, %v448, %v449
      %v451 = vrot.slane %v336, 1
      %v452 = vsel %vm422, %v449, %v451
      %v453 = vrot.slane %v337, 1
      %v454 = vrot.slane %v338, 1
      %v455 = vsel %vm422, %v453, %v454
      %v456 = vrot.slane %v339, 1
      %v457 = vsel %vm422, %v454, %v456
      %v458 = vrot.slane %v340, 1
      %v459 = vrot.slane %v341, 1
      %v460 = vsel %vm422, %v458, %v459
      %v461 = vrot.slane %v342, 1
      %v462 = vsel %vm422, %v459, %v461
      %v463 = vrot.slane %v343, 1
      %v464 = vrot.slane %v344, 1
      %v465 = vsel %vm422, %v463, %v464
      %v466 = vrot.slane %v345, 1
      %v467 = vsel %vm422, %v464, %v466
      %v468 = vrot.slane %v346, 1
      %v469 = vrot.slane %v347, 1
      %v470 = vsel %vm422, %v468, %v469
      %v471 = vrot.slane %v348, 1
      %v472 = vsel %vm422, %v469, %v471
      %v473 = vrot.slane %v349, 1
      %v474 = vrot.slane %v350, 1
      %v475 = vsel %vm422, %v473, %v474
      %v476 = vrot.slane %v351, 1
      %v477 = vsel %vm422, %v474, %v476
      %v478 = vrot.slane %v352, 1
      %v479 = vrot.slane %v353, 1
      %v480 = vsel %vm422, %v478, %v479
      %v481 = vrot.slane %v354, 1
      %v482 = vsel %vm422, %v479, %v481
      %v483 = vrot.slane %v355, 1
      %v484 = vrot.slane %v356, 1
      %v485 = vsel %vm422, %v483, %v484
      %v486 = vrot.slane %v357, 1
      %v487 = vsel %vm422, %v484, %v486
      %v488 = vrot.slane %v358, 1
      %v489 = vrot.slane %v359, 1
      %v490 = vsel %vm422, %v488, %v489
      %v491 = vrot.slane %v360, 1
      %v492 = vsel %vm422, %v489, %v491
      %v493 = vrot.slane %v361, 1
      %v494 = vrot.slane %v362, 1
      %v495 = vsel %vm422, %v493, %v494
      %v496 = vrot.slane %v363, 1
      %v497 = vsel %vm422, %v494, %v496
      %v498 = vrot.slane %v364, 1
      %v499 = vrot.slane %v365, 1
      %v500 = vsel %vm422, %v498, %v499
      %v501 = vrot.slane %v366, 1
      %v502 = vsel %vm422, %v499, %v501
      %s503 = scalar_lea.vmem %s1, 4
      %v504 = vld [vmem:[%s503] sm:$0xf]
      %v505 = vsel %vm198, %v425, 0
      %v507 = vsel %vm198, %v427, 0
      %v509 = vsel %vm198, %v430, 0
      %v511 = vsel %vm198, %v432, 0
      %v513 = vsel %vm198, %v435, 0
      %v515 = vsel %vm198, %v437, 0
      %v517 = vsel %vm198, %v440, 0
      %v519 = vsel %vm198, %v442, 0
      %v521 = vsel %vm198, %v445, 0
      %v523 = vsel %vm198, %v447, 0
      %v525 = vsel %vm198, %v450, 0
      %v527 = vsel %vm198, %v452, 0
      %v529 = vsel %vm198, %v455, 0
      %v531 = vsel %vm198, %v457, 0
      %v533 = vsel %vm198, %v460, 0
      %v535 = vsel %vm198, %v462, 0
      %v537 = vsel %vm198, %v465, 0
      %v539 = vsel %vm198, %v467, 0
      %v541 = vsel %vm198, %v470, 0
      %v543 = vsel %vm198, %v472, 0
      %v545 = vsel %vm198, %v475, 0
      %v547 = vsel %vm198, %v477, 0
      %v549 = vsel %vm198, %v480, 0
      %v551 = vsel %vm198, %v482, 0
      %v553 = vsel %vm198, %v485, 0
      %v555 = vsel %vm198, %v487, 0
      %v557 = vsel %vm198, %v490, 0
      %v559 = vsel %vm198, %v492, 0
      %v561 = vsel %vm198, %v495, 0
      %v563 = vsel %vm198, %v497, 0
      %v565 = vsel %vm198, %v500, 0
      %v567 = vsel %vm198, %v502, 0
      %vm569 = vcmask 1043456
      %v571 = vsel %vm569, %v504, 0
      %573 = vmatprep.subr.mxu0 0.0
      %574 = vmatpush1.msra.mxu0 0.0
      %575 = vmatprep.subr.mxu0 0.0
      %576 = vmatpush1.msra.mxu0 0.0
      %577 = vmatprep.subr.mxu0 0.0
      %578 = vmatpush1.msra.mxu0 0.0
      %579 = vmatprep.subr.mxu0 0.0
      %580 = vmatpush1.msra.mxu0 0.0
      %581 = vmatprep.subr.mxu0 0.0
      %582 = vmatpush1.msra.mxu0 0.0
      %583 = vmatprep.subr.mxu0 0.0
      %584 = vmatpush1.msra.mxu0 0.0
      %585 = vmatprep.subr.mxu0 0.0
      %586 = vmatpush1.msra.mxu0 0.0
      %587 = vmatprep.subr.mxu0 0.0
      %588 = vmatpush1.msra.mxu0 0.0
      %589 = vmatprep.subr.mxu0 0.0
      %590 = vmatpush1.msra.mxu0 0.0
      %591 = vmatprep.subr.mxu0 0.0
      %592 = vmatpush1.msra.mxu0 0.0
      %593 = vmatprep.subr.mxu0 0.0
      %594 = vmatpush1.msra.mxu0 0.0
      %595 = vmatprep.subr.mxu0 0.0
      %596 = vmatpush1.msra.mxu0 0.0
      %597 = vmatprep.subr.mxu0 0.0
      %598 = vmatpush1.msra.mxu0 0.0
      %599 = vmatprep.subr.mxu0 0.0
      %600 = vmatpush1.msra.mxu0 0.0
      %601 = vmatprep.subr.mxu0 0.0
      %602 = vmatpush1.msra.mxu0 0.0
      %603 = vmatprep.subr.mxu0 0.0
      %604 = vmatpush1.msra.mxu0 %v571
      %605 = vmatprep.subr.mxu0 0.0
      %606 = vmatpush2.msra.mxu0 0.0
      %607 = vmatprep.subr.mxu0 0.0
      %608 = vmatpush2.msra.mxu0 0.0
      %609 = vmatprep.subr.mxu0 0.0
      %610 = vmatpush2.msra.mxu0 0.0
      %611 = vmatprep.subr.mxu0 0.0
      %612 = vmatpush2.msra.mxu0 0.0
      %613 = vmatprep.subr.mxu0 0.0
      %614 = vmatpush2.msra.mxu0 0.0
      %615 = vmatprep.subr.mxu0 0.0
      %616 = vmatpush2.msra.mxu0 0.0
      %617 = vmatprep.subr.mxu0 0.0
      %618 = vmatpush2.msra.mxu0 0.0
      %619 = vmatprep.subr.mxu0 0.0
      %620 = vmatpush2.msra.mxu0 0.0
      %621 = vmatprep.subr.mxu0 0.0
      %622 = vmatpush2.msra.mxu0 0.0
      %623 = vmatprep.subr.mxu0 0.0
      %624 = vmatpush2.msra.mxu0 0.0
      %625 = vmatprep.subr.mxu0 0.0
      %626 = vmatpush2.msra.mxu0 0.0
      %627 = vmatprep.subr.mxu0 0.0
      %628 = vmatpush2.msra.mxu0 0.0
      %629 = vmatprep.subr.mxu0 0.0
      %630 = vmatpush2.msra.mxu0 0.0
      %631 = vmatprep.subr.mxu0 0.0
      %632 = vmatpush2.msra.mxu0 0.0
      %633 = vmatprep.subr.mxu0 0.0
      %634 = vmatpush2.msra.mxu0 0.0
      %635 = vmatprep.subr.mxu0 0.0
      %636 = vmatpush2.msra.mxu0 0.0
      %637 = vmatprep.mubr.f32.mxu0 0.0
      %638 = vmatmul.mubr.f32.gmra.mxu0 %v505
      %v639 = vpop.f32.mrf.mxu0
      %v640 = vadd.f32 0.0, %v639
      %v641 = vpop.f32.mrf.mxu0
      %642 = vmatprep.mubr.f32.mxu0 0.0
      %643 = vmatmul.mubr.f32.gmra.mxu0 %v507
      %v644 = vpop.f32.mrf.mxu0
      %v645 = vadd.f32 0.0, %v644
      %v646 = vpop.f32.mrf.mxu0
      %647 = vmatprep.mubr.f32.mxu0 0.0
      %648 = vmatmul.mubr.f32.gmra.mxu0 %v509
      %v649 = vpop.f32.mrf.mxu0
      %v650 = vadd.f32 0.0, %v649
      %v651 = vpop.f32.mrf.mxu0
      %652 = vmatprep.mubr.f32.mxu0 0.0
      %653 = vmatmul.mubr.f32.gmra.mxu0 %v511
      %v654 = vpop.f32.mrf.mxu0
      %v655 = vadd.f32 0.0, %v654
      %v656 = vpop.f32.mrf.mxu0
      %657 = vmatprep.mubr.f32.mxu0 0.0
      %658 = vmatmul.mubr.f32.gmra.mxu0 %v513
      %v659 = vpop.f32.mrf.mxu0
      %v660 = vadd.f32 0.0, %v659
      %v661 = vpop.f32.mrf.mxu0
      %662 = vmatprep.mubr.f32.mxu0 0.0
      %663 = vmatmul.mubr.f32.gmra.mxu0 %v515
      %v664 = vpop.f32.mrf.mxu0
      %v665 = vadd.f32 0.0, %v664
      %v666 = vpop.f32.mrf.mxu0
      %667 = vmatprep.mubr.f32.mxu0 0.0
      %668 = vmatmul.mubr.f32.gmra.mxu0 %v517
      %v669 = vpop.f32.mrf.mxu0
      %v670 = vadd.f32 0.0, %v669
      %v671 = vpop.f32.mrf.mxu0
      %672 = vmatprep.mubr.f32.mxu0 0.0
      %673 = vmatmul.mubr.f32.gmra.mxu0 %v519
      %v674 = vpop.f32.mrf.mxu0
      %v675 = vadd.f32 0.0, %v674
      %v676 = vpop.f32.mrf.mxu0
      %677 = vmatprep.mubr.f32.mxu0 0.0
      %678 = vmatmul.mubr.f32.gmra.mxu0 %v521
      %v679 = vpop.f32.mrf.mxu0
      %v680 = vadd.f32 0.0, %v679
      %v681 = vpop.f32.mrf.mxu0
      %682 = vmatprep.mubr.f32.mxu0 0.0
      %683 = vmatmul.mubr.f32.gmra.mxu0 %v523
      %v684 = vpop.f32.mrf.mxu0
      %v685 = vadd.f32 0.0, %v684
      %v686 = vpop.f32.mrf.mxu0
      %687 = vmatprep.mubr.f32.mxu0 0.0
      %688 = vmatmul.mubr.f32.gmra.mxu0 %v525
      %v689 = vpop.f32.mrf.mxu0
      %v690 = vadd.f32 0.0, %v689
      %v691 = vpop.f32.mrf.mxu0
      %692 = vmatprep.mubr.f32.mxu0 0.0
      %693 = vmatmul.mubr.f32.gmra.mxu0 %v527
      %v694 = vpop.f32.mrf.mxu0
      %v695 = vadd.f32 0.0, %v694
      %v696 = vpop.f32.mrf.mxu0
      %697 = vmatprep.mubr.f32.mxu0 0.0
      %698 = vmatmul.mubr.f32.gmra.mxu0 %v529
      %v699 = vpop.f32.mrf.mxu0
      %v700 = vadd.f32 0.0, %v699
      %v701 = vpop.f32.mrf.mxu0
      %702 = vmatprep.mubr.f32.mxu0 0.0
      %703 = vmatmul.mubr.f32.gmra.mxu0 %v531
      %v704 = vpop.f32.mrf.mxu0
      %v705 = vadd.f32 0.0, %v704
      %v706 = vpop.f32.mrf.mxu0
      %707 = vmatprep.mubr.f32.mxu0 0.0
      %708 = vmatmul.mubr.f32.gmra.mxu0 %v533
      %v709 = vpop.f32.mrf.mxu0
      %v710 = vadd.f32 0.0, %v709
      %v711 = vpop.f32.mrf.mxu0
      %712 = vmatprep.mubr.f32.mxu0 0.0
      %713 = vmatmul.mubr.f32.gmra.mxu0 %v535
      %v714 = vpop.f32.mrf.mxu0
      %v715 = vadd.f32 0.0, %v714
      %v716 = vpop.f32.mrf.mxu0
      %717 = vmatprep.mubr.f32.mxu0 0.0
      %718 = vmatmul.mubr.f32.gmra.mxu0 %v537
      %v719 = vpop.f32.mrf.mxu0
      %v720 = vadd.f32 0.0, %v719
      %v721 = vpop.f32.mrf.mxu0
      %722 = vmatprep.mubr.f32.mxu0 0.0
      %723 = vmatmul.mubr.f32.gmra.mxu0 %v539
      %v724 = vpop.f32.mrf.mxu0
      %v725 = vadd.f32 0.0, %v724
      %v726 = vpop.f32.mrf.mxu0
      %727 = vmatprep.mubr.f32.mxu0 0.0
      %728 = vmatmul.mubr.f32.gmra.mxu0 %v541
      %v729 = vpop.f32.mrf.mxu0
      %v730 = vadd.f32 0.0, %v729
      %v731 = vpop.f32.mrf.mxu0
      %732 = vmatprep.mubr.f32.mxu0 0.0
      %733 = vmatmul.mubr.f32.gmra.mxu0 %v543
      %v734 = vpop.f32.mrf.mxu0
      %v735 = vadd.f32 0.0, %v734
      %v736 = vpop.f32.mrf.mxu0
      %737 = vmatprep.mubr.f32.mxu0 0.0
      %738 = vmatmul.mubr.f32.gmra.mxu0 %v545
      %v739 = vpop.f32.mrf.mxu0
      %v740 = vadd.f32 0.0, %v739
      %v741 = vpop.f32.mrf.mxu0
      %742 = vmatprep.mubr.f32.mxu0 0.0
      %743 = vmatmul.mubr.f32.gmra.mxu0 %v547
      %v744 = vpop.f32.mrf.mxu0
      %v745 = vadd.f32 0.0, %v744
      %v746 = vpop.f32.mrf.mxu0
      %747 = vmatprep.mubr.f32.mxu0 0.0
      %748 = vmatmul.mubr.f32.gmra.mxu0 %v549
      %v749 = vpop.f32.mrf.mxu0
      %v750 = vadd.f32 0.0, %v749
      %v751 = vpop.f32.mrf.mxu0
      %752 = vmatprep.mubr.f32.mxu0 0.0
      %753 = vmatmul.mubr.f32.gmra.mxu0 %v551
      %v754 = vpop.f32.mrf.mxu0
      %v755 = vadd.f32 0.0, %v754
      %v756 = vpop.f32.mrf.mxu0
      %757 = vmatprep.mubr.f32.mxu0 0.0
      %758 = vmatmul.mubr.f32.gmra.mxu0 %v553
      %v759 = vpop.f32.mrf.mxu0
      %v760 = vadd.f32 0.0, %v759
      %v761 = vpop.f32.mrf.mxu0
      %762 = vmatprep.mubr.f32.mxu0 0.0
      %763 = vmatmul.mubr.f32.gmra.mxu0 %v555
      %v764 = vpop.f32.mrf.mxu0
      %v765 = vadd.f32 0.0, %v764
      %v766 = vpop.f32.mrf.mxu0
      %767 = vmatprep.mubr.f32.mxu0 0.0
      %768 = vmatmul.mubr.f32.gmra.mxu0 %v557
      %v769 = vpop.f32.mrf.mxu0
      %v770 = vadd.f32 0.0, %v769
      %v771 = vpop.f32.mrf.mxu0
      %772 = vmatprep.mubr.f32.mxu0 0.0
      %773 = vmatmul.mubr.f32.gmra.mxu0 %v559
      %v774 = vpop.f32.mrf.mxu0
      %v775 = vadd.f32 0.0, %v774
      %v776 = vpop.f32.mrf.mxu0
      %777 = vmatprep.mubr.f32.mxu0 0.0
      %778 = vmatmul.mubr.f32.gmra.mxu0 %v561
      %v779 = vpop.f32.mrf.mxu0
      %v780 = vadd.f32 0.0, %v779
      %v781 = vpop.f32.mrf.mxu0
      %782 = vmatprep.mubr.f32.mxu0 0.0
      %783 = vmatmul.mubr.f32.gmra.mxu0 %v563
      %v784 = vpop.f32.mrf.mxu0
      %v785 = vadd.f32 0.0, %v784
      %v786 = vpop.f32.mrf.mxu0
      %787 = vmatprep.mubr.f32.mxu0 0.0
      %788 = vmatmul.mubr.f32.gmra.mxu0 %v565
      %v789 = vpop.f32.mrf.mxu0
      %v790 = vadd.f32 0.0, %v789
      %v791 = vpop.f32.mrf.mxu0
      %792 = vmatprep.mubr.f32.mxu0 0.0
      %793 = vmatmul.mubr.f32.gmra.mxu0 %v567
      %v794 = vpop.f32.mrf.mxu0
      %v795 = vadd.f32 0.0, %v794
      %v796 = vpop.f32.mrf.mxu0
      %797 = vdwg.mxu0
      %v798 = vsel %vm198, %v319, 0
      %v800 = vsel %vm198, %v320, 0
      %v802 = vsel %vm198, %v322, 0
      %v804 = vsel %vm198, %v323, 0
      %v806 = vsel %vm198, %v325, 0
      %v808 = vsel %vm198, %v326, 0
      %v810 = vsel %vm198, %v328, 0
      %v812 = vsel %vm198, %v329, 0
      %v814 = vsel %vm198, %v331, 0
      %v816 = vsel %vm198, %v332, 0
      %v818 = vsel %vm198, %v334, 0
      %v820 = vsel %vm198, %v335, 0
      %v822 = vsel %vm198, %v337, 0
      %v824 = vsel %vm198, %v338, 0
      %v826 = vsel %vm198, %v340, 0
      %v828 = vsel %vm198, %v341, 0
      %v830 = vsel %vm198, %v343, 0
      %v832 = vsel %vm198, %v344, 0
      %v834 = vsel %vm198, %v346, 0
      %v836 = vsel %vm198, %v347, 0
      %v838 = vsel %vm198, %v349, 0
      %v840 = vsel %vm198, %v350, 0
      %v842 = vsel %vm198, %v352, 0
      %v844 = vsel %vm198, %v353, 0
      %v846 = vsel %vm198, %v355, 0
      %v848 = vsel %vm198, %v356, 0
      %v850 = vsel %vm198, %v358, 0
      %v852 = vsel %vm198, %v359, 0
      %v854 = vsel %vm198, %v361, 0
      %v856 = vsel %vm198, %v362, 0
      %v858 = vsel %vm198, %v364, 0
      %v860 = vsel %vm198, %v365, 0
      %v863 = vsel %vm569, %v373, 0
      %865 = vmatprep.subr.mxu0 0.0
      %866 = vmatpush1.msra.mxu0 0.0
      %867 = vmatprep.subr.mxu0 0.0
      %868 = vmatpush1.msra.mxu0 0.0
      %869 = vmatprep.subr.mxu0 0.0
      %870 = vmatpush1.msra.mxu0 0.0
      %871 = vmatprep.subr.mxu0 0.0
      %872 = vmatpush1.msra.mxu0 0.0
      %873 = vmatprep.subr.mxu0 0.0
      %874 = vmatpush1.msra.mxu0 0.0
      %875 = vmatprep.subr.mxu0 0.0
      %876 = vmatpush1.msra.mxu0 0.0
      %877 = vmatprep.subr.mxu0 0.0
      %878 = vmatpush1.msra.mxu0 0.0
      %879 = vmatprep.subr.mxu0 0.0
      %880 = vmatpush1.msra.mxu0 0.0
      %881 = vmatprep.subr.mxu0 0.0
      %882 = vmatpush1.msra.mxu0 0.0
      %883 = vmatprep.subr.mxu0 0.0
      %884 = vmatpush1.msra.mxu0 0.0
      %885 = vmatprep.subr.mxu0 0.0
      %886 = vmatpush1.msra.mxu0 0.0
      %887 = vmatprep.subr.mxu0 0.0
      %888 = vmatpush1.msra.mxu0 0.0
      %889 = vmatprep.subr.mxu0 0.0
      %890 = vmatpush1.msra.mxu0 0.0
      %891 = vmatprep.subr.mxu0 0.0
      %892 = vmatpush1.msra.mxu0 0.0
      %893 = vmatprep.subr.mxu0 0.0
      %894 = vmatpush1.msra.mxu0 0.0
      %895 = vmatprep.subr.mxu0 0.0
      %896 = vmatpush1.msra.mxu0 %v863
      %897 = vmatprep.subr.mxu0 0.0
      %898 = vmatpush2.msra.mxu0 0.0
      %899 = vmatprep.subr.mxu0 0.0
      %900 = vmatpush2.msra.mxu0 0.0
      %901 = vmatprep.subr.mxu0 0.0
      %902 = vmatpush2.msra.mxu0 0.0
      %903 = vmatprep.subr.mxu0 0.0
      %904 = vmatpush2.msra.mxu0 0.0
      %905 = vmatprep.subr.mxu0 0.0
      %906 = vmatpush2.msra.mxu0 0.0
      %907 = vmatprep.subr.mxu0 0.0
      %908 = vmatpush2.msra.mxu0 0.0
      %909 = vmatprep.subr.mxu0 0.0
      %910 = vmatpush2.msra.mxu0 0.0
      %911 = vmatprep.subr.mxu0 0.0
      %912 = vmatpush2.msra.mxu0 0.0
      %913 = vmatprep.subr.mxu0 0.0
      %914 = vmatpush2.msra.mxu0 0.0
      %915 = vmatprep.subr.mxu0 0.0
      %916 = vmatpush2.msra.mxu0 0.0
      %917 = vmatprep.subr.mxu0 0.0
      %918 = vmatpush2.msra.mxu0 0.0
      %919 = vmatprep.subr.mxu0 0.0
      %920 = vmatpush2.msra.mxu0 0.0
      %921 = vmatprep.subr.mxu0 0.0
      %922 = vmatpush2.msra.mxu0 0.0
      %923 = vmatprep.subr.mxu0 0.0
      %924 = vmatpush2.msra.mxu0 0.0
      %925 = vmatprep.subr.mxu0 0.0
      %926 = vmatpush2.msra.mxu0 0.0
      %927 = vmatprep.subr.mxu0 0.0
      %928 = vmatpush2.msra.mxu0 0.0
      %929 = vmatprep.mubr.f32.mxu0 0.0
      %930 = vmatmul.mubr.f32.gmra.mxu0 %v798
      %v931 = vpop.f32.mrf.mxu0
      %v932 = vadd.f32 %v640, %v931
      %v933 = vpop.f32.mrf.mxu0
      %934 = vmatprep.mubr.f32.mxu0 0.0
      %935 = vmatmul.mubr.f32.gmra.mxu0 %v800
      %v936 = vpop.f32.mrf.mxu0
      %v937 = vadd.f32 %v645, %v936
      %v938 = vpop.f32.mrf.mxu0
      %939 = vmatprep.mubr.f32.mxu0 0.0
      %940 = vmatmul.mubr.f32.gmra.mxu0 %v802
      %v941 = vpop.f32.mrf.mxu0
      %v942 = vadd.f32 %v650, %v941
      %v943 = vpop.f32.mrf.mxu0
      %944 = vmatprep.mubr.f32.mxu0 0.0
      %945 = vmatmul.mubr.f32.gmra.mxu0 %v804
      %v946 = vpop.f32.mrf.mxu0
      %v947 = vadd.f32 %v655, %v946
      %v948 = vpop.f32.mrf.mxu0
      %949 = vmatprep.mubr.f32.mxu0 0.0
      %950 = vmatmul.mubr.f32.gmra.mxu0 %v806
      %v951 = vpop.f32.mrf.mxu0
      %v952 = vadd.f32 %v660, %v951
      %v953 = vpop.f32.mrf.mxu0
      %954 = vmatprep.mubr.f32.mxu0 0.0
      %955 = vmatmul.mubr.f32.gmra.mxu0 %v808
      %v956 = vpop.f32.mrf.mxu0
      %v957 = vadd.f32 %v665, %v956
      %v958 = vpop.f32.mrf.mxu0
      %959 = vmatprep.mubr.f32.mxu0 0.0
      %960 = vmatmul.mubr.f32.gmra.mxu0 %v810
      %v961 = vpop.f32.mrf.mxu0
      %v962 = vadd.f32 %v670, %v961
      %v963 = vpop.f32.mrf.mxu0
      %964 = vmatprep.mubr.f32.mxu0 0.0
      %965 = vmatmul.mubr.f32.gmra.mxu0 %v812
      %v966 = vpop.f32.mrf.mxu0
      %v967 = vadd.f32 %v675, %v966
      %v968 = vpop.f32.mrf.mxu0
      %969 = vmatprep.mubr.f32.mxu0 0.0
      %970 = vmatmul.mubr.f32.gmra.mxu0 %v814
      %v971 = vpop.f32.mrf.mxu0
      %v972 = vadd.f32 %v680, %v971
      %v973 = vpop.f32.mrf.mxu0
      %974 = vmatprep.mubr.f32.mxu0 0.0
      %975 = vmatmul.mubr.f32.gmra.mxu0 %v816
      %v976 = vpop.f32.mrf.mxu0
      %v977 = vadd.f32 %v685, %v976
      %v978 = vpop.f32.mrf.mxu0
      %979 = vmatprep.mubr.f32.mxu0 0.0
      %980 = vmatmul.mubr.f32.gmra.mxu0 %v818
      %v981 = vpop.f32.mrf.mxu0
      %v982 = vadd.f32 %v690, %v981
      %v983 = vpop.f32.mrf.mxu0
      %984 = vmatprep.mubr.f32.mxu0 0.0
      %985 = vmatmul.mubr.f32.gmra.mxu0 %v820
      %v986 = vpop.f32.mrf.mxu0
      %v987 = vadd.f32 %v695, %v986
      %v988 = vpop.f32.mrf.mxu0
      %989 = vmatprep.mubr.f32.mxu0 0.0
      %990 = vmatmul.mubr.f32.gmra.mxu0 %v822
      %v991 = vpop.f32.mrf.mxu0
      %v992 = vadd.f32 %v700, %v991
      %v993 = vpop.f32.mrf.mxu0
      %994 = vmatprep.mubr.f32.mxu0 0.0
      %995 = vmatmul.mubr.f32.gmra.mxu0 %v824
      %v996 = vpop.f32.mrf.mxu0
      %v997 = vadd.f32 %v705, %v996
      %v998 = vpop.f32.mrf.mxu0
      %999 = vmatprep.mubr.f32.mxu0 0.0
      %1000 = vmatmul.mubr.f32.gmra.mxu0 %v826
      %v1001 = vpop.f32.mrf.mxu0
      %v1002 = vadd.f32 %v710, %v1001
      %v1003 = vpop.f32.mrf.mxu0
      %1004 = vmatprep.mubr.f32.mxu0 0.0
      %1005 = vmatmul.mubr.f32.gmra.mxu0 %v828
      %v1006 = vpop.f32.mrf.mxu0
      %v1007 = vadd.f32 %v715, %v1006
      %v1008 = vpop.f32.mrf.mxu0
      %1009 = vmatprep.mubr.f32.mxu0 0.0
      %1010 = vmatmul.mubr.f32.gmra.mxu0 %v830
      %v1011 = vpop.f32.mrf.mxu0
      %v1012 = vadd.f32 %v720, %v1011
      %v1013 = vpop.f32.mrf.mxu0
      %1014 = vmatprep.mubr.f32.mxu0 0.0
      %1015 = vmatmul.mubr.f32.gmra.mxu0 %v832
      %v1016 = vpop.f32.mrf.mxu0
      %v1017 = vadd.f32 %v725, %v1016
      %v1018 = vpop.f32.mrf.mxu0
      %1019 = vmatprep.mubr.f32.mxu0 0.0
      %1020 = vmatmul.mubr.f32.gmra.mxu0 %v834
      %v1021 = vpop.f32.mrf.mxu0
      %v1022 = vadd.f32 %v730, %v1021
      %v1023 = vpop.f32.mrf.mxu0
      %1024 = vmatprep.mubr.f32.mxu0 0.0
      %1025 = vmatmul.mubr.f32.gmra.mxu0 %v836
      %v1026 = vpop.f32.mrf.mxu0
      %v1027 = vadd.f32 %v735, %v1026
      %v1028 = vpop.f32.mrf.mxu0
      %1029 = vmatprep.mubr.f32.mxu0 0.0
      %1030 = vmatmul.mubr.f32.gmra.mxu0 %v838
      %v1031 = vpop.f32.mrf.mxu0
      %v1032 = vadd.f32 %v740, %v1031
      %v1033 = vpop.f32.mrf.mxu0
      %1034 = vmatprep.mubr.f32.mxu0 0.0
      %1035 = vmatmul.mubr.f32.gmra.mxu0 %v840
      %v1036 = vpop.f32.mrf.mxu0
      %v1037 = vadd.f32 %v745, %v1036
      %v1038 = vpop.f32.mrf.mxu0
      %1039 = vmatprep.mubr.f32.mxu0 0.0
      %1040 = vmatmul.mubr.f32.gmra.mxu0 %v842
      %v1041 = vpop.f32.mrf.mxu0
      %v1042 = vadd.f32 %v750, %v1041
      %v1043 = vpop.f32.mrf.mxu0
      %1044 = vmatprep.mubr.f32.mxu0 0.0
      %1045 = vmatmul.mubr.f32.gmra.mxu0 %v844
      %v1046 = vpop.f32.mrf.mxu0
      %v1047 = vadd.f32 %v755, %v1046
      %v1048 = vpop.f32.mrf.mxu0
      %1049 = vmatprep.mubr.f32.mxu0 0.0
      %1050 = vmatmul.mubr.f32.gmra.mxu0 %v846
      %v1051 = vpop.f32.mrf.mxu0
      %v1052 = vadd.f32 %v760, %v1051
      %v1053 = vpop.f32.mrf.mxu0
      %1054 = vmatprep.mubr.f32.mxu0 0.0
      %1055 = vmatmul.mubr.f32.gmra.mxu0 %v848
      %v1056 = vpop.f32.mrf.mxu0
      %v1057 = vadd.f32 %v765, %v1056
      %v1058 = vpop.f32.mrf.mxu0
      %1059 = vmatprep.mubr.f32.mxu0 0.0
      %1060 = vmatmul.mubr.f32.gmra.mxu0 %v850
      %v1061 = vpop.f32.mrf.mxu0
      %v1062 = vadd.f32 %v770, %v1061
      %v1063 = vpop.f32.mrf.mxu0
      %1064 = vmatprep.mubr.f32.mxu0 0.0
      %1065 = vmatmul.mubr.f32.gmra.mxu0 %v852
      %v1066 = vpop.f32.mrf.mxu0
      %v1067 = vadd.f32 %v775, %v1066
      %v1068 = vpop.f32.mrf.mxu0
      %1069 = vmatprep.mubr.f32.mxu0 0.0
      %1070 = vmatmul.mubr.f32.gmra.mxu0 %v854
      %v1071 = vpop.f32.mrf.mxu0
      %v1072 = vadd.f32 %v780, %v1071
      %v1073 = vpop.f32.mrf.mxu0
      %1074 = vmatprep.mubr.f32.mxu0 0.0
      %1075 = vmatmul.mubr.f32.gmra.mxu0 %v856
      %v1076 = vpop.f32.mrf.mxu0
      %v1077 = vadd.f32 %v785, %v1076
      %v1078 = vpop.f32.mrf.mxu0
      %1079 = vmatprep.mubr.f32.mxu0 0.0
      %1080 = vmatmul.mubr.f32.gmra.mxu0 %v858
      %v1081 = vpop.f32.mrf.mxu0
      %v1082 = vadd.f32 %v790, %v1081
      %v1083 = vpop.f32.mrf.mxu0
      %1084 = vmatprep.mubr.f32.mxu0 0.0
      %1085 = vmatmul.mubr.f32.gmra.mxu0 %v860
      %v1086 = vpop.f32.mrf.mxu0
      %v1087 = vadd.f32 %v795, %v1086
      %v1088 = vpop.f32.mrf.mxu0
      %1089 = vdwg.mxu0
      %vm1090 = vcmask 1045504
      %v1091 = vrot.slane %v319, 2
      %v1092 = vrot.slane %v320, 2
      %v1093 = vsel %vm1090, %v1091, %v1092
      %v1094 = vrot.slane %v321, 2
      %v1095 = vsel %vm1090, %v1092, %v1094
      %v1096 = vrot.slane %v322, 2
      %v1097 = vrot.slane %v323, 2
      %v1098 = vsel %vm1090, %v1096, %v1097
      %v1099 = vrot.slane %v324, 2
      %v1100 = vsel %vm1090, %v1097, %v1099
      %v1101 = vrot.slane %v325, 2
      %v1102 = vrot.slane %v326, 2
      %v1103 = vsel %vm1090, %v1101, %v1102
      %v1104 = vrot.slane %v327, 2
      %v1105 = vsel %vm1090, %v1102, %v1104
      %v1106 = vrot.slane %v328, 2
      %v1107 = vrot.slane %v329, 2
      %v1108 = vsel %vm1090, %v1106, %v1107
      %v1109 = vrot.slane %v330, 2
      %v1110 = vsel %vm1090, %v1107, %v1109
      %v1111 = vrot.slane %v331, 2
      %v1112 = vrot.slane %v332, 2
      %v1113 = vsel %vm1090, %v1111, %v1112
      %v1114 = vrot.slane %v333, 2
      %v1115 = vsel %vm1090, %v1112, %v1114
      %v1116 = vrot.slane %v334, 2
      %v1117 = vrot.slane %v335, 2
      %v1118 = vsel %vm1090, %v1116, %v1117
      %v1119 = vrot.slane %v336, 2
      %v1120 = vsel %vm1090, %v1117, %v1119
      %v1121 = vrot.slane %v337, 2
      %v1122 = vrot.slane %v338, 2
      %v1123 = vsel %vm1090, %v1121, %v1122
      %v1124 = vrot.slane %v339, 2
      %v1125 = vsel %vm1090, %v1122, %v1124
      %v1126 = vrot.slane %v340, 2
      %v1127 = vrot.slane %v341, 2
      %v1128 = vsel %vm1090, %v1126, %v1127
      %v1129 = vrot.slane %v342, 2
      %v1130 = vsel %vm1090, %v1127, %v1129
      %v1131 = vrot.slane %v343, 2
      %v1132 = vrot.slane %v344, 2
      %v1133 = vsel %vm1090, %v1131, %v1132
      %v1134 = vrot.slane %v345, 2
      %v1135 = vsel %vm1090, %v1132, %v1134
      %v1136 = vrot.slane %v346, 2
      %v1137 = vrot.slane %v347, 2
      %v1138 = vsel %vm1090, %v1136, %v1137
      %v1139 = vrot.slane %v348, 2
      %v1140 = vsel %vm1090, %v1137, %v1139
      %v1141 = vrot.slane %v349, 2
      %v1142 = vrot.slane %v350, 2
      %v1143 = vsel %vm1090, %v1141, %v1142
      %v1144 = vrot.slane %v351, 2
      %v1145 = vsel %vm1090, %v1142, %v1144
      %v1146 = vrot.slane %v352, 2
      %v1147 = vrot.slane %v353, 2
      %v1148 = vsel %vm1090, %v1146, %v1147
      %v1149 = vrot.slane %v354, 2
      %v1150 = vsel %vm1090, %v1147, %v1149
      %v1151 = vrot.slane %v355, 2
      %v1152 = vrot.slane %v356, 2
      %v1153 = vsel %vm1090, %v1151, %v1152
      %v1154 = vrot.slane %v357, 2
      %v1155 = vsel %vm1090, %v1152, %v1154
      %v1156 = vrot.slane %v358, 2
      %v1157 = vrot.slane %v359, 2
      %v1158 = vsel %vm1090, %v1156, %v1157
      %v1159 = vrot.slane %v360, 2
      %v1160 = vsel %vm1090, %v1157, %v1159
      %v1161 = vrot.slane %v361, 2
      %v1162 = vrot.slane %v362, 2
      %v1163 = vsel %vm1090, %v1161, %v1162
      %v1164 = vrot.slane %v363, 2
      %v1165 = vsel %vm1090, %v1162, %v1164
      %v1166 = vrot.slane %v364, 2
      %v1167 = vrot.slane %v365, 2
      %v1168 = vsel %vm1090, %v1166, %v1167
      %v1169 = vrot.slane %v366, 2
      %v1170 = vsel %vm1090, %v1167, %v1169
      %s1171 = scalar_lea.vmem %s1, 8
      %v1172 = vld [vmem:[%s1171] sm:$0xf]
      %v1173 = vsel %vm198, %v1093, 0
      %v1175 = vsel %vm198, %v1095, 0
      %v1177 = vsel %vm198, %v1098, 0
      %v1179 = vsel %vm198, %v1100, 0
      %v1181 = vsel %vm198, %v1103, 0
      %v1183 = vsel %vm198, %v1105, 0
      %v1185 = vsel %vm198, %v1108, 0
      %v1187 = vsel %vm198, %v1110, 0
      %v1189 = vsel %vm198, %v1113, 0
      %v1191 = vsel %vm198, %v1115, 0
      %v1193 = vsel %vm198, %v1118, 0
      %v1195 = vsel %vm198, %v1120, 0
      %v1197 = vsel %vm198, %v1123, 0
      %v1199 = vsel %vm198, %v1125, 0
      %v1201 = vsel %vm198, %v1128, 0
      %v1203 = vsel %vm198, %v1130, 0
      %v1205 = vsel %vm198, %v1133, 0
      %v1207 = vsel %vm198, %v1135, 0
      %v1209 = vsel %vm198, %v1138, 0
      %v1211 = vsel %vm198, %v1140, 0
      %v1213 = vsel %vm198, %v1143, 0
      %v1215 = vsel %vm198, %v1145, 0
      %v1217 = vsel %vm198, %v1148, 0
      %v1219 = vsel %vm198, %v1150, 0
      %v1221 = vsel %vm198, %v1153, 0
      %v1223 = vsel %vm198, %v1155, 0
      %v1225 = vsel %vm198, %v1158, 0
      %v1227 = vsel %vm198, %v1160, 0
      %v1229 = vsel %vm198, %v1163, 0
      %v1231 = vsel %vm198, %v1165, 0
      %v1233 = vsel %vm198, %v1168, 0
      %v1235 = vsel %vm198, %v1170, 0
      %v1238 = vsel %vm569, %v1172, 0
      %1240 = vmatprep.subr.mxu0 0.0
      %1241 = vmatpush1.msra.mxu0 0.0
      %1242 = vmatprep.subr.mxu0 0.0
      %1243 = vmatpush1.msra.mxu0 0.0
      %1244 = vmatprep.subr.mxu0 0.0
      %1245 = vmatpush1.msra.mxu0 0.0
      %1246 = vmatprep.subr.mxu0 0.0
      %1247 = vmatpush1.msra.mxu0 0.0
      %1248 = vmatprep.subr.mxu0 0.0
      %1249 = vmatpush1.msra.mxu0 0.0
      %1250 = vmatprep.subr.mxu0 0.0
      %1251 = vmatpush1.msra.mxu0 0.0
      %1252 = vmatprep.subr.mxu0 0.0
      %1253 = vmatpush1.msra.mxu0 0.0
      %1254 = vmatprep.subr.mxu0 0.0
      %1255 = vmatpush1.msra.mxu0 0.0
      %1256 = vmatprep.subr.mxu0 0.0
      %1257 = vmatpush1.msra.mxu0 0.0
      %1258 = vmatprep.subr.mxu0 0.0
      %1259 = vmatpush1.msra.mxu0 0.0
      %1260 = vmatprep.subr.mxu0 0.0
      %1261 = vmatpush1.msra.mxu0 0.0
      %1262 = vmatprep.subr.mxu0 0.0
      %1263 = vmatpush1.msra.mxu0 0.0
      %1264 = vmatprep.subr.mxu0 0.0
      %1265 = vmatpush1.msra.mxu0 0.0
      %1266 = vmatprep.subr.mxu0 0.0
      %1267 = vmatpush1.msra.mxu0 0.0
      %1268 = vmatprep.subr.mxu0 0.0
      %1269 = vmatpush1.msra.mxu0 0.0
      %1270 = vmatprep.subr.mxu0 0.0
      %1271 = vmatpush1.msra.mxu0 %v1238
      %1272 = vmatprep.subr.mxu0 0.0
      %1273 = vmatpush2.msra.mxu0 0.0
      %1274 = vmatprep.subr.mxu0 0.0
      %1275 = vmatpush2.msra.mxu0 0.0
      %1276 = vmatprep.subr.mxu0 0.0
      %1277 = vmatpush2.msra.mxu0 0.0
      %1278 = vmatprep.subr.mxu0 0.0
      %1279 = vmatpush2.msra.mxu0 0.0
      %1280 = vmatprep.subr.mxu0 0.0
      %1281 = vmatpush2.msra.mxu0 0.0
      %1282 = vmatprep.subr.mxu0 0.0
      %1283 = vmatpush2.msra.mxu0 0.0
      %1284 = vmatprep.subr.mxu0 0.0
      %1285 = vmatpush2.msra.mxu0 0.0
      %1286 = vmatprep.subr.mxu0 0.0
      %1287 = vmatpush2.msra.mxu0 0.0
      %1288 = vmatprep.subr.mxu0 0.0
      %1289 = vmatpush2.msra.mxu0 0.0
      %1290 = vmatprep.subr.mxu0 0.0
      %1291 = vmatpush2.msra.mxu0 0.0
      %1292 = vmatprep.subr.mxu0 0.0
      %1293 = vmatpush2.msra.mxu0 0.0
      %1294 = vmatprep.subr.mxu0 0.0
      %1295 = vmatpush2.msra.mxu0 0.0
      %1296 = vmatprep.subr.mxu0 0.0
      %1297 = vmatpush2.msra.mxu0 0.0
      %1298 = vmatprep.subr.mxu0 0.0
      %1299 = vmatpush2.msra.mxu0 0.0
      %1300 = vmatprep.subr.mxu0 0.0
      %1301 = vmatpush2.msra.mxu0 0.0
      %1302 = vmatprep.subr.mxu0 0.0
      %1303 = vmatpush2.msra.mxu0 0.0
      %1304 = vmatprep.mubr.f32.mxu0 0.0
      %1305 = vmatmul.mubr.f32.gmra.mxu0 %v1173
      %v1306 = vpop.f32.mrf.mxu0
      %v1307 = vadd.f32 0.0, %v1306
      %v1308 = vpop.f32.mrf.mxu0
      %1309 = vmatprep.mubr.f32.mxu0 0.0
      %1310 = vmatmul.mubr.f32.gmra.mxu0 %v1175
      %v1311 = vpop.f32.mrf.mxu0
      %v1312 = vadd.f32 0.0, %v1311
      %v1313 = vpop.f32.mrf.mxu0
      %1314 = vmatprep.mubr.f32.mxu0 0.0
      %1315 = vmatmul.mubr.f32.gmra.mxu0 %v1177
      %v1316 = vpop.f32.mrf.mxu0
      %v1317 = vadd.f32 0.0, %v1316
      %v1318 = vpop.f32.mrf.mxu0
      %1319 = vmatprep.mubr.f32.mxu0 0.0
      %1320 = vmatmul.mubr.f32.gmra.mxu0 %v1179
      %v1321 = vpop.f32.mrf.mxu0
      %v1322 = vadd.f32 0.0, %v1321
      %v1323 = vpop.f32.mrf.mxu0
      %1324 = vmatprep.mubr.f32.mxu0 0.0
      %1325 = vmatmul.mubr.f32.gmra.mxu0 %v1181
      %v1326 = vpop.f32.mrf.mxu0
      %v1327 = vadd.f32 0.0, %v1326
      %v1328 = vpop.f32.mrf.mxu0
      %1329 = vmatprep.mubr.f32.mxu0 0.0
      %1330 = vmatmul.mubr.f32.gmra.mxu0 %v1183
      %v1331 = vpop.f32.mrf.mxu0
      %v1332 = vadd.f32 0.0, %v1331
      %v1333 = vpop.f32.mrf.mxu0
      %1334 = vmatprep.mubr.f32.mxu0 0.0
      %1335 = vmatmul.mubr.f32.gmra.mxu0 %v1185
      %v1336 = vpop.f32.mrf.mxu0
      %v1337 = vadd.f32 0.0, %v1336
      %v1338 = vpop.f32.mrf.mxu0
      %1339 = vmatprep.mubr.f32.mxu0 0.0
      %1340 = vmatmul.mubr.f32.gmra.mxu0 %v1187
      %v1341 = vpop.f32.mrf.mxu0
      %v1342 = vadd.f32 0.0, %v1341
      %v1343 = vpop.f32.mrf.mxu0
      %1344 = vmatprep.mubr.f32.mxu0 0.0
      %1345 = vmatmul.mubr.f32.gmra.mxu0 %v1189
      %v1346 = vpop.f32.mrf.mxu0
      %v1347 = vadd.f32 0.0, %v1346
      %v1348 = vpop.f32.mrf.mxu0
      %1349 = vmatprep.mubr.f32.mxu0 0.0
      %1350 = vmatmul.mubr.f32.gmra.mxu0 %v1191
      %v1351 = vpop.f32.mrf.mxu0
      %v1352 = vadd.f32 0.0, %v1351
      %v1353 = vpop.f32.mrf.mxu0
      %1354 = vmatprep.mubr.f32.mxu0 0.0
      %1355 = vmatmul.mubr.f32.gmra.mxu0 %v1193
      %v1356 = vpop.f32.mrf.mxu0
      %v1357 = vadd.f32 0.0, %v1356
      %v1358 = vpop.f32.mrf.mxu0
      %1359 = vmatprep.mubr.f32.mxu0 0.0
      %1360 = vmatmul.mubr.f32.gmra.mxu0 %v1195
      %v1361 = vpop.f32.mrf.mxu0
      %v1362 = vadd.f32 0.0, %v1361
      %v1363 = vpop.f32.mrf.mxu0
      %1364 = vmatprep.mubr.f32.mxu0 0.0
      %1365 = vmatmul.mubr.f32.gmra.mxu0 %v1197
      %v1366 = vpop.f32.mrf.mxu0
      %v1367 = vadd.f32 0.0, %v1366
      %v1368 = vpop.f32.mrf.mxu0
      %1369 = vmatprep.mubr.f32.mxu0 0.0
      %1370 = vmatmul.mubr.f32.gmra.mxu0 %v1199
      %v1371 = vpop.f32.mrf.mxu0
      %v1372 = vadd.f32 0.0, %v1371
      %v1373 = vpop.f32.mrf.mxu0
      %1374 = vmatprep.mubr.f32.mxu0 0.0
      %1375 = vmatmul.mubr.f32.gmra.mxu0 %v1201
      %v1376 = vpop.f32.mrf.mxu0
      %v1377 = vadd.f32 0.0, %v1376
      %v1378 = vpop.f32.mrf.mxu0
      %1379 = vmatprep.mubr.f32.mxu0 0.0
      %1380 = vmatmul.mubr.f32.gmra.mxu0 %v1203
      %v1381 = vpop.f32.mrf.mxu0
      %v1382 = vadd.f32 0.0, %v1381
      %v1383 = vpop.f32.mrf.mxu0
      %1384 = vmatprep.mubr.f32.mxu0 0.0
      %1385 = vmatmul.mubr.f32.gmra.mxu0 %v1205
      %v1386 = vpop.f32.mrf.mxu0
      %v1387 = vadd.f32 0.0, %v1386
      %v1388 = vpop.f32.mrf.mxu0
      %1389 = vmatprep.mubr.f32.mxu0 0.0
      %1390 = vmatmul.mubr.f32.gmra.mxu0 %v1207
      %v1391 = vpop.f32.mrf.mxu0
      %v1392 = vadd.f32 0.0, %v1391
      %v1393 = vpop.f32.mrf.mxu0
      %1394 = vmatprep.mubr.f32.mxu0 0.0
      %1395 = vmatmul.mubr.f32.gmra.mxu0 %v1209
      %v1396 = vpop.f32.mrf.mxu0
      %v1397 = vadd.f32 0.0, %v1396
      %v1398 = vpop.f32.mrf.mxu0
      %1399 = vmatprep.mubr.f32.mxu0 0.0
      %1400 = vmatmul.mubr.f32.gmra.mxu0 %v1211
      %v1401 = vpop.f32.mrf.mxu0
      %v1402 = vadd.f32 0.0, %v1401
      %v1403 = vpop.f32.mrf.mxu0
      %1404 = vmatprep.mubr.f32.mxu0 0.0
      %1405 = vmatmul.mubr.f32.gmra.mxu0 %v1213
      %v1406 = vpop.f32.mrf.mxu0
      %v1407 = vadd.f32 0.0, %v1406
      %v1408 = vpop.f32.mrf.mxu0
      %1409 = vmatprep.mubr.f32.mxu0 0.0
      %1410 = vmatmul.mubr.f32.gmra.mxu0 %v1215
      %v1411 = vpop.f32.mrf.mxu0
      %v1412 = vadd.f32 0.0, %v1411
      %v1413 = vpop.f32.mrf.mxu0
      %1414 = vmatprep.mubr.f32.mxu0 0.0
      %1415 = vmatmul.mubr.f32.gmra.mxu0 %v1217
      %v1416 = vpop.f32.mrf.mxu0
      %v1417 = vadd.f32 0.0, %v1416
      %v1418 = vpop.f32.mrf.mxu0
      %1419 = vmatprep.mubr.f32.mxu0 0.0
      %1420 = vmatmul.mubr.f32.gmra.mxu0 %v1219
      %v1421 = vpop.f32.mrf.mxu0
      %v1422 = vadd.f32 0.0, %v1421
      %v1423 = vpop.f32.mrf.mxu0
      %1424 = vmatprep.mubr.f32.mxu0 0.0
      %1425 = vmatmul.mubr.f32.gmra.mxu0 %v1221
      %v1426 = vpop.f32.mrf.mxu0
      %v1427 = vadd.f32 0.0, %v1426
      %v1428 = vpop.f32.mrf.mxu0
      %1429 = vmatprep.mubr.f32.mxu0 0.0
      %1430 = vmatmul.mubr.f32.gmra.mxu0 %v1223
      %v1431 = vpop.f32.mrf.mxu0
      %v1432 = vadd.f32 0.0, %v1431
      %v1433 = vpop.f32.mrf.mxu0
      %1434 = vmatprep.mubr.f32.mxu0 0.0
      %1435 = vmatmul.mubr.f32.gmra.mxu0 %v1225
      %v1436 = vpop.f32.mrf.mxu0
      %v1437 = vadd.f32 0.0, %v1436
      %v1438 = vpop.f32.mrf.mxu0
      %1439 = vmatprep.mubr.f32.mxu0 0.0
      %1440 = vmatmul.mubr.f32.gmra.mxu0 %v1227
      %v1441 = vpop.f32.mrf.mxu0
      %v1442 = vadd.f32 0.0, %v1441
      %v1443 = vpop.f32.mrf.mxu0
      %1444 = vmatprep.mubr.f32.mxu0 0.0
      %1445 = vmatmul.mubr.f32.gmra.mxu0 %v1229
      %v1446 = vpop.f32.mrf.mxu0
      %v1447 = vadd.f32 0.0, %v1446
      %v1448 = vpop.f32.mrf.mxu0
      %1449 = vmatprep.mubr.f32.mxu0 0.0
      %1450 = vmatmul.mubr.f32.gmra.mxu0 %v1231
      %v1451 = vpop.f32.mrf.mxu0
      %v1452 = vadd.f32 0.0, %v1451
      %v1453 = vpop.f32.mrf.mxu0
      %1454 = vmatprep.mubr.f32.mxu0 0.0
      %1455 = vmatmul.mubr.f32.gmra.mxu0 %v1233
      %v1456 = vpop.f32.mrf.mxu0
      %v1457 = vadd.f32 0.0, %v1456
      %v1458 = vpop.f32.mrf.mxu0
      %1459 = vmatprep.mubr.f32.mxu0 0.0
      %1460 = vmatmul.mubr.f32.gmra.mxu0 %v1235
      %v1461 = vpop.f32.mrf.mxu0
      %v1462 = vadd.f32 0.0, %v1461
      %v1463 = vpop.f32.mrf.mxu0
      %1464 = vdwg.mxu0
      %v1465 = vadd.f32 %v932, %v1307
      %v1466 = vadd.f32 %v937, %v1312
      %v1467 = vadd.f32 %v942, %v1317
      %v1468 = vadd.f32 %v947, %v1322
      %v1469 = vadd.f32 %v952, %v1327
      %v1470 = vadd.f32 %v957, %v1332
      %v1471 = vadd.f32 %v962, %v1337
      %v1472 = vadd.f32 %v967, %v1342
      %v1473 = vadd.f32 %v972, %v1347
      %v1474 = vadd.f32 %v977, %v1352
      %v1475 = vadd.f32 %v982, %v1357
      %v1476 = vadd.f32 %v987, %v1362
      %v1477 = vadd.f32 %v992, %v1367
      %v1478 = vadd.f32 %v997, %v1372
      %v1479 = vadd.f32 %v1002, %v1377
      %v1480 = vadd.f32 %v1007, %v1382
      %v1481 = vadd.f32 %v1012, %v1387
      %v1482 = vadd.f32 %v1017, %v1392
      %v1483 = vadd.f32 %v1022, %v1397
      %v1484 = vadd.f32 %v1027, %v1402
      %v1485 = vadd.f32 %v1032, %v1407
      %v1486 = vadd.f32 %v1037, %v1412
      %v1487 = vadd.f32 %v1042, %v1417
      %v1488 = vadd.f32 %v1047, %v1422
      %v1489 = vadd.f32 %v1052, %v1427
      %v1490 = vadd.f32 %v1057, %v1432
      %v1491 = vadd.f32 %v1062, %v1437
      %v1492 = vadd.f32 %v1067, %v1442
      %v1493 = vadd.f32 %v1072, %v1447
      %v1494 = vadd.f32 %v1077, %v1452
      %v1495 = vadd.f32 %v1082, %v1457
      %v1496 = vadd.f32 %v1087, %v1462
      %s1497 = scalar_lea.vmem %s1, 12
      %v1498 = vld [vmem:[%s1497] sm:$0xf]
      %v1500 = vsel %vm198, %v367, 0
      %v1503 = vsel %vm198, %v368, 0
      %v1506 = vsel %vm569, %v1498, 0
      %1508 = vmatprep.subr.mxu0 0.0
      %1509 = vmatpush1.msra.mxu0 0.0
      %1510 = vmatprep.subr.mxu0 0.0
      %1511 = vmatpush1.msra.mxu0 0.0
      %1512 = vmatprep.subr.mxu0 0.0
      %1513 = vmatpush1.msra.mxu0 0.0
      %1514 = vmatprep.subr.mxu0 0.0
      %1515 = vmatpush1.msra.mxu0 0.0
      %1516 = vmatprep.subr.mxu0 0.0
      %1517 = vmatpush1.msra.mxu0 0.0
      %1518 = vmatprep.subr.mxu0 0.0
      %1519 = vmatpush1.msra.mxu0 0.0
      %1520 = vmatprep.subr.mxu0 0.0
      %1521 = vmatpush1.msra.mxu0 0.0
      %1522 = vmatprep.subr.mxu0 0.0
      %1523 = vmatpush1.msra.mxu0 0.0
      %1524 = vmatprep.subr.mxu0 0.0
      %1525 = vmatpush1.msra.mxu0 0.0
      %1526 = vmatprep.subr.mxu0 0.0
      %1527 = vmatpush1.msra.mxu0 0.0
      %1528 = vmatprep.subr.mxu0 0.0
      %1529 = vmatpush1.msra.mxu0 0.0
      %1530 = vmatprep.subr.mxu0 0.0
      %1531 = vmatpush1.msra.mxu0 0.0
      %1532 = vmatprep.subr.mxu0 0.0
      %1533 = vmatpush1.msra.mxu0 0.0
      %1534 = vmatprep.subr.mxu0 0.0
      %1535 = vmatpush1.msra.mxu0 0.0
      %1536 = vmatprep.subr.mxu0 0.0
      %1537 = vmatpush1.msra.mxu0 0.0
      %1538 = vmatprep.subr.mxu0 0.0
      %1539 = vmatpush1.msra.mxu0 %v1506
      %1540 = vmatprep.subr.mxu0 0.0
      %1541 = vmatpush2.msra.mxu0 0.0
      %1542 = vmatprep.subr.mxu0 0.0
      %1543 = vmatpush2.msra.mxu0 0.0
      %1544 = vmatprep.subr.mxu0 0.0
      %1545 = vmatpush2.msra.mxu0 0.0
      %1546 = vmatprep.subr.mxu0 0.0
      %1547 = vmatpush2.msra.mxu0 0.0
      %1548 = vmatprep.subr.mxu0 0.0
      %1549 = vmatpush2.msra.mxu0 0.0
      %1550 = vmatprep.subr.mxu0 0.0
      %1551 = vmatpush2.msra.mxu0 0.0
      %1552 = vmatprep.subr.mxu0 0.0
      %1553 = vmatpush2.msra.mxu0 0.0
      %1554 = vmatprep.subr.mxu0 0.0
      %1555 = vmatpush2.msra.mxu0 0.0
      %1556 = vmatprep.subr.mxu0 0.0
      %1557 = vmatpush2.msra.mxu0 0.0
      %1558 = vmatprep.subr.mxu0 0.0
      %1559 = vmatpush2.msra.mxu0 0.0
      %1560 = vmatprep.subr.mxu0 0.0
      %1561 = vmatpush2.msra.mxu0 0.0
      %1562 = vmatprep.subr.mxu0 0.0
      %1563 = vmatpush2.msra.mxu0 0.0
      %1564 = vmatprep.subr.mxu0 0.0
      %1565 = vmatpush2.msra.mxu0 0.0
      %1566 = vmatprep.subr.mxu0 0.0
      %1567 = vmatpush2.msra.mxu0 0.0
      %1568 = vmatprep.subr.mxu0 0.0
      %1569 = vmatpush2.msra.mxu0 0.0
      %1570 = vmatprep.subr.mxu0 0.0
      %1571 = vmatpush2.msra.mxu0 0.0
      %1572 = vmatprep.mubr.f32.mxu0 0.0
      %1573 = vmatmul.mubr.f32.gmra.mxu0 %v802
      %v1574 = vpop.f32.mrf.mxu0
      %v1575 = vadd.f32 0.0, %v1574
      %v1576 = vpop.f32.mrf.mxu0
      %1577 = vmatprep.mubr.f32.mxu0 0.0
      %1578 = vmatmul.mubr.f32.gmra.mxu0 %v804
      %v1579 = vpop.f32.mrf.mxu0
      %v1580 = vadd.f32 0.0, %v1579
      %v1581 = vpop.f32.mrf.mxu0
      %1582 = vmatprep.mubr.f32.mxu0 0.0
      %1583 = vmatmul.mubr.f32.gmra.mxu0 %v806
      %v1584 = vpop.f32.mrf.mxu0
      %v1585 = vadd.f32 0.0, %v1584
      %v1586 = vpop.f32.mrf.mxu0
      %1587 = vmatprep.mubr.f32.mxu0 0.0
      %1588 = vmatmul.mubr.f32.gmra.mxu0 %v808
      %v1589 = vpop.f32.mrf.mxu0
      %v1590 = vadd.f32 0.0, %v1589
      %v1591 = vpop.f32.mrf.mxu0
      %1592 = vmatprep.mubr.f32.mxu0 0.0
      %1593 = vmatmul.mubr.f32.gmra.mxu0 %v810
      %v1594 = vpop.f32.mrf.mxu0
      %v1595 = vadd.f32 0.0, %v1594
      %v1596 = vpop.f32.mrf.mxu0
      %1597 = vmatprep.mubr.f32.mxu0 0.0
      %1598 = vmatmul.mubr.f32.gmra.mxu0 %v812
      %v1599 = vpop.f32.mrf.mxu0
      %v1600 = vadd.f32 0.0, %v1599
      %v1601 = vpop.f32.mrf.mxu0
      %1602 = vmatprep.mubr.f32.mxu0 0.0
      %1603 = vmatmul.mubr.f32.gmra.mxu0 %v814
      %v1604 = vpop.f32.mrf.mxu0
      %v1605 = vadd.f32 0.0, %v1604
      %v1606 = vpop.f32.mrf.mxu0
      %1607 = vmatprep.mubr.f32.mxu0 0.0
      %1608 = vmatmul.mubr.f32.gmra.mxu0 %v816
      %v1609 = vpop.f32.mrf.mxu0
      %v1610 = vadd.f32 0.0, %v1609
      %v1611 = vpop.f32.mrf.mxu0
      %1612 = vmatprep.mubr.f32.mxu0 0.0
      %1613 = vmatmul.mubr.f32.gmra.mxu0 %v818
      %v1614 = vpop.f32.mrf.mxu0
      %v1615 = vadd.f32 0.0, %v1614
      %v1616 = vpop.f32.mrf.mxu0
      %1617 = vmatprep.mubr.f32.mxu0 0.0
      %1618 = vmatmul.mubr.f32.gmra.mxu0 %v820
      %v1619 = vpop.f32.mrf.mxu0
      %v1620 = vadd.f32 0.0, %v1619
      %v1621 = vpop.f32.mrf.mxu0
      %1622 = vmatprep.mubr.f32.mxu0 0.0
      %1623 = vmatmul.mubr.f32.gmra.mxu0 %v822
      %v1624 = vpop.f32.mrf.mxu0
      %v1625 = vadd.f32 0.0, %v1624
      %v1626 = vpop.f32.mrf.mxu0
      %1627 = vmatprep.mubr.f32.mxu0 0.0
      %1628 = vmatmul.mubr.f32.gmra.mxu0 %v824
      %v1629 = vpop.f32.mrf.mxu0
      %v1630 = vadd.f32 0.0, %v1629
      %v1631 = vpop.f32.mrf.mxu0
      %1632 = vmatprep.mubr.f32.mxu0 0.0
      %1633 = vmatmul.mubr.f32.gmra.mxu0 %v826
      %v1634 = vpop.f32.mrf.mxu0
      %v1635 = vadd.f32 0.0, %v1634
      %v1636 = vpop.f32.mrf.mxu0
      %1637 = vmatprep.mubr.f32.mxu0 0.0
      %1638 = vmatmul.mubr.f32.gmra.mxu0 %v828
      %v1639 = vpop.f32.mrf.mxu0
      %v1640 = vadd.f32 0.0, %v1639
      %v1641 = vpop.f32.mrf.mxu0
      %1642 = vmatprep.mubr.f32.mxu0 0.0
      %1643 = vmatmul.mubr.f32.gmra.mxu0 %v830
      %v1644 = vpop.f32.mrf.mxu0
      %v1645 = vadd.f32 0.0, %v1644
      %v1646 = vpop.f32.mrf.mxu0
      %1647 = vmatprep.mubr.f32.mxu0 0.0
      %1648 = vmatmul.mubr.f32.gmra.mxu0 %v832
      %v1649 = vpop.f32.mrf.mxu0
      %v1650 = vadd.f32 0.0, %v1649
      %v1651 = vpop.f32.mrf.mxu0
      %1652 = vmatprep.mubr.f32.mxu0 0.0
      %1653 = vmatmul.mubr.f32.gmra.mxu0 %v834
      %v1654 = vpop.f32.mrf.mxu0
      %v1655 = vadd.f32 0.0, %v1654
      %v1656 = vpop.f32.mrf.mxu0
      %1657 = vmatprep.mubr.f32.mxu0 0.0
      %1658 = vmatmul.mubr.f32.gmra.mxu0 %v836
      %v1659 = vpop.f32.mrf.mxu0
      %v1660 = vadd.f32 0.0, %v1659
      %v1661 = vpop.f32.mrf.mxu0
      %1662 = vmatprep.mubr.f32.mxu0 0.0
      %1663 = vmatmul.mubr.f32.gmra.mxu0 %v838
      %v1664 = vpop.f32.mrf.mxu0
      %v1665 = vadd.f32 0.0, %v1664
      %v1666 = vpop.f32.mrf.mxu0
      %1667 = vmatprep.mubr.f32.mxu0 0.0
      %1668 = vmatmul.mubr.f32.gmra.mxu0 %v840
      %v1669 = vpop.f32.mrf.mxu0
      %v1670 = vadd.f32 0.0, %v1669
      %v1671 = vpop.f32.mrf.mxu0
      %1672 = vmatprep.mubr.f32.mxu0 0.0
      %1673 = vmatmul.mubr.f32.gmra.mxu0 %v842
      %v1674 = vpop.f32.mrf.mxu0
      %v1675 = vadd.f32 0.0, %v1674
      %v1676 = vpop.f32.mrf.mxu0
      %1677 = vmatprep.mubr.f32.mxu0 0.0
      %1678 = vmatmul.mubr.f32.gmra.mxu0 %v844
      %v1679 = vpop.f32.mrf.mxu0
      %v1680 = vadd.f32 0.0, %v1679
      %v1681 = vpop.f32.mrf.mxu0
      %1682 = vmatprep.mubr.f32.mxu0 0.0
      %1683 = vmatmul.mubr.f32.gmra.mxu0 %v846
      %v1684 = vpop.f32.mrf.mxu0
      %v1685 = vadd.f32 0.0, %v1684
      %v1686 = vpop.f32.mrf.mxu0
      %1687 = vmatprep.mubr.f32.mxu0 0.0
      %1688 = vmatmul.mubr.f32.gmra.mxu0 %v848
      %v1689 = vpop.f32.mrf.mxu0
      %v1690 = vadd.f32 0.0, %v1689
      %v1691 = vpop.f32.mrf.mxu0
      %1692 = vmatprep.mubr.f32.mxu0 0.0
      %1693 = vmatmul.mubr.f32.gmra.mxu0 %v850
      %v1694 = vpop.f32.mrf.mxu0
      %v1695 = vadd.f32 0.0, %v1694
      %v1696 = vpop.f32.mrf.mxu0
      %1697 = vmatprep.mubr.f32.mxu0 0.0
      %1698 = vmatmul.mubr.f32.gmra.mxu0 %v852
      %v1699 = vpop.f32.mrf.mxu0
      %v1700 = vadd.f32 0.0, %v1699
      %v1701 = vpop.f32.mrf.mxu0
      %1702 = vmatprep.mubr.f32.mxu0 0.0
      %1703 = vmatmul.mubr.f32.gmra.mxu0 %v854
      %v1704 = vpop.f32.mrf.mxu0
      %v1705 = vadd.f32 0.0, %v1704
      %v1706 = vpop.f32.mrf.mxu0
      %1707 = vmatprep.mubr.f32.mxu0 0.0
      %1708 = vmatmul.mubr.f32.gmra.mxu0 %v856
      %v1709 = vpop.f32.mrf.mxu0
      %v1710 = vadd.f32 0.0, %v1709
      %v1711 = vpop.f32.mrf.mxu0
      %1712 = vmatprep.mubr.f32.mxu0 0.0
      %1713 = vmatmul.mubr.f32.gmra.mxu0 %v858
      %v1714 = vpop.f32.mrf.mxu0
      %v1715 = vadd.f32 0.0, %v1714
      %v1716 = vpop.f32.mrf.mxu0
      %1717 = vmatprep.mubr.f32.mxu0 0.0
      %1718 = vmatmul.mubr.f32.gmra.mxu0 %v860
      %v1719 = vpop.f32.mrf.mxu0
      %v1720 = vadd.f32 0.0, %v1719
      %v1721 = vpop.f32.mrf.mxu0
      %1722 = vmatprep.mubr.f32.mxu0 0.0
      %1723 = vmatmul.mubr.f32.gmra.mxu0 %v1500
      %v1724 = vpop.f32.mrf.mxu0
      %v1725 = vadd.f32 0.0, %v1724
      %v1726 = vpop.f32.mrf.mxu0
      %1727 = vmatprep.mubr.f32.mxu0 0.0
      %1728 = vmatmul.mubr.f32.gmra.mxu0 %v1503
      %v1729 = vpop.f32.mrf.mxu0
      %v1730 = vadd.f32 0.0, %v1729
      %v1731 = vpop.f32.mrf.mxu0
      %1732 = vdwg.mxu0
      %v1733 = vadd.f32 %v1465, %v1575
      %v1734 = vadd.f32 %v1466, %v1580
      %v1735 = vadd.f32 %v1467, %v1585
      %v1736 = vadd.f32 %v1468, %v1590
      %v1737 = vadd.f32 %v1469, %v1595
      %v1738 = vadd.f32 %v1470, %v1600
      %v1739 = vadd.f32 %v1471, %v1605
      %v1740 = vadd.f32 %v1472, %v1610
      %v1741 = vadd.f32 %v1473, %v1615
      %v1742 = vadd.f32 %v1474, %v1620
      %v1743 = vadd.f32 %v1475, %v1625
      %v1744 = vadd.f32 %v1476, %v1630
      %v1745 = vadd.f32 %v1477, %v1635
      %v1746 = vadd.f32 %v1478, %v1640
      %v1747 = vadd.f32 %v1479, %v1645
      %v1748 = vadd.f32 %v1480, %v1650
      %v1749 = vadd.f32 %v1481, %v1655
      %v1750 = vadd.f32 %v1482, %v1660
      %v1751 = vadd.f32 %v1483, %v1665
      %v1752 = vadd.f32 %v1484, %v1670
      %v1753 = vadd.f32 %v1485, %v1675
      %v1754 = vadd.f32 %v1486, %v1680
      %v1755 = vadd.f32 %v1487, %v1685
      %v1756 = vadd.f32 %v1488, %v1690
      %v1757 = vadd.f32 %v1489, %v1695
      %v1758 = vadd.f32 %v1490, %v1700
      %v1759 = vadd.f32 %v1491, %v1705
      %v1760 = vadd.f32 %v1492, %v1710
      %v1761 = vadd.f32 %v1493, %v1715
      %v1762 = vadd.f32 %v1494, %v1720
      %v1763 = vadd.f32 %v1495, %v1725
      %v1764 = vadd.f32 %v1496, %v1730
      %v1766 = vrot.slane %v367, 1
      %v1767 = vrot.slane %v368, 1
      %v1768 = vsel %vm422, %v1766, %v1767
      %v1769 = vrot.slane %v369, 1
      %v1770 = vsel %vm422, %v1767, %v1769
      %s1771 = scalar_lea.vmem %s1, 16
      %v1772 = vld [vmem:[%s1771] sm:$0xf]
      %v1773 = vsel %vm198, %v1768, 0
      %v1775 = vsel %vm198, %v1770, 0
      %v1778 = vsel %vm569, %v1772, 0
      %1780 = vmatprep.subr.mxu0 0.0
      %1781 = vmatpush1.msra.mxu0 0.0
      %1782 = vmatprep.subr.mxu0 0.0
      %1783 = vmatpush1.msra.mxu0 0.0
      %1784 = vmatprep.subr.mxu0 0.0
      %1785 = vmatpush1.msra.mxu0 0.0
      %1786 = vmatprep.subr.mxu0 0.0
      %1787 = vmatpush1.msra.mxu0 0.0
      %1788 = vmatprep.subr.mxu0 0.0
      %1789 = vmatpush1.msra.mxu0 0.0
      %1790 = vmatprep.subr.mxu0 0.0
      %1791 = vmatpush1.msra.mxu0 0.0
      %1792 = vmatprep.subr.mxu0 0.0
      %1793 = vmatpush1.msra.mxu0 0.0
      %1794 = vmatprep.subr.mxu0 0.0
      %1795 = vmatpush1.msra.mxu0 0.0
      %1796 = vmatprep.subr.mxu0 0.0
      %1797 = vmatpush1.msra.mxu0 0.0
      %1798 = vmatprep.subr.mxu0 0.0
      %1799 = vmatpush1.msra.mxu0 0.0
      %1800 = vmatprep.subr.mxu0 0.0
      %1801 = vmatpush1.msra.mxu0 0.0
      %1802 = vmatprep.subr.mxu0 0.0
      %1803 = vmatpush1.msra.mxu0 0.0
      %1804 = vmatprep.subr.mxu0 0.0
      %1805 = vmatpush1.msra.mxu0 0.0
      %1806 = vmatprep.subr.mxu0 0.0
      %1807 = vmatpush1.msra.mxu0 0.0
      %1808 = vmatprep.subr.mxu0 0.0
      %1809 = vmatpush1.msra.mxu0 0.0
      %1810 = vmatprep.subr.mxu0 0.0
      %1811 = vmatpush1.msra.mxu0 %v1778
      %1812 = vmatprep.subr.mxu0 0.0
      %1813 = vmatpush2.msra.mxu0 0.0
      %1814 = vmatprep.subr.mxu0 0.0
      %1815 = vmatpush2.msra.mxu0 0.0
      %1816 = vmatprep.subr.mxu0 0.0
      %1817 = vmatpush2.msra.mxu0 0.0
      %1818 = vmatprep.subr.mxu0 0.0
      %1819 = vmatpush2.msra.mxu0 0.0
      %1820 = vmatprep.subr.mxu0 0.0
      %1821 = vmatpush2.msra.mxu0 0.0
      %1822 = vmatprep.subr.mxu0 0.0
      %1823 = vmatpush2.msra.mxu0 0.0
      %1824 = vmatprep.subr.mxu0 0.0
      %1825 = vmatpush2.msra.mxu0 0.0
      %1826 = vmatprep.subr.mxu0 0.0
      %1827 = vmatpush2.msra.mxu0 0.0
      %1828 = vmatprep.subr.mxu0 0.0
      %1829 = vmatpush2.msra.mxu0 0.0
      %1830 = vmatprep.subr.mxu0 0.0
      %1831 = vmatpush2.msra.mxu0 0.0
      %1832 = vmatprep.subr.mxu0 0.0
      %1833 = vmatpush2.msra.mxu0 0.0
      %1834 = vmatprep.subr.mxu0 0.0
      %1835 = vmatpush2.msra.mxu0 0.0
      %1836 = vmatprep.subr.mxu0 0.0
      %1837 = vmatpush2.msra.mxu0 0.0
      %1838 = vmatprep.subr.mxu0 0.0
      %1839 = vmatpush2.msra.mxu0 0.0
      %1840 = vmatprep.subr.mxu0 0.0
      %1841 = vmatpush2.msra.mxu0 0.0
      %1842 = vmatprep.subr.mxu0 0.0
      %1843 = vmatpush2.msra.mxu0 0.0
      %1844 = vmatprep.mubr.f32.mxu0 0.0
      %1845 = vmatmul.mubr.f32.gmra.mxu0 %v509
      %v1846 = vpop.f32.mrf.mxu0
      %v1847 = vadd.f32 0.0, %v1846
      %v1848 = vpop.f32.mrf.mxu0
      %1849 = vmatprep.mubr.f32.mxu0 0.0
      %1850 = vmatmul.mubr.f32.gmra.mxu0 %v511
      %v1851 = vpop.f32.mrf.mxu0
      %v1852 = vadd.f32 0.0, %v1851
      %v1853 = vpop.f32.mrf.mxu0
      %1854 = vmatprep.mubr.f32.mxu0 0.0
      %1855 = vmatmul.mubr.f32.gmra.mxu0 %v513
      %v1856 = vpop.f32.mrf.mxu0
      %v1857 = vadd.f32 0.0, %v1856
      %v1858 = vpop.f32.mrf.mxu0
      %1859 = vmatprep.mubr.f32.mxu0 0.0
      %1860 = vmatmul.mubr.f32.gmra.mxu0 %v515
      %v1861 = vpop.f32.mrf.mxu0
      %v1862 = vadd.f32 0.0, %v1861
      %v1863 = vpop.f32.mrf.mxu0
      %1864 = vmatprep.mubr.f32.mxu0 0.0
      %1865 = vmatmul.mubr.f32.gmra.mxu0 %v517
      %v1866 = vpop.f32.mrf.mxu0
      %v1867 = vadd.f32 0.0, %v1866
      %v1868 = vpop.f32.mrf.mxu0
      %1869 = vmatprep.mubr.f32.mxu0 0.0
      %1870 = vmatmul.mubr.f32.gmra.mxu0 %v519
      %v1871 = vpop.f32.mrf.mxu0
      %v1872 = vadd.f32 0.0, %v1871
      %v1873 = vpop.f32.mrf.mxu0
      %1874 = vmatprep.mubr.f32.mxu0 0.0
      %1875 = vmatmul.mubr.f32.gmra.mxu0 %v521
      %v1876 = vpop.f32.mrf.mxu0
      %v1877 = vadd.f32 0.0, %v1876
      %v1878 = vpop.f32.mrf.mxu0
      %1879 = vmatprep.mubr.f32.mxu0 0.0
      %1880 = vmatmul.mubr.f32.gmra.mxu0 %v523
      %v1881 = vpop.f32.mrf.mxu0
      %v1882 = vadd.f32 0.0, %v1881
      %v1883 = vpop.f32.mrf.mxu0
      %1884 = vmatprep.mubr.f32.mxu0 0.0
      %1885 = vmatmul.mubr.f32.gmra.mxu0 %v525
      %v1886 = vpop.f32.mrf.mxu0
      %v1887 = vadd.f32 0.0, %v1886
      %v1888 = vpop.f32.mrf.mxu0
      %1889 = vmatprep.mubr.f32.mxu0 0.0
      %1890 = vmatmul.mubr.f32.gmra.mxu0 %v527
      %v1891 = vpop.f32.mrf.mxu0
      %v1892 = vadd.f32 0.0, %v1891
      %v1893 = vpop.f32.mrf.mxu0
      %1894 = vmatprep.mubr.f32.mxu0 0.0
      %1895 = vmatmul.mubr.f32.gmra.mxu0 %v529
      %v1896 = vpop.f32.mrf.mxu0
      %v1897 = vadd.f32 0.0, %v1896
      %v1898 = vpop.f32.mrf.mxu0
      %1899 = vmatprep.mubr.f32.mxu0 0.0
      %1900 = vmatmul.mubr.f32.gmra.mxu0 %v531
      %v1901 = vpop.f32.mrf.mxu0
      %v1902 = vadd.f32 0.0, %v1901
      %v1903 = vpop.f32.mrf.mxu0
      %1904 = vmatprep.mubr.f32.mxu0 0.0
      %1905 = vmatmul.mubr.f32.gmra.mxu0 %v533
      %v1906 = vpop.f32.mrf.mxu0
      %v1907 = vadd.f32 0.0, %v1906
      %v1908 = vpop.f32.mrf.mxu0
      %1909 = vmatprep.mubr.f32.mxu0 0.0
      %1910 = vmatmul.mubr.f32.gmra.mxu0 %v535
      %v1911 = vpop.f32.mrf.mxu0
      %v1912 = vadd.f32 0.0, %v1911
      %v1913 = vpop.f32.mrf.mxu0
      %1914 = vmatprep.mubr.f32.mxu0 0.0
      %1915 = vmatmul.mubr.f32.gmra.mxu0 %v537
      %v1916 = vpop.f32.mrf.mxu0
      %v1917 = vadd.f32 0.0, %v1916
      %v1918 = vpop.f32.mrf.mxu0
      %1919 = vmatprep.mubr.f32.mxu0 0.0
      %1920 = vmatmul.mubr.f32.gmra.mxu0 %v539
      %v1921 = vpop.f32.mrf.mxu0
      %v1922 = vadd.f32 0.0, %v1921
      %v1923 = vpop.f32.mrf.mxu0
      %1924 = vmatprep.mubr.f32.mxu0 0.0
      %1925 = vmatmul.mubr.f32.gmra.mxu0 %v541
      %v1926 = vpop.f32.mrf.mxu0
      %v1927 = vadd.f32 0.0, %v1926
      %v1928 = vpop.f32.mrf.mxu0
      %1929 = vmatprep.mubr.f32.mxu0 0.0
      %1930 = vmatmul.mubr.f32.gmra.mxu0 %v543
      %v1931 = vpop.f32.mrf.mxu0
      %v1932 = vadd.f32 0.0, %v1931
      %v1933 = vpop.f32.mrf.mxu0
      %1934 = vmatprep.mubr.f32.mxu0 0.0
      %1935 = vmatmul.mubr.f32.gmra.mxu0 %v545
      %v1936 = vpop.f32.mrf.mxu0
      %v1937 = vadd.f32 0.0, %v1936
      %v1938 = vpop.f32.mrf.mxu0
      %1939 = vmatprep.mubr.f32.mxu0 0.0
      %1940 = vmatmul.mubr.f32.gmra.mxu0 %v547
      %v1941 = vpop.f32.mrf.mxu0
      %v1942 = vadd.f32 0.0, %v1941
      %v1943 = vpop.f32.mrf.mxu0
      %1944 = vmatprep.mubr.f32.mxu0 0.0
      %1945 = vmatmul.mubr.f32.gmra.mxu0 %v549
      %v1946 = vpop.f32.mrf.mxu0
      %v1947 = vadd.f32 0.0, %v1946
      %v1948 = vpop.f32.mrf.mxu0
      %1949 = vmatprep.mubr.f32.mxu0 0.0
      %1950 = vmatmul.mubr.f32.gmra.mxu0 %v551
      %v1951 = vpop.f32.mrf.mxu0
      %v1952 = vadd.f32 0.0, %v1951
      %v1953 = vpop.f32.mrf.mxu0
      %1954 = vmatprep.mubr.f32.mxu0 0.0
      %1955 = vmatmul.mubr.f32.gmra.mxu0 %v553
      %v1956 = vpop.f32.mrf.mxu0
      %v1957 = vadd.f32 0.0, %v1956
      %v1958 = vpop.f32.mrf.mxu0
      %1959 = vmatprep.mubr.f32.mxu0 0.0
      %1960 = vmatmul.mubr.f32.gmra.mxu0 %v555
      %v1961 = vpop.f32.mrf.mxu0
      %v1962 = vadd.f32 0.0, %v1961
      %v1963 = vpop.f32.mrf.mxu0
      %1964 = vmatprep.mubr.f32.mxu0 0.0
      %1965 = vmatmul.mubr.f32.gmra.mxu0 %v557
      %v1966 = vpop.f32.mrf.mxu0
      %v1967 = vadd.f32 0.0, %v1966
      %v1968 = vpop.f32.mrf.mxu0
      %1969 = vmatprep.mubr.f32.mxu0 0.0
      %1970 = vmatmul.mubr.f32.gmra.mxu0 %v559
      %v1971 = vpop.f32.mrf.mxu0
      %v1972 = vadd.f32 0.0, %v1971
      %v1973 = vpop.f32.mrf.mxu0
      %1974 = vmatprep.mubr.f32.mxu0 0.0
      %1975 = vmatmul.mubr.f32.gmra.mxu0 %v561
      %v1976 = vpop.f32.mrf.mxu0
      %v1977 = vadd.f32 0.0, %v1976
      %v1978 = vpop.f32.mrf.mxu0
      %1979 = vmatprep.mubr.f32.mxu0 0.0
      %1980 = vmatmul.mubr.f32.gmra.mxu0 %v563
      %v1981 = vpop.f32.mrf.mxu0
      %v1982 = vadd.f32 0.0, %v1981
      %v1983 = vpop.f32.mrf.mxu0
      %1984 = vmatprep.mubr.f32.mxu0 0.0
      %1985 = vmatmul.mubr.f32.gmra.mxu0 %v565
      %v1986 = vpop.f32.mrf.mxu0
      %v1987 = vadd.f32 0.0, %v1986
      %v1988 = vpop.f32.mrf.mxu0
      %1989 = vmatprep.mubr.f32.mxu0 0.0
      %1990 = vmatmul.mubr.f32.gmra.mxu0 %v567
      %v1991 = vpop.f32.mrf.mxu0
      %v1992 = vadd.f32 0.0, %v1991
      %v1993 = vpop.f32.mrf.mxu0
      %1994 = vmatprep.mubr.f32.mxu0 0.0
      %1995 = vmatmul.mubr.f32.gmra.mxu0 %v1773
      %v1996 = vpop.f32.mrf.mxu0
      %v1997 = vadd.f32 0.0, %v1996
      %v1998 = vpop.f32.mrf.mxu0
      %1999 = vmatprep.mubr.f32.mxu0 0.0
      %2000 = vmatmul.mubr.f32.gmra.mxu0 %v1775
      %v2001 = vpop.f32.mrf.mxu0
      %v2002 = vadd.f32 0.0, %v2001
      %v2003 = vpop.f32.mrf.mxu0
      %2004 = vdwg.mxu0
      %v2005 = vadd.f32 %v1733, %v1847
      %v2006 = vadd.f32 %v1734, %v1852
      %v2007 = vadd.f32 %v1735, %v1857
      %v2008 = vadd.f32 %v1736, %v1862
      %v2009 = vadd.f32 %v1737, %v1867
      %v2010 = vadd.f32 %v1738, %v1872
      %v2011 = vadd.f32 %v1739, %v1877
      %v2012 = vadd.f32 %v1740, %v1882
      %v2013 = vadd.f32 %v1741, %v1887
      %v2014 = vadd.f32 %v1742, %v1892
      %v2015 = vadd.f32 %v1743, %v1897
      %v2016 = vadd.f32 %v1744, %v1902
      %v2017 = vadd.f32 %v1745, %v1907
      %v2018 = vadd.f32 %v1746, %v1912
      %v2019 = vadd.f32 %v1747, %v1917
      %v2020 = vadd.f32 %v1748, %v1922
      %v2021 = vadd.f32 %v1749, %v1927
      %v2022 = vadd.f32 %v1750, %v1932
      %v2023 = vadd.f32 %v1751, %v1937
      %v2024 = vadd.f32 %v1752, %v1942
      %v2025 = vadd.f32 %v1753, %v1947
      %v2026 = vadd.f32 %v1754, %v1952
      %v2027 = vadd.f32 %v1755, %v1957
      %v2028 = vadd.f32 %v1756, %v1962
      %v2029 = vadd.f32 %v1757, %v1967
      %v2030 = vadd.f32 %v1758, %v1972
      %v2031 = vadd.f32 %v1759, %v1977
      %v2032 = vadd.f32 %v1760, %v1982
      %v2033 = vadd.f32 %v1761, %v1987
      %v2034 = vadd.f32 %v1762, %v1992
      %v2035 = vadd.f32 %v1763, %v1997
      %v2036 = vadd.f32 %v1764, %v2002
      %v2037 = vrot.slane %v367, 2
      %v2038 = vrot.slane %v368, 2
      %v2039 = vsel %vm1090, %v2037, %v2038
      %v2040 = vrot.slane %v369, 2
      %v2041 = vsel %vm1090, %v2038, %v2040
      %s2042 = scalar_lea.vmem %s1, 20
      %v2043 = vld [vmem:[%s2042] sm:$0xf]
      %v2044 = vsel %vm198, %v2039, 0
      %v2046 = vsel %vm198, %v2041, 0
      %v2049 = vsel %vm569, %v2043, 0
      %2051 = vmatprep.subr.mxu0 0.0
      %2052 = vmatpush1.msra.mxu0 0.0
      %2053 = vmatprep.subr.mxu0 0.0
      %2054 = vmatpush1.msra.mxu0 0.0
      %2055 = vmatprep.subr.mxu0 0.0
      %2056 = vmatpush1.msra.mxu0 0.0
      %2057 = vmatprep.subr.mxu0 0.0
      %2058 = vmatpush1.msra.mxu0 0.0
      %2059 = vmatprep.subr.mxu0 0.0
      %2060 = vmatpush1.msra.mxu0 0.0
      %2061 = vmatprep.subr.mxu0 0.0
      %2062 = vmatpush1.msra.mxu0 0.0
      %2063 = vmatprep.subr.mxu0 0.0
      %2064 = vmatpush1.msra.mxu0 0.0
      %2065 = vmatprep.subr.mxu0 0.0
      %2066 = vmatpush1.msra.mxu0 0.0
      %2067 = vmatprep.subr.mxu0 0.0
      %2068 = vmatpush1.msra.mxu0 0.0
      %2069 = vmatprep.subr.mxu0 0.0
      %2070 = vmatpush1.msra.mxu0 0.0
      %2071 = vmatprep.subr.mxu0 0.0
      %2072 = vmatpush1.msra.mxu0 0.0
      %2073 = vmatprep.subr.mxu0 0.0
      %2074 = vmatpush1.msra.mxu0 0.0
      %2075 = vmatprep.subr.mxu0 0.0
      %2076 = vmatpush1.msra.mxu0 0.0
      %2077 = vmatprep.subr.mxu0 0.0
      %2078 = vmatpush1.msra.mxu0 0.0
      %2079 = vmatprep.subr.mxu0 0.0
      %2080 = vmatpush1.msra.mxu0 0.0
      %2081 = vmatprep.subr.mxu0 0.0
      %2082 = vmatpush1.msra.mxu0 %v2049
      %2083 = vmatprep.subr.mxu0 0.0
      %2084 = vmatpush2.msra.mxu0 0.0
      %2085 = vmatprep.subr.mxu0 0.0
      %2086 = vmatpush2.msra.mxu0 0.0
      %2087 = vmatprep.subr.mxu0 0.0
      %2088 = vmatpush2.msra.mxu0 0.0
      %2089 = vmatprep.subr.mxu0 0.0
      %2090 = vmatpush2.msra.mxu0 0.0
      %2091 = vmatprep.subr.mxu0 0.0
      %2092 = vmatpush2.msra.mxu0 0.0
      %2093 = vmatprep.subr.mxu0 0.0
      %2094 = vmatpush2.msra.mxu0 0.0
      %2095 = vmatprep.subr.mxu0 0.0
      %2096 = vmatpush2.msra.mxu0 0.0
      %2097 = vmatprep.subr.mxu0 0.0
      %2098 = vmatpush2.msra.mxu0 0.0
      %2099 = vmatprep.subr.mxu0 0.0
      %2100 = vmatpush2.msra.mxu0 0.0
      %2101 = vmatprep.subr.mxu0 0.0
      %2102 = vmatpush2.msra.mxu0 0.0
      %2103 = vmatprep.subr.mxu0 0.0
      %2104 = vmatpush2.msra.mxu0 0.0
      %2105 = vmatprep.subr.mxu0 0.0
      %2106 = vmatpush2.msra.mxu0 0.0
      %2107 = vmatprep.subr.mxu0 0.0
      %2108 = vmatpush2.msra.mxu0 0.0
      %2109 = vmatprep.subr.mxu0 0.0
      %2110 = vmatpush2.msra.mxu0 0.0
      %2111 = vmatprep.subr.mxu0 0.0
      %2112 = vmatpush2.msra.mxu0 0.0
      %2113 = vmatprep.subr.mxu0 0.0
      %2114 = vmatpush2.msra.mxu0 0.0
      %2115 = vmatprep.mubr.f32.mxu0 0.0
      %2116 = vmatmul.mubr.f32.gmra.mxu0 %v1177
      %v2117 = vpop.f32.mrf.mxu0
      %v2118 = vadd.f32 0.0, %v2117
      %v2119 = vpop.f32.mrf.mxu0
      %2120 = vmatprep.mubr.f32.mxu0 0.0
      %2121 = vmatmul.mubr.f32.gmra.mxu0 %v1179
      %v2122 = vpop.f32.mrf.mxu0
      %v2123 = vadd.f32 0.0, %v2122
      %v2124 = vpop.f32.mrf.mxu0
      %2125 = vmatprep.mubr.f32.mxu0 0.0
      %2126 = vmatmul.mubr.f32.gmra.mxu0 %v1181
      %v2127 = vpop.f32.mrf.mxu0
      %v2128 = vadd.f32 0.0, %v2127
      %v2129 = vpop.f32.mrf.mxu0
      %2130 = vmatprep.mubr.f32.mxu0 0.0
      %2131 = vmatmul.mubr.f32.gmra.mxu0 %v1183
      %v2132 = vpop.f32.mrf.mxu0
      %v2133 = vadd.f32 0.0, %v2132
      %v2134 = vpop.f32.mrf.mxu0
      %2135 = vmatprep.mubr.f32.mxu0 0.0
      %2136 = vmatmul.mubr.f32.gmra.mxu0 %v1185
      %v2137 = vpop.f32.mrf.mxu0
      %v2138 = vadd.f32 0.0, %v2137
      %v2139 = vpop.f32.mrf.mxu0
      %2140 = vmatprep.mubr.f32.mxu0 0.0
      %2141 = vmatmul.mubr.f32.gmra.mxu0 %v1187
      %v2142 = vpop.f32.mrf.mxu0
      %v2143 = vadd.f32 0.0, %v2142
      %v2144 = vpop.f32.mrf.mxu0
      %2145 = vmatprep.mubr.f32.mxu0 0.0
      %2146 = vmatmul.mubr.f32.gmra.mxu0 %v1189
      %v2147 = vpop.f32.mrf.mxu0
      %v2148 = vadd.f32 0.0, %v2147
      %v2149 = vpop.f32.mrf.mxu0
      %2150 = vmatprep.mubr.f32.mxu0 0.0
      %2151 = vmatmul.mubr.f32.gmra.mxu0 %v1191
      %v2152 = vpop.f32.mrf.mxu0
      %v2153 = vadd.f32 0.0, %v2152
      %v2154 = vpop.f32.mrf.mxu0
      %2155 = vmatprep.mubr.f32.mxu0 0.0
      %2156 = vmatmul.mubr.f32.gmra.mxu0 %v1193
      %v2157 = vpop.f32.mrf.mxu0
      %v2158 = vadd.f32 0.0, %v2157
      %v2159 = vpop.f32.mrf.mxu0
      %2160 = vmatprep.mubr.f32.mxu0 0.0
      %2161 = vmatmul.mubr.f32.gmra.mxu0 %v1195
      %v2162 = vpop.f32.mrf.mxu0
      %v2163 = vadd.f32 0.0, %v2162
      %v2164 = vpop.f32.mrf.mxu0
      %2165 = vmatprep.mubr.f32.mxu0 0.0
      %2166 = vmatmul.mubr.f32.gmra.mxu0 %v1197
      %v2167 = vpop.f32.mrf.mxu0
      %v2168 = vadd.f32 0.0, %v2167
      %v2169 = vpop.f32.mrf.mxu0
      %2170 = vmatprep.mubr.f32.mxu0 0.0
      %2171 = vmatmul.mubr.f32.gmra.mxu0 %v1199
      %v2172 = vpop.f32.mrf.mxu0
      %v2173 = vadd.f32 0.0, %v2172
      %v2174 = vpop.f32.mrf.mxu0
      %2175 = vmatprep.mubr.f32.mxu0 0.0
      %2176 = vmatmul.mubr.f32.gmra.mxu0 %v1201
      %v2177 = vpop.f32.mrf.mxu0
      %v2178 = vadd.f32 0.0, %v2177
      %v2179 = vpop.f32.mrf.mxu0
      %2180 = vmatprep.mubr.f32.mxu0 0.0
      %2181 = vmatmul.mubr.f32.gmra.mxu0 %v1203
      %v2182 = vpop.f32.mrf.mxu0
      %v2183 = vadd.f32 0.0, %v2182
      %v2184 = vpop.f32.mrf.mxu0
      %2185 = vmatprep.mubr.f32.mxu0 0.0
      %2186 = vmatmul.mubr.f32.gmra.mxu0 %v1205
      %v2187 = vpop.f32.mrf.mxu0
      %v2188 = vadd.f32 0.0, %v2187
      %v2189 = vpop.f32.mrf.mxu0
      %2190 = vmatprep.mubr.f32.mxu0 0.0
      %2191 = vmatmul.mubr.f32.gmra.mxu0 %v1207
      %v2192 = vpop.f32.mrf.mxu0
      %v2193 = vadd.f32 0.0, %v2192
      %v2194 = vpop.f32.mrf.mxu0
      %2195 = vmatprep.mubr.f32.mxu0 0.0
      %2196 = vmatmul.mubr.f32.gmra.mxu0 %v1209
      %v2197 = vpop.f32.mrf.mxu0
      %v2198 = vadd.f32 0.0, %v2197
      %v2199 = vpop.f32.mrf.mxu0
      %2200 = vmatprep.mubr.f32.mxu0 0.0
      %2201 = vmatmul.mubr.f32.gmra.mxu0 %v1211
      %v2202 = vpop.f32.mrf.mxu0
      %v2203 = vadd.f32 0.0, %v2202
      %v2204 = vpop.f32.mrf.mxu0
      %2205 = vmatprep.mubr.f32.mxu0 0.0
      %2206 = vmatmul.mubr.f32.gmra.mxu0 %v1213
      %v2207 = vpop.f32.mrf.mxu0
      %v2208 = vadd.f32 0.0, %v2207
      %v2209 = vpop.f32.mrf.mxu0
      %2210 = vmatprep.mubr.f32.mxu0 0.0
      %2211 = vmatmul.mubr.f32.gmra.mxu0 %v1215
      %v2212 = vpop.f32.mrf.mxu0
      %v2213 = vadd.f32 0.0, %v2212
      %v2214 = vpop.f32.mrf.mxu0
      %2215 = vmatprep.mubr.f32.mxu0 0.0
      %2216 = vmatmul.mubr.f32.gmra.mxu0 %v1217
      %v2217 = vpop.f32.mrf.mxu0
      %v2218 = vadd.f32 0.0, %v2217
      %v2219 = vpop.f32.mrf.mxu0
      %2220 = vmatprep.mubr.f32.mxu0 0.0
      %2221 = vmatmul.mubr.f32.gmra.mxu0 %v1219
      %v2222 = vpop.f32.mrf.mxu0
      %v2223 = vadd.f32 0.0, %v2222
      %v2224 = vpop.f32.mrf.mxu0
      %2225 = vmatprep.mubr.f32.mxu0 0.0
      %2226 = vmatmul.mubr.f32.gmra.mxu0 %v1221
      %v2227 = vpop.f32.mrf.mxu0
      %v2228 = vadd.f32 0.0, %v2227
      %v2229 = vpop.f32.mrf.mxu0
      %2230 = vmatprep.mubr.f32.mxu0 0.0
      %2231 = vmatmul.mubr.f32.gmra.mxu0 %v1223
      %v2232 = vpop.f32.mrf.mxu0
      %v2233 = vadd.f32 0.0, %v2232
      %v2234 = vpop.f32.mrf.mxu0
      %2235 = vmatprep.mubr.f32.mxu0 0.0
      %2236 = vmatmul.mubr.f32.gmra.mxu0 %v1225
      %v2237 = vpop.f32.mrf.mxu0
      %v2238 = vadd.f32 0.0, %v2237
      %v2239 = vpop.f32.mrf.mxu0
      %2240 = vmatprep.mubr.f32.mxu0 0.0
      %2241 = vmatmul.mubr.f32.gmra.mxu0 %v1227
      %v2242 = vpop.f32.mrf.mxu0
      %v2243 = vadd.f32 0.0, %v2242
      %v2244 = vpop.f32.mrf.mxu0
      %2245 = vmatprep.mubr.f32.mxu0 0.0
      %2246 = vmatmul.mubr.f32.gmra.mxu0 %v1229
      %v2247 = vpop.f32.mrf.mxu0
      %v2248 = vadd.f32 0.0, %v2247
      %v2249 = vpop.f32.mrf.mxu0
      %2250 = vmatprep.mubr.f32.mxu0 0.0
      %2251 = vmatmul.mubr.f32.gmra.mxu0 %v1231
      %v2252 = vpop.f32.mrf.mxu0
      %v2253 = vadd.f32 0.0, %v2252
      %v2254 = vpop.f32.mrf.mxu0
      %2255 = vmatprep.mubr.f32.mxu0 0.0
      %2256 = vmatmul.mubr.f32.gmra.mxu0 %v1233
      %v2257 = vpop.f32.mrf.mxu0
      %v2258 = vadd.f32 0.0, %v2257
      %v2259 = vpop.f32.mrf.mxu0
      %2260 = vmatprep.mubr.f32.mxu0 0.0
      %2261 = vmatmul.mubr.f32.gmra.mxu0 %v1235
      %v2262 = vpop.f32.mrf.mxu0
      %v2263 = vadd.f32 0.0, %v2262
      %v2264 = vpop.f32.mrf.mxu0
      %2265 = vmatprep.mubr.f32.mxu0 0.0
      %2266 = vmatmul.mubr.f32.gmra.mxu0 %v2044
      %v2267 = vpop.f32.mrf.mxu0
      %v2268 = vadd.f32 0.0, %v2267
      %v2269 = vpop.f32.mrf.mxu0
      %2270 = vmatprep.mubr.f32.mxu0 0.0
      %2271 = vmatmul.mubr.f32.gmra.mxu0 %v2046
      %v2272 = vpop.f32.mrf.mxu0
      %v2273 = vadd.f32 0.0, %v2272
      %v2274 = vpop.f32.mrf.mxu0
      %2275 = vdwg.mxu0
      %v2276 = vadd.f32 %v2005, %v2118
      %v2277 = vadd.f32 %v2006, %v2123
      %v2278 = vadd.f32 %v2007, %v2128
      %v2279 = vadd.f32 %v2008, %v2133
      %v2280 = vadd.f32 %v2009, %v2138
      %v2281 = vadd.f32 %v2010, %v2143
      %v2282 = vadd.f32 %v2011, %v2148
      %v2283 = vadd.f32 %v2012, %v2153
      %v2284 = vadd.f32 %v2013, %v2158
      %v2285 = vadd.f32 %v2014, %v2163
      %v2286 = vadd.f32 %v2015, %v2168
      %v2287 = vadd.f32 %v2016, %v2173
      %v2288 = vadd.f32 %v2017, %v2178
      %v2289 = vadd.f32 %v2018, %v2183
      %v2290 = vadd.f32 %v2019, %v2188
      %v2291 = vadd.f32 %v2020, %v2193
      %v2292 = vadd.f32 %v2021, %v2198
      %v2293 = vadd.f32 %v2022, %v2203
      %v2294 = vadd.f32 %v2023, %v2208
      %v2295 = vadd.f32 %v2024, %v2213
      %v2296 = vadd.f32 %v2025, %v2218
      %v2297 = vadd.f32 %v2026, %v2223
      %v2298 = vadd.f32 %v2027, %v2228
      %v2299 = vadd.f32 %v2028, %v2233
      %v2300 = vadd.f32 %v2029, %v2238
      %v2301 = vadd.f32 %v2030, %v2243
      %v2302 = vadd.f32 %v2031, %v2248
      %v2303 = vadd.f32 %v2032, %v2253
      %v2304 = vadd.f32 %v2033, %v2258
      %v2305 = vadd.f32 %v2034, %v2263
      %v2306 = vadd.f32 %v2035, %v2268
      %v2307 = vadd.f32 %v2036, %v2273
      %s2308 = scalar_lea.vmem %s1, 24
      %v2309 = vld [vmem:[%s2308] sm:$0xf]
      %v2311 = vsel %vm198, %v370, 0
      %v2314 = vsel %vm198, %v371, 0
      %v2317 = vsel %vm569, %v2309, 0
      %2319 = vmatprep.subr.mxu0 0.0
      %2320 = vmatpush1.msra.mxu0 0.0
      %2321 = vmatprep.subr.mxu0 0.0
      %2322 = vmatpush1.msra.mxu0 0.0
      %2323 = vmatprep.subr.mxu0 0.0
      %2324 = vmatpush1.msra.mxu0 0.0
      %2325 = vmatprep.subr.mxu0 0.0
      %2326 = vmatpush1.msra.mxu0 0.0
      %2327 = vmatprep.subr.mxu0 0.0
      %2328 = vmatpush1.msra.mxu0 0.0
      %2329 = vmatprep.subr.mxu0 0.0
      %2330 = vmatpush1.msra.mxu0 0.0
      %2331 = vmatprep.subr.mxu0 0.0
      %2332 = vmatpush1.msra.mxu0 0.0
      %2333 = vmatprep.subr.mxu0 0.0
      %2334 = vmatpush1.msra.mxu0 0.0
      %2335 = vmatprep.subr.mxu0 0.0
      %2336 = vmatpush1.msra.mxu0 0.0
      %2337 = vmatprep.subr.mxu0 0.0
      %2338 = vmatpush1.msra.mxu0 0.0
      %2339 = vmatprep.subr.mxu0 0.0
      %2340 = vmatpush1.msra.mxu0 0.0
      %2341 = vmatprep.subr.mxu0 0.0
      %2342 = vmatpush1.msra.mxu0 0.0
      %2343 = vmatprep.subr.mxu0 0.0
      %2344 = vmatpush1.msra.mxu0 0.0
      %2345 = vmatprep.subr.mxu0 0.0
      %2346 = vmatpush1.msra.mxu0 0.0
      %2347 = vmatprep.subr.mxu0 0.0
      %2348 = vmatpush1.msra.mxu0 0.0
      %2349 = vmatprep.subr.mxu0 0.0
      %2350 = vmatpush1.msra.mxu0 %v2317
      %2351 = vmatprep.subr.mxu0 0.0
      %2352 = vmatpush2.msra.mxu0 0.0
      %2353 = vmatprep.subr.mxu0 0.0
      %2354 = vmatpush2.msra.mxu0 0.0
      %2355 = vmatprep.subr.mxu0 0.0
      %2356 = vmatpush2.msra.mxu0 0.0
      %2357 = vmatprep.subr.mxu0 0.0
      %2358 = vmatpush2.msra.mxu0 0.0
      %2359 = vmatprep.subr.mxu0 0.0
      %2360 = vmatpush2.msra.mxu0 0.0
      %2361 = vmatprep.subr.mxu0 0.0
      %2362 = vmatpush2.msra.mxu0 0.0
      %2363 = vmatprep.subr.mxu0 0.0
      %2364 = vmatpush2.msra.mxu0 0.0
      %2365 = vmatprep.subr.mxu0 0.0
      %2366 = vmatpush2.msra.mxu0 0.0
      %2367 = vmatprep.subr.mxu0 0.0
      %2368 = vmatpush2.msra.mxu0 0.0
      %2369 = vmatprep.subr.mxu0 0.0
      %2370 = vmatpush2.msra.mxu0 0.0
      %2371 = vmatprep.subr.mxu0 0.0
      %2372 = vmatpush2.msra.mxu0 0.0
      %2373 = vmatprep.subr.mxu0 0.0
      %2374 = vmatpush2.msra.mxu0 0.0
      %2375 = vmatprep.subr.mxu0 0.0
      %2376 = vmatpush2.msra.mxu0 0.0
      %2377 = vmatprep.subr.mxu0 0.0
      %2378 = vmatpush2.msra.mxu0 0.0
      %2379 = vmatprep.subr.mxu0 0.0
      %2380 = vmatpush2.msra.mxu0 0.0
      %2381 = vmatprep.subr.mxu0 0.0
      %2382 = vmatpush2.msra.mxu0 0.0
      %2383 = vmatprep.mubr.f32.mxu0 0.0
      %2384 = vmatmul.mubr.f32.gmra.mxu0 %v806
      %v2385 = vpop.f32.mrf.mxu0
      %v2386 = vadd.f32 0.0, %v2385
      %v2387 = vpop.f32.mrf.mxu0
      %2388 = vmatprep.mubr.f32.mxu0 0.0
      %2389 = vmatmul.mubr.f32.gmra.mxu0 %v808
      %v2390 = vpop.f32.mrf.mxu0
      %v2391 = vadd.f32 0.0, %v2390
      %v2392 = vpop.f32.mrf.mxu0
      %2393 = vmatprep.mubr.f32.mxu0 0.0
      %2394 = vmatmul.mubr.f32.gmra.mxu0 %v810
      %v2395 = vpop.f32.mrf.mxu0
      %v2396 = vadd.f32 0.0, %v2395
      %v2397 = vpop.f32.mrf.mxu0
      %2398 = vmatprep.mubr.f32.mxu0 0.0
      %2399 = vmatmul.mubr.f32.gmra.mxu0 %v812
      %v2400 = vpop.f32.mrf.mxu0
      %v2401 = vadd.f32 0.0, %v2400
      %v2402 = vpop.f32.mrf.mxu0
      %2403 = vmatprep.mubr.f32.mxu0 0.0
      %2404 = vmatmul.mubr.f32.gmra.mxu0 %v814
      %v2405 = vpop.f32.mrf.mxu0
      %v2406 = vadd.f32 0.0, %v2405
      %v2407 = vpop.f32.mrf.mxu0
      %2408 = vmatprep.mubr.f32.mxu0 0.0
      %2409 = vmatmul.mubr.f32.gmra.mxu0 %v816
      %v2410 = vpop.f32.mrf.mxu0
      %v2411 = vadd.f32 0.0, %v2410
      %v2412 = vpop.f32.mrf.mxu0
      %2413 = vmatprep.mubr.f32.mxu0 0.0
      %2414 = vmatmul.mubr.f32.gmra.mxu0 %v818
      %v2415 = vpop.f32.mrf.mxu0
      %v2416 = vadd.f32 0.0, %v2415
      %v2417 = vpop.f32.mrf.mxu0
      %2418 = vmatprep.mubr.f32.mxu0 0.0
      %2419 = vmatmul.mubr.f32.gmra.mxu0 %v820
      %v2420 = vpop.f32.mrf.mxu0
      %v2421 = vadd.f32 0.0, %v2420
      %v2422 = vpop.f32.mrf.mxu0
      %2423 = vmatprep.mubr.f32.mxu0 0.0
      %2424 = vmatmul.mubr.f32.gmra.mxu0 %v822
      %v2425 = vpop.f32.mrf.mxu0
      %v2426 = vadd.f32 0.0, %v2425
      %v2427 = vpop.f32.mrf.mxu0
      %2428 = vmatprep.mubr.f32.mxu0 0.0
      %2429 = vmatmul.mubr.f32.gmra.mxu0 %v824
      %v2430 = vpop.f32.mrf.mxu0
      %v2431 = vadd.f32 0.0, %v2430
      %v2432 = vpop.f32.mrf.mxu0
      %2433 = vmatprep.mubr.f32.mxu0 0.0
      %2434 = vmatmul.mubr.f32.gmra.mxu0 %v826
      %v2435 = vpop.f32.mrf.mxu0
      %v2436 = vadd.f32 0.0, %v2435
      %v2437 = vpop.f32.mrf.mxu0
      %2438 = vmatprep.mubr.f32.mxu0 0.0
      %2439 = vmatmul.mubr.f32.gmra.mxu0 %v828
      %v2440 = vpop.f32.mrf.mxu0
      %v2441 = vadd.f32 0.0, %v2440
      %v2442 = vpop.f32.mrf.mxu0
      %2443 = vmatprep.mubr.f32.mxu0 0.0
      %2444 = vmatmul.mubr.f32.gmra.mxu0 %v830
      %v2445 = vpop.f32.mrf.mxu0
      %v2446 = vadd.f32 0.0, %v2445
      %v2447 = vpop.f32.mrf.mxu0
      %2448 = vmatprep.mubr.f32.mxu0 0.0
      %2449 = vmatmul.mubr.f32.gmra.mxu0 %v832
      %v2450 = vpop.f32.mrf.mxu0
      %v2451 = vadd.f32 0.0, %v2450
      %v2452 = vpop.f32.mrf.mxu0
      %2453 = vmatprep.mubr.f32.mxu0 0.0
      %2454 = vmatmul.mubr.f32.gmra.mxu0 %v834
      %v2455 = vpop.f32.mrf.mxu0
      %v2456 = vadd.f32 0.0, %v2455
      %v2457 = vpop.f32.mrf.mxu0
      %2458 = vmatprep.mubr.f32.mxu0 0.0
      %2459 = vmatmul.mubr.f32.gmra.mxu0 %v836
      %v2460 = vpop.f32.mrf.mxu0
      %v2461 = vadd.f32 0.0, %v2460
      %v2462 = vpop.f32.mrf.mxu0
      %2463 = vmatprep.mubr.f32.mxu0 0.0
      %2464 = vmatmul.mubr.f32.gmra.mxu0 %v838
      %v2465 = vpop.f32.mrf.mxu0
      %v2466 = vadd.f32 0.0, %v2465
      %v2467 = vpop.f32.mrf.mxu0
      %2468 = vmatprep.mubr.f32.mxu0 0.0
      %2469 = vmatmul.mubr.f32.gmra.mxu0 %v840
      %v2470 = vpop.f32.mrf.mxu0
      %v2471 = vadd.f32 0.0, %v2470
      %v2472 = vpop.f32.mrf.mxu0
      %2473 = vmatprep.mubr.f32.mxu0 0.0
      %2474 = vmatmul.mubr.f32.gmra.mxu0 %v842
      %v2475 = vpop.f32.mrf.mxu0
      %v2476 = vadd.f32 0.0, %v2475
      %v2477 = vpop.f32.mrf.mxu0
      %2478 = vmatprep.mubr.f32.mxu0 0.0
      %2479 = vmatmul.mubr.f32.gmra.mxu0 %v844
      %v2480 = vpop.f32.mrf.mxu0
      %v2481 = vadd.f32 0.0, %v2480
      %v2482 = vpop.f32.mrf.mxu0
      %2483 = vmatprep.mubr.f32.mxu0 0.0
      %2484 = vmatmul.mubr.f32.gmra.mxu0 %v846
      %v2485 = vpop.f32.mrf.mxu0
      %v2486 = vadd.f32 0.0, %v2485
      %v2487 = vpop.f32.mrf.mxu0
      %2488 = vmatprep.mubr.f32.mxu0 0.0
      %2489 = vmatmul.mubr.f32.gmra.mxu0 %v848
      %v2490 = vpop.f32.mrf.mxu0
      %v2491 = vadd.f32 0.0, %v2490
      %v2492 = vpop.f32.mrf.mxu0
      %2493 = vmatprep.mubr.f32.mxu0 0.0
      %2494 = vmatmul.mubr.f32.gmra.mxu0 %v850
      %v2495 = vpop.f32.mrf.mxu0
      %v2496 = vadd.f32 0.0, %v2495
      %v2497 = vpop.f32.mrf.mxu0
      %2498 = vmatprep.mubr.f32.mxu0 0.0
      %2499 = vmatmul.mubr.f32.gmra.mxu0 %v852
      %v2500 = vpop.f32.mrf.mxu0
      %v2501 = vadd.f32 0.0, %v2500
      %v2502 = vpop.f32.mrf.mxu0
      %2503 = vmatprep.mubr.f32.mxu0 0.0
      %2504 = vmatmul.mubr.f32.gmra.mxu0 %v854
      %v2505 = vpop.f32.mrf.mxu0
      %v2506 = vadd.f32 0.0, %v2505
      %v2507 = vpop.f32.mrf.mxu0
      %2508 = vmatprep.mubr.f32.mxu0 0.0
      %2509 = vmatmul.mubr.f32.gmra.mxu0 %v856
      %v2510 = vpop.f32.mrf.mxu0
      %v2511 = vadd.f32 0.0, %v2510
      %v2512 = vpop.f32.mrf.mxu0
      %2513 = vmatprep.mubr.f32.mxu0 0.0
      %2514 = vmatmul.mubr.f32.gmra.mxu0 %v858
      %v2515 = vpop.f32.mrf.mxu0
      %v2516 = vadd.f32 0.0, %v2515
      %v2517 = vpop.f32.mrf.mxu0
      %2518 = vmatprep.mubr.f32.mxu0 0.0
      %2519 = vmatmul.mubr.f32.gmra.mxu0 %v860
      %v2520 = vpop.f32.mrf.mxu0
      %v2521 = vadd.f32 0.0, %v2520
      %v2522 = vpop.f32.mrf.mxu0
      %2523 = vmatprep.mubr.f32.mxu0 0.0
      %2524 = vmatmul.mubr.f32.gmra.mxu0 %v1500
      %v2525 = vpop.f32.mrf.mxu0
      %v2526 = vadd.f32 0.0, %v2525
      %v2527 = vpop.f32.mrf.mxu0
      %2528 = vmatprep.mubr.f32.mxu0 0.0
      %2529 = vmatmul.mubr.f32.gmra.mxu0 %v1503
      %v2530 = vpop.f32.mrf.mxu0
      %v2531 = vadd.f32 0.0, %v2530
      %v2532 = vpop.f32.mrf.mxu0
      %2533 = vmatprep.mubr.f32.mxu0 0.0
      %2534 = vmatmul.mubr.f32.gmra.mxu0 %v2311
      %v2535 = vpop.f32.mrf.mxu0
      %v2536 = vadd.f32 0.0, %v2535
      %v2537 = vpop.f32.mrf.mxu0
      %2538 = vmatprep.mubr.f32.mxu0 0.0
      %2539 = vmatmul.mubr.f32.gmra.mxu0 %v2314
      %v2540 = vpop.f32.mrf.mxu0
      %v2541 = vadd.f32 0.0, %v2540
      %v2542 = vpop.f32.mrf.mxu0
      %2543 = vdwg.mxu0
      %v2544 = vadd.f32 %v2276, %v2386
      %v2545 = vadd.f32 %v2277, %v2391
      %v2546 = vadd.f32 %v2278, %v2396
      %v2547 = vadd.f32 %v2279, %v2401
      %v2548 = vadd.f32 %v2280, %v2406
      %v2549 = vadd.f32 %v2281, %v2411
      %v2550 = vadd.f32 %v2282, %v2416
      %v2551 = vadd.f32 %v2283, %v2421
      %v2552 = vadd.f32 %v2284, %v2426
      %v2553 = vadd.f32 %v2285, %v2431
      %v2554 = vadd.f32 %v2286, %v2436
      %v2555 = vadd.f32 %v2287, %v2441
      %v2556 = vadd.f32 %v2288, %v2446
      %v2557 = vadd.f32 %v2289, %v2451
      %v2558 = vadd.f32 %v2290, %v2456
      %v2559 = vadd.f32 %v2291, %v2461
      %v2560 = vadd.f32 %v2292, %v2466
      %v2561 = vadd.f32 %v2293, %v2471
      %v2562 = vadd.f32 %v2294, %v2476
      %v2563 = vadd.f32 %v2295, %v2481
      %v2564 = vadd.f32 %v2296, %v2486
      %v2565 = vadd.f32 %v2297, %v2491
      %v2566 = vadd.f32 %v2298, %v2496
      %v2567 = vadd.f32 %v2299, %v2501
      %v2568 = vadd.f32 %v2300, %v2506
      %v2569 = vadd.f32 %v2301, %v2511
      %v2570 = vadd.f32 %v2302, %v2516
      %v2571 = vadd.f32 %v2303, %v2521
      %v2572 = vadd.f32 %v2304, %v2526
      %v2573 = vadd.f32 %v2305, %v2531
      %v2574 = vadd.f32 %v2306, %v2536
      %v2575 = vadd.f32 %v2307, %v2541
      %v2577 = vrot.slane %v370, 1
      %v2578 = vrot.slane %v371, 1
      %v2579 = vsel %vm422, %v2577, %v2578
      %v2580 = vrot.slane %v372, 1
      %v2581 = vsel %vm422, %v2578, %v2580
      %s2582 = scalar_lea.vmem %s1, 28
      %v2583 = vld [vmem:[%s2582] sm:$0xf]
      %v2584 = vsel %vm198, %v2579, 0
      %v2586 = vsel %vm198, %v2581, 0
      %v2589 = vsel %vm569, %v2583, 0
      %2591 = vmatprep.subr.mxu0 0.0
      %2592 = vmatpush1.msra.mxu0 0.0
      %2593 = vmatprep.subr.mxu0 0.0
      %2594 = vmatpush1.msra.mxu0 0.0
      %2595 = vmatprep.subr.mxu0 0.0
      %2596 = vmatpush1.msra.mxu0 0.0
      %2597 = vmatprep.subr.mxu0 0.0
      %2598 = vmatpush1.msra.mxu0 0.0
      %2599 = vmatprep.subr.mxu0 0.0
      %2600 = vmatpush1.msra.mxu0 0.0
      %2601 = vmatprep.subr.mxu0 0.0
      %2602 = vmatpush1.msra.mxu0 0.0
      %2603 = vmatprep.subr.mxu0 0.0
      %2604 = vmatpush1.msra.mxu0 0.0
      %2605 = vmatprep.subr.mxu0 0.0
      %2606 = vmatpush1.msra.mxu0 0.0
      %2607 = vmatprep.subr.mxu0 0.0
      %2608 = vmatpush1.msra.mxu0 0.0
      %2609 = vmatprep.subr.mxu0 0.0
      %2610 = vmatpush1.msra.mxu0 0.0
      %2611 = vmatprep.subr.mxu0 0.0
      %2612 = vmatpush1.msra.mxu0 0.0
      %2613 = vmatprep.subr.mxu0 0.0
      %2614 = vmatpush1.msra.mxu0 0.0
      %2615 = vmatprep.subr.mxu0 0.0
      %2616 = vmatpush1.msra.mxu0 0.0
      %2617 = vmatprep.subr.mxu0 0.0
      %2618 = vmatpush1.msra.mxu0 0.0
      %2619 = vmatprep.subr.mxu0 0.0
      %2620 = vmatpush1.msra.mxu0 0.0
      %2621 = vmatprep.subr.mxu0 0.0
      %2622 = vmatpush1.msra.mxu0 %v2589
      %2623 = vmatprep.subr.mxu0 0.0
      %2624 = vmatpush2.msra.mxu0 0.0
      %2625 = vmatprep.subr.mxu0 0.0
      %2626 = vmatpush2.msra.mxu0 0.0
      %2627 = vmatprep.subr.mxu0 0.0
      %2628 = vmatpush2.msra.mxu0 0.0
      %2629 = vmatprep.subr.mxu0 0.0
      %2630 = vmatpush2.msra.mxu0 0.0
      %2631 = vmatprep.subr.mxu0 0.0
      %2632 = vmatpush2.msra.mxu0 0.0
      %2633 = vmatprep.subr.mxu0 0.0
      %2634 = vmatpush2.msra.mxu0 0.0
      %2635 = vmatprep.subr.mxu0 0.0
      %2636 = vmatpush2.msra.mxu0 0.0
      %2637 = vmatprep.subr.mxu0 0.0
      %2638 = vmatpush2.msra.mxu0 0.0
      %2639 = vmatprep.subr.mxu0 0.0
      %2640 = vmatpush2.msra.mxu0 0.0
      %2641 = vmatprep.subr.mxu0 0.0
      %2642 = vmatpush2.msra.mxu0 0.0
      %2643 = vmatprep.subr.mxu0 0.0
      %2644 = vmatpush2.msra.mxu0 0.0
      %2645 = vmatprep.subr.mxu0 0.0
      %2646 = vmatpush2.msra.mxu0 0.0
      %2647 = vmatprep.subr.mxu0 0.0
      %2648 = vmatpush2.msra.mxu0 0.0
      %2649 = vmatprep.subr.mxu0 0.0
      %2650 = vmatpush2.msra.mxu0 0.0
      %2651 = vmatprep.subr.mxu0 0.0
      %2652 = vmatpush2.msra.mxu0 0.0
      %2653 = vmatprep.subr.mxu0 0.0
      %2654 = vmatpush2.msra.mxu0 0.0
      %2655 = vmatprep.mubr.f32.mxu0 0.0
      %2656 = vmatmul.mubr.f32.gmra.mxu0 %v513
      %v2657 = vpop.f32.mrf.mxu0
      %v2658 = vadd.f32 0.0, %v2657
      %v2659 = vpop.f32.mrf.mxu0
      %2660 = vmatprep.mubr.f32.mxu0 0.0
      %2661 = vmatmul.mubr.f32.gmra.mxu0 %v515
      %v2662 = vpop.f32.mrf.mxu0
      %v2663 = vadd.f32 0.0, %v2662
      %v2664 = vpop.f32.mrf.mxu0
      %2665 = vmatprep.mubr.f32.mxu0 0.0
      %2666 = vmatmul.mubr.f32.gmra.mxu0 %v517
      %v2667 = vpop.f32.mrf.mxu0
      %v2668 = vadd.f32 0.0, %v2667
      %v2669 = vpop.f32.mrf.mxu0
      %2670 = vmatprep.mubr.f32.mxu0 0.0
      %2671 = vmatmul.mubr.f32.gmra.mxu0 %v519
      %v2672 = vpop.f32.mrf.mxu0
      %v2673 = vadd.f32 0.0, %v2672
      %v2674 = vpop.f32.mrf.mxu0
      %2675 = vmatprep.mubr.f32.mxu0 0.0
      %2676 = vmatmul.mubr.f32.gmra.mxu0 %v521
      %v2677 = vpop.f32.mrf.mxu0
      %v2678 = vadd.f32 0.0, %v2677
      %v2679 = vpop.f32.mrf.mxu0
      %2680 = vmatprep.mubr.f32.mxu0 0.0
      %2681 = vmatmul.mubr.f32.gmra.mxu0 %v523
      %v2682 = vpop.f32.mrf.mxu0
      %v2683 = vadd.f32 0.0, %v2682
      %v2684 = vpop.f32.mrf.mxu0
      %2685 = vmatprep.mubr.f32.mxu0 0.0
      %2686 = vmatmul.mubr.f32.gmra.mxu0 %v525
      %v2687 = vpop.f32.mrf.mxu0
      %v2688 = vadd.f32 0.0, %v2687
      %v2689 = vpop.f32.mrf.mxu0
      %2690 = vmatprep.mubr.f32.mxu0 0.0
      %2691 = vmatmul.mubr.f32.gmra.mxu0 %v527
      %v2692 = vpop.f32.mrf.mxu0
      %v2693 = vadd.f32 0.0, %v2692
      %v2694 = vpop.f32.mrf.mxu0
      %2695 = vmatprep.mubr.f32.mxu0 0.0
      %2696 = vmatmul.mubr.f32.gmra.mxu0 %v529
      %v2697 = vpop.f32.mrf.mxu0
      %v2698 = vadd.f32 0.0, %v2697
      %v2699 = vpop.f32.mrf.mxu0
      %2700 = vmatprep.mubr.f32.mxu0 0.0
      %2701 = vmatmul.mubr.f32.gmra.mxu0 %v531
      %v2702 = vpop.f32.mrf.mxu0
      %v2703 = vadd.f32 0.0, %v2702
      %v2704 = vpop.f32.mrf.mxu0
      %2705 = vmatprep.mubr.f32.mxu0 0.0
      %2706 = vmatmul.mubr.f32.gmra.mxu0 %v533
      %v2707 = vpop.f32.mrf.mxu0
      %v2708 = vadd.f32 0.0, %v2707
      %v2709 = vpop.f32.mrf.mxu0
      %2710 = vmatprep.mubr.f32.mxu0 0.0
      %2711 = vmatmul.mubr.f32.gmra.mxu0 %v535
      %v2712 = vpop.f32.mrf.mxu0
      %v2713 = vadd.f32 0.0, %v2712
      %v2714 = vpop.f32.mrf.mxu0
      %2715 = vmatprep.mubr.f32.mxu0 0.0
      %2716 = vmatmul.mubr.f32.gmra.mxu0 %v537
      %v2717 = vpop.f32.mrf.mxu0
      %v2718 = vadd.f32 0.0, %v2717
      %v2719 = vpop.f32.mrf.mxu0
      %2720 = vmatprep.mubr.f32.mxu0 0.0
      %2721 = vmatmul.mubr.f32.gmra.mxu0 %v539
      %v2722 = vpop.f32.mrf.mxu0
      %v2723 = vadd.f32 0.0, %v2722
      %v2724 = vpop.f32.mrf.mxu0
      %2725 = vmatprep.mubr.f32.mxu0 0.0
      %2726 = vmatmul.mubr.f32.gmra.mxu0 %v541
      %v2727 = vpop.f32.mrf.mxu0
      %v2728 = vadd.f32 0.0, %v2727
      %v2729 = vpop.f32.mrf.mxu0
      %2730 = vmatprep.mubr.f32.mxu0 0.0
      %2731 = vmatmul.mubr.f32.gmra.mxu0 %v543
      %v2732 = vpop.f32.mrf.mxu0
      %v2733 = vadd.f32 0.0, %v2732
      %v2734 = vpop.f32.mrf.mxu0
      %2735 = vmatprep.mubr.f32.mxu0 0.0
      %2736 = vmatmul.mubr.f32.gmra.mxu0 %v545
      %v2737 = vpop.f32.mrf.mxu0
      %v2738 = vadd.f32 0.0, %v2737
      %v2739 = vpop.f32.mrf.mxu0
      %2740 = vmatprep.mubr.f32.mxu0 0.0
      %2741 = vmatmul.mubr.f32.gmra.mxu0 %v547
      %v2742 = vpop.f32.mrf.mxu0
      %v2743 = vadd.f32 0.0, %v2742
      %v2744 = vpop.f32.mrf.mxu0
      %2745 = vmatprep.mubr.f32.mxu0 0.0
      %2746 = vmatmul.mubr.f32.gmra.mxu0 %v549
      %v2747 = vpop.f32.mrf.mxu0
      %v2748 = vadd.f32 0.0, %v2747
      %v2749 = vpop.f32.mrf.mxu0
      %2750 = vmatprep.mubr.f32.mxu0 0.0
      %2751 = vmatmul.mubr.f32.gmra.mxu0 %v551
      %v2752 = vpop.f32.mrf.mxu0
      %v2753 = vadd.f32 0.0, %v2752
      %v2754 = vpop.f32.mrf.mxu0
      %2755 = vmatprep.mubr.f32.mxu0 0.0
      %2756 = vmatmul.mubr.f32.gmra.mxu0 %v553
      %v2757 = vpop.f32.mrf.mxu0
      %v2758 = vadd.f32 0.0, %v2757
      %v2759 = vpop.f32.mrf.mxu0
      %2760 = vmatprep.mubr.f32.mxu0 0.0
      %2761 = vmatmul.mubr.f32.gmra.mxu0 %v555
      %v2762 = vpop.f32.mrf.mxu0
      %v2763 = vadd.f32 0.0, %v2762
      %v2764 = vpop.f32.mrf.mxu0
      %2765 = vmatprep.mubr.f32.mxu0 0.0
      %2766 = vmatmul.mubr.f32.gmra.mxu0 %v557
      %v2767 = vpop.f32.mrf.mxu0
      %v2768 = vadd.f32 0.0, %v2767
      %v2769 = vpop.f32.mrf.mxu0
      %2770 = vmatprep.mubr.f32.mxu0 0.0
      %2771 = vmatmul.mubr.f32.gmra.mxu0 %v559
      %v2772 = vpop.f32.mrf.mxu0
      %v2773 = vadd.f32 0.0, %v2772
      %v2774 = vpop.f32.mrf.mxu0
      %2775 = vmatprep.mubr.f32.mxu0 0.0
      %2776 = vmatmul.mubr.f32.gmra.mxu0 %v561
      %v2777 = vpop.f32.mrf.mxu0
      %v2778 = vadd.f32 0.0, %v2777
      %v2779 = vpop.f32.mrf.mxu0
      %2780 = vmatprep.mubr.f32.mxu0 0.0
      %2781 = vmatmul.mubr.f32.gmra.mxu0 %v563
      %v2782 = vpop.f32.mrf.mxu0
      %v2783 = vadd.f32 0.0, %v2782
      %v2784 = vpop.f32.mrf.mxu0
      %2785 = vmatprep.mubr.f32.mxu0 0.0
      %2786 = vmatmul.mubr.f32.gmra.mxu0 %v565
      %v2787 = vpop.f32.mrf.mxu0
      %v2788 = vadd.f32 0.0, %v2787
      %v2789 = vpop.f32.mrf.mxu0
      %2790 = vmatprep.mubr.f32.mxu0 0.0
      %2791 = vmatmul.mubr.f32.gmra.mxu0 %v567
      %v2792 = vpop.f32.mrf.mxu0
      %v2793 = vadd.f32 0.0, %v2792
      %v2794 = vpop.f32.mrf.mxu0
      %2795 = vmatprep.mubr.f32.mxu0 0.0
      %2796 = vmatmul.mubr.f32.gmra.mxu0 %v1773
      %v2797 = vpop.f32.mrf.mxu0
      %v2798 = vadd.f32 0.0, %v2797
      %v2799 = vpop.f32.mrf.mxu0
      %2800 = vmatprep.mubr.f32.mxu0 0.0
      %2801 = vmatmul.mubr.f32.gmra.mxu0 %v1775
      %v2802 = vpop.f32.mrf.mxu0
      %v2803 = vadd.f32 0.0, %v2802
      %v2804 = vpop.f32.mrf.mxu0
      %2805 = vmatprep.mubr.f32.mxu0 0.0
      %2806 = vmatmul.mubr.f32.gmra.mxu0 %v2584
      %v2807 = vpop.f32.mrf.mxu0
      %v2808 = vadd.f32 0.0, %v2807
      %v2809 = vpop.f32.mrf.mxu0
      %2810 = vmatprep.mubr.f32.mxu0 0.0
      %2811 = vmatmul.mubr.f32.gmra.mxu0 %v2586
      %v2812 = vpop.f32.mrf.mxu0
      %v2813 = vadd.f32 0.0, %v2812
      %v2814 = vpop.f32.mrf.mxu0
      %2815 = vdwg.mxu0
      %v2816 = vadd.f32 %v2544, %v2658
      %v2817 = vadd.f32 %v2545, %v2663
      %v2818 = vadd.f32 %v2546, %v2668
      %v2819 = vadd.f32 %v2547, %v2673
      %v2820 = vadd.f32 %v2548, %v2678
      %v2821 = vadd.f32 %v2549, %v2683
      %v2822 = vadd.f32 %v2550, %v2688
      %v2823 = vadd.f32 %v2551, %v2693
      %v2824 = vadd.f32 %v2552, %v2698
      %v2825 = vadd.f32 %v2553, %v2703
      %v2826 = vadd.f32 %v2554, %v2708
      %v2827 = vadd.f32 %v2555, %v2713
      %v2828 = vadd.f32 %v2556, %v2718
      %v2829 = vadd.f32 %v2557, %v2723
      %v2830 = vadd.f32 %v2558, %v2728
      %v2831 = vadd.f32 %v2559, %v2733
      %v2832 = vadd.f32 %v2560, %v2738
      %v2833 = vadd.f32 %v2561, %v2743
      %v2834 = vadd.f32 %v2562, %v2748
      %v2835 = vadd.f32 %v2563, %v2753
      %v2836 = vadd.f32 %v2564, %v2758
      %v2837 = vadd.f32 %v2565, %v2763
      %v2838 = vadd.f32 %v2566, %v2768
      %v2839 = vadd.f32 %v2567, %v2773
      %v2840 = vadd.f32 %v2568, %v2778
      %v2841 = vadd.f32 %v2569, %v2783
      %v2842 = vadd.f32 %v2570, %v2788
      %v2843 = vadd.f32 %v2571, %v2793
      %v2844 = vadd.f32 %v2572, %v2798
      %v2845 = vadd.f32 %v2573, %v2803
      %v2846 = vadd.f32 %v2574, %v2808
      %v2847 = vadd.f32 %v2575, %v2813
      %v2848 = vrot.slane %v370, 2
      %v2849 = vrot.slane %v371, 2
      %v2850 = vsel %vm1090, %v2848, %v2849
      %v2851 = vrot.slane %v372, 2
      %v2852 = vsel %vm1090, %v2849, %v2851
      %s2853 = scalar_lea.vmem %s1, 32
      %v2854 = vld [vmem:[%s2853] sm:$0xf]
      %v2855 = vsel %vm198, %v2850, 0
      %v2857 = vsel %vm198, %v2852, 0
      %v2860 = vsel %vm569, %v2854, 0
      %2862 = vmatprep.subr.mxu0 0.0
      %2863 = vmatpush1.msra.mxu0 0.0
      %2864 = vmatprep.subr.mxu0 0.0
      %2865 = vmatpush1.msra.mxu0 0.0
      %2866 = vmatprep.subr.mxu0 0.0
      %2867 = vmatpush1.msra.mxu0 0.0
      %2868 = vmatprep.subr.mxu0 0.0
      %2869 = vmatpush1.msra.mxu0 0.0
      %2870 = vmatprep.subr.mxu0 0.0
      %2871 = vmatpush1.msra.mxu0 0.0
      %2872 = vmatprep.subr.mxu0 0.0
      %2873 = vmatpush1.msra.mxu0 0.0
      %2874 = vmatprep.subr.mxu0 0.0
      %2875 = vmatpush1.msra.mxu0 0.0
      %2876 = vmatprep.subr.mxu0 0.0
      %2877 = vmatpush1.msra.mxu0 0.0
      %2878 = vmatprep.subr.mxu0 0.0
      %2879 = vmatpush1.msra.mxu0 0.0
      %2880 = vmatprep.subr.mxu0 0.0
      %2881 = vmatpush1.msra.mxu0 0.0
      %2882 = vmatprep.subr.mxu0 0.0
      %2883 = vmatpush1.msra.mxu0 0.0
      %2884 = vmatprep.subr.mxu0 0.0
      %2885 = vmatpush1.msra.mxu0 0.0
      %2886 = vmatprep.subr.mxu0 0.0
      %2887 = vmatpush1.msra.mxu0 0.0
      %2888 = vmatprep.subr.mxu0 0.0
      %2889 = vmatpush1.msra.mxu0 0.0
      %2890 = vmatprep.subr.mxu0 0.0
      %2891 = vmatpush1.msra.mxu0 0.0
      %2892 = vmatprep.subr.mxu0 0.0
      %2893 = vmatpush1.msra.mxu0 %v2860
      %2894 = vmatprep.subr.mxu0 0.0
      %2895 = vmatpush2.msra.mxu0 0.0
      %2896 = vmatprep.subr.mxu0 0.0
      %2897 = vmatpush2.msra.mxu0 0.0
      %2898 = vmatprep.subr.mxu0 0.0
      %2899 = vmatpush2.msra.mxu0 0.0
      %2900 = vmatprep.subr.mxu0 0.0
      %2901 = vmatpush2.msra.mxu0 0.0
      %2902 = vmatprep.subr.mxu0 0.0
      %2903 = vmatpush2.msra.mxu0 0.0
      %2904 = vmatprep.subr.mxu0 0.0
      %2905 = vmatpush2.msra.mxu0 0.0
      %2906 = vmatprep.subr.mxu0 0.0
      %2907 = vmatpush2.msra.mxu0 0.0
      %2908 = vmatprep.subr.mxu0 0.0
      %2909 = vmatpush2.msra.mxu0 0.0
      %2910 = vmatprep.subr.mxu0 0.0
      %2911 = vmatpush2.msra.mxu0 0.0
      %2912 = vmatprep.subr.mxu0 0.0
      %2913 = vmatpush2.msra.mxu0 0.0
      %2914 = vmatprep.subr.mxu0 0.0
      %2915 = vmatpush2.msra.mxu0 0.0
      %2916 = vmatprep.subr.mxu0 0.0
      %2917 = vmatpush2.msra.mxu0 0.0
      %2918 = vmatprep.subr.mxu0 0.0
      %2919 = vmatpush2.msra.mxu0 0.0
      %2920 = vmatprep.subr.mxu0 0.0
      %2921 = vmatpush2.msra.mxu0 0.0
      %2922 = vmatprep.subr.mxu0 0.0
      %2923 = vmatpush2.msra.mxu0 0.0
      %2924 = vmatprep.subr.mxu0 0.0
      %2925 = vmatpush2.msra.mxu0 0.0
      %2926 = vmatprep.mubr.f32.mxu0 0.0
      %2927 = vmatmul.mubr.f32.gmra.mxu0 %v1181
      %v2928 = vpop.f32.mrf.mxu0
      %v2929 = vadd.f32 0.0, %v2928
      %v2930 = vpop.f32.mrf.mxu0
      %2931 = vmatprep.mubr.f32.mxu0 0.0
      %2932 = vmatmul.mubr.f32.gmra.mxu0 %v1183
      %v2933 = vpop.f32.mrf.mxu0
      %v2934 = vadd.f32 0.0, %v2933
      %v2935 = vpop.f32.mrf.mxu0
      %2936 = vmatprep.mubr.f32.mxu0 0.0
      %2937 = vmatmul.mubr.f32.gmra.mxu0 %v1185
      %v2938 = vpop.f32.mrf.mxu0
      %v2939 = vadd.f32 0.0, %v2938
      %v2940 = vpop.f32.mrf.mxu0
      %2941 = vmatprep.mubr.f32.mxu0 0.0
      %2942 = vmatmul.mubr.f32.gmra.mxu0 %v1187
      %v2943 = vpop.f32.mrf.mxu0
      %v2944 = vadd.f32 0.0, %v2943
      %v2945 = vpop.f32.mrf.mxu0
      %2946 = vmatprep.mubr.f32.mxu0 0.0
      %2947 = vmatmul.mubr.f32.gmra.mxu0 %v1189
      %v2948 = vpop.f32.mrf.mxu0
      %v2949 = vadd.f32 0.0, %v2948
      %v2950 = vpop.f32.mrf.mxu0
      %2951 = vmatprep.mubr.f32.mxu0 0.0
      %2952 = vmatmul.mubr.f32.gmra.mxu0 %v1191
      %v2953 = vpop.f32.mrf.mxu0
      %v2954 = vadd.f32 0.0, %v2953
      %v2955 = vpop.f32.mrf.mxu0
      %2956 = vmatprep.mubr.f32.mxu0 0.0
      %2957 = vmatmul.mubr.f32.gmra.mxu0 %v1193
      %v2958 = vpop.f32.mrf.mxu0
      %v2959 = vadd.f32 0.0, %v2958
      %v2960 = vpop.f32.mrf.mxu0
      %2961 = vmatprep.mubr.f32.mxu0 0.0
      %2962 = vmatmul.mubr.f32.gmra.mxu0 %v1195
      %v2963 = vpop.f32.mrf.mxu0
      %v2964 = vadd.f32 0.0, %v2963
      %v2965 = vpop.f32.mrf.mxu0
      %2966 = vmatprep.mubr.f32.mxu0 0.0
      %2967 = vmatmul.mubr.f32.gmra.mxu0 %v1197
      %v2968 = vpop.f32.mrf.mxu0
      %v2969 = vadd.f32 0.0, %v2968
      %v2970 = vpop.f32.mrf.mxu0
      %2971 = vmatprep.mubr.f32.mxu0 0.0
      %2972 = vmatmul.mubr.f32.gmra.mxu0 %v1199
      %v2973 = vpop.f32.mrf.mxu0
      %v2974 = vadd.f32 0.0, %v2973
      %v2975 = vpop.f32.mrf.mxu0
      %2976 = vmatprep.mubr.f32.mxu0 0.0
      %2977 = vmatmul.mubr.f32.gmra.mxu0 %v1201
      %v2978 = vpop.f32.mrf.mxu0
      %v2979 = vadd.f32 0.0, %v2978
      %v2980 = vpop.f32.mrf.mxu0
      %2981 = vmatprep.mubr.f32.mxu0 0.0
      %2982 = vmatmul.mubr.f32.gmra.mxu0 %v1203
      %v2983 = vpop.f32.mrf.mxu0
      %v2984 = vadd.f32 0.0, %v2983
      %v2985 = vpop.f32.mrf.mxu0
      %2986 = vmatprep.mubr.f32.mxu0 0.0
      %2987 = vmatmul.mubr.f32.gmra.mxu0 %v1205
      %v2988 = vpop.f32.mrf.mxu0
      %v2989 = vadd.f32 0.0, %v2988
      %v2990 = vpop.f32.mrf.mxu0
      %2991 = vmatprep.mubr.f32.mxu0 0.0
      %2992 = vmatmul.mubr.f32.gmra.mxu0 %v1207
      %v2993 = vpop.f32.mrf.mxu0
      %v2994 = vadd.f32 0.0, %v2993
      %v2995 = vpop.f32.mrf.mxu0
      %2996 = vmatprep.mubr.f32.mxu0 0.0
      %2997 = vmatmul.mubr.f32.gmra.mxu0 %v1209
      %v2998 = vpop.f32.mrf.mxu0
      %v2999 = vadd.f32 0.0, %v2998
      %v3000 = vpop.f32.mrf.mxu0
      %3001 = vmatprep.mubr.f32.mxu0 0.0
      %3002 = vmatmul.mubr.f32.gmra.mxu0 %v1211
      %v3003 = vpop.f32.mrf.mxu0
      %v3004 = vadd.f32 0.0, %v3003
      %v3005 = vpop.f32.mrf.mxu0
      %3006 = vmatprep.mubr.f32.mxu0 0.0
      %3007 = vmatmul.mubr.f32.gmra.mxu0 %v1213
      %v3008 = vpop.f32.mrf.mxu0
      %v3009 = vadd.f32 0.0, %v3008
      %v3010 = vpop.f32.mrf.mxu0
      %3011 = vmatprep.mubr.f32.mxu0 0.0
      %3012 = vmatmul.mubr.f32.gmra.mxu0 %v1215
      %v3013 = vpop.f32.mrf.mxu0
      %v3014 = vadd.f32 0.0, %v3013
      %v3015 = vpop.f32.mrf.mxu0
      %3016 = vmatprep.mubr.f32.mxu0 0.0
      %3017 = vmatmul.mubr.f32.gmra.mxu0 %v1217
      %v3018 = vpop.f32.mrf.mxu0
      %v3019 = vadd.f32 0.0, %v3018
      %v3020 = vpop.f32.mrf.mxu0
      %3021 = vmatprep.mubr.f32.mxu0 0.0
      %3022 = vmatmul.mubr.f32.gmra.mxu0 %v1219
      %v3023 = vpop.f32.mrf.mxu0
      %v3024 = vadd.f32 0.0, %v3023
      %v3025 = vpop.f32.mrf.mxu0
      %3026 = vmatprep.mubr.f32.mxu0 0.0
      %3027 = vmatmul.mubr.f32.gmra.mxu0 %v1221
      %v3028 = vpop.f32.mrf.mxu0
      %v3029 = vadd.f32 0.0, %v3028
      %v3030 = vpop.f32.mrf.mxu0
      %3031 = vmatprep.mubr.f32.mxu0 0.0
      %3032 = vmatmul.mubr.f32.gmra.mxu0 %v1223
      %v3033 = vpop.f32.mrf.mxu0
      %v3034 = vadd.f32 0.0, %v3033
      %v3035 = vpop.f32.mrf.mxu0
      %3036 = vmatprep.mubr.f32.mxu0 0.0
      %3037 = vmatmul.mubr.f32.gmra.mxu0 %v1225
      %v3038 = vpop.f32.mrf.mxu0
      %v3039 = vadd.f32 0.0, %v3038
      %v3040 = vpop.f32.mrf.mxu0
      %3041 = vmatprep.mubr.f32.mxu0 0.0
      %3042 = vmatmul.mubr.f32.gmra.mxu0 %v1227
      %v3043 = vpop.f32.mrf.mxu0
      %v3044 = vadd.f32 0.0, %v3043
      %v3045 = vpop.f32.mrf.mxu0
      %3046 = vmatprep.mubr.f32.mxu0 0.0
      %3047 = vmatmul.mubr.f32.gmra.mxu0 %v1229
      %v3048 = vpop.f32.mrf.mxu0
      %v3049 = vadd.f32 0.0, %v3048
      %v3050 = vpop.f32.mrf.mxu0
      %3051 = vmatprep.mubr.f32.mxu0 0.0
      %3052 = vmatmul.mubr.f32.gmra.mxu0 %v1231
      %v3053 = vpop.f32.mrf.mxu0
      %v3054 = vadd.f32 0.0, %v3053
      %v3055 = vpop.f32.mrf.mxu0
      %3056 = vmatprep.mubr.f32.mxu0 0.0
      %3057 = vmatmul.mubr.f32.gmra.mxu0 %v1233
      %v3058 = vpop.f32.mrf.mxu0
      %v3059 = vadd.f32 0.0, %v3058
      %v3060 = vpop.f32.mrf.mxu0
      %3061 = vmatprep.mubr.f32.mxu0 0.0
      %3062 = vmatmul.mubr.f32.gmra.mxu0 %v1235
      %v3063 = vpop.f32.mrf.mxu0
      %v3064 = vadd.f32 0.0, %v3063
      %v3065 = vpop.f32.mrf.mxu0
      %3066 = vmatprep.mubr.f32.mxu0 0.0
      %3067 = vmatmul.mubr.f32.gmra.mxu0 %v2044
      %v3068 = vpop.f32.mrf.mxu0
      %v3069 = vadd.f32 0.0, %v3068
      %v3070 = vpop.f32.mrf.mxu0
      %3071 = vmatprep.mubr.f32.mxu0 0.0
      %3072 = vmatmul.mubr.f32.gmra.mxu0 %v2046
      %v3073 = vpop.f32.mrf.mxu0
      %v3074 = vadd.f32 0.0, %v3073
      %v3075 = vpop.f32.mrf.mxu0
      %3076 = vmatprep.mubr.f32.mxu0 0.0
      %3077 = vmatmul.mubr.f32.gmra.mxu0 %v2855
      %v3078 = vpop.f32.mrf.mxu0
      %v3079 = vadd.f32 0.0, %v3078
      %v3080 = vpop.f32.mrf.mxu0
      %3081 = vmatprep.mubr.f32.mxu0 0.0
      %3082 = vmatmul.mubr.f32.gmra.mxu0 %v2857
      %v3083 = vpop.f32.mrf.mxu0
      %v3084 = vadd.f32 0.0, %v3083
      %v3085 = vpop.f32.mrf.mxu0
      %3086 = vdwg.mxu0
      %v3087 = vadd.f32 %v2816, %v2929
      %v3088 = vadd.f32 %v2817, %v2934
      %v3089 = vadd.f32 %v2818, %v2939
      %v3090 = vadd.f32 %v2819, %v2944
      %v3091 = vadd.f32 %v2820, %v2949
      %v3092 = vadd.f32 %v2821, %v2954
      %v3093 = vadd.f32 %v2822, %v2959
      %v3094 = vadd.f32 %v2823, %v2964
      %v3095 = vadd.f32 %v2824, %v2969
      %v3096 = vadd.f32 %v2825, %v2974
      %v3097 = vadd.f32 %v2826, %v2979
      %v3098 = vadd.f32 %v2827, %v2984
      %v3099 = vadd.f32 %v2828, %v2989
      %v3100 = vadd.f32 %v2829, %v2994
      %v3101 = vadd.f32 %v2830, %v2999
      %v3102 = vadd.f32 %v2831, %v3004
      %v3103 = vadd.f32 %v2832, %v3009
      %v3104 = vadd.f32 %v2833, %v3014
      %v3105 = vadd.f32 %v2834, %v3019
      %v3106 = vadd.f32 %v2835, %v3024
      %v3107 = vadd.f32 %v2836, %v3029
      %v3108 = vadd.f32 %v2837, %v3034
      %v3109 = vadd.f32 %v2838, %v3039
      %v3110 = vadd.f32 %v2839, %v3044
      %v3111 = vadd.f32 %v2840, %v3049
      %v3112 = vadd.f32 %v2841, %v3054
      %v3113 = vadd.f32 %v2842, %v3059
      %v3114 = vadd.f32 %v2843, %v3064
      %v3115 = vadd.f32 %v2844, %v3069
      %v3116 = vadd.f32 %v2845, %v3074
      %v3117 = vadd.f32 %v2846, %v3079
      %v3118 = vadd.f32 %v2847, %v3084
      %v3119 = vld [vmem:[%s2] sm:$0x1]
      %v3121 = vlaneseq
      %v3122 = vshrl.u32 %v3121, 7
      %v3123 = vsub.s32 0, %v3122
      %v3124 = vrot.slane %v3119, %v3123
      %v3126 = vmul.f32 %v3087, %v3124
      %v3127 = vmul.f32 %v3088, %v3124
      %v3128 = vmul.f32 %v3089, %v3124
      %v3129 = vmul.f32 %v3090, %v3124
      %v3130 = vmul.f32 %v3091, %v3124
      %v3131 = vmul.f32 %v3092, %v3124
      %v3132 = vmul.f32 %v3093, %v3124
      %v3133 = vmul.f32 %v3094, %v3124
      %v3134 = vmul.f32 %v3095, %v3124
      %v3135 = vmul.f32 %v3096, %v3124
      %v3136 = vmul.f32 %v3097, %v3124
      %v3137 = vmul.f32 %v3098, %v3124
      %v3138 = vmul.f32 %v3099, %v3124
      %v3139 = vmul.f32 %v3100, %v3124
      %v3140 = vmul.f32 %v3101, %v3124
      %v3141 = vmul.f32 %v3102, %v3124
      %v3142 = vmul.f32 %v3103, %v3124
      %v3143 = vmul.f32 %v3104, %v3124
      %v3144 = vmul.f32 %v3105, %v3124
      %v3145 = vmul.f32 %v3106, %v3124
      %v3146 = vmul.f32 %v3107, %v3124
      %v3147 = vmul.f32 %v3108, %v3124
      %v3148 = vmul.f32 %v3109, %v3124
      %v3149 = vmul.f32 %v3110, %v3124
      %v3150 = vmul.f32 %v3111, %v3124
      %v3151 = vmul.f32 %v3112, %v3124
      %v3152 = vmul.f32 %v3113, %v3124
      %v3153 = vmul.f32 %v3114, %v3124
      %v3154 = vmul.f32 %v3115, %v3124
      %v3155 = vmul.f32 %v3116, %v3124
      %v3156 = vmul.f32 %v3117, %v3124
      %v3157 = vmul.f32 %v3118, %v3124
      %v3158 = vld [vmem:[%s3] sm:$0x1]
      %v3160 = vlaneseq
      %v3161 = vshrl.u32 %v3160, 7
      %v3162 = vsub.s32 0, %v3161
      %v3163 = vrot.slane %v3158, %v3162
      %v3165 = vadd.f32 %v3126, %v3163
      %v3166 = vadd.f32 %v3127, %v3163
      %v3167 = vadd.f32 %v3128, %v3163
      %v3168 = vadd.f32 %v3129, %v3163
      %v3169 = vadd.f32 %v3130, %v3163
      %v3170 = vadd.f32 %v3131, %v3163
      %v3171 = vadd.f32 %v3132, %v3163
      %v3172 = vadd.f32 %v3133, %v3163
      %v3173 = vadd.f32 %v3134, %v3163
      %v3174 = vadd.f32 %v3135, %v3163
      %v3175 = vadd.f32 %v3136, %v3163
      %v3176 = vadd.f32 %v3137, %v3163
      %v3177 = vadd.f32 %v3138, %v3163
      %v3178 = vadd.f32 %v3139, %v3163
      %v3179 = vadd.f32 %v3140, %v3163
      %v3180 = vadd.f32 %v3141, %v3163
      %v3181 = vadd.f32 %v3142, %v3163
      %v3182 = vadd.f32 %v3143, %v3163
      %v3183 = vadd.f32 %v3144, %v3163
      %v3184 = vadd.f32 %v3145, %v3163
      %v3185 = vadd.f32 %v3146, %v3163
      %v3186 = vadd.f32 %v3147, %v3163
      %v3187 = vadd.f32 %v3148, %v3163
      %v3188 = vadd.f32 %v3149, %v3163
      %v3189 = vadd.f32 %v3150, %v3163
      %v3190 = vadd.f32 %v3151, %v3163
      %v3191 = vadd.f32 %v3152, %v3163
      %v3192 = vadd.f32 %v3153, %v3163
      %v3193 = vadd.f32 %v3154, %v3163
      %v3194 = vadd.f32 %v3155, %v3163
      %v3195 = vadd.f32 %v3156, %v3163
      %v3196 = vadd.f32 %v3157, %v3163
      %vm3197 = vcmp.ge.f32.partialorder %v3165, 0.0
      %vm3198 = vcmp.ge.f32.partialorder %v3166, 0.0
      %vm3199 = vcmp.ge.f32.partialorder %v3167, 0.0
      %vm3200 = vcmp.ge.f32.partialorder %v3168, 0.0
      %vm3201 = vcmp.ge.f32.partialorder %v3169, 0.0
      %vm3202 = vcmp.ge.f32.partialorder %v3170, 0.0
      %vm3203 = vcmp.ge.f32.partialorder %v3171, 0.0
      %vm3204 = vcmp.ge.f32.partialorder %v3172, 0.0
      %vm3205 = vcmp.ge.f32.partialorder %v3173, 0.0
      %vm3206 = vcmp.ge.f32.partialorder %v3174, 0.0
      %vm3207 = vcmp.ge.f32.partialorder %v3175, 0.0
      %vm3208 = vcmp.ge.f32.partialorder %v3176, 0.0
      %vm3209 = vcmp.ge.f32.partialorder %v3177, 0.0
      %vm3210 = vcmp.ge.f32.partialorder %v3178, 0.0
      %vm3211 = vcmp.ge.f32.partialorder %v3179, 0.0
      %vm3212 = vcmp.ge.f32.partialorder %v3180, 0.0
      %vm3213 = vcmp.ge.f32.partialorder %v3181, 0.0
      %vm3214 = vcmp.ge.f32.partialorder %v3182, 0.0
      %vm3215 = vcmp.ge.f32.partialorder %v3183, 0.0
      %vm3216 = vcmp.ge.f32.partialorder %v3184, 0.0
      %vm3217 = vcmp.ge.f32.partialorder %v3185, 0.0
      %vm3218 = vcmp.ge.f32.partialorder %v3186, 0.0
      %vm3219 = vcmp.ge.f32.partialorder %v3187, 0.0
      %vm3220 = vcmp.ge.f32.partialorder %v3188, 0.0
      %vm3221 = vcmp.ge.f32.partialorder %v3189, 0.0
      %vm3222 = vcmp.ge.f32.partialorder %v3190, 0.0
      %vm3223 = vcmp.ge.f32.partialorder %v3191, 0.0
      %vm3224 = vcmp.ge.f32.partialorder %v3192, 0.0
      %vm3225 = vcmp.ge.f32.partialorder %v3193, 0.0
      %vm3226 = vcmp.ge.f32.partialorder %v3194, 0.0
      %vm3227 = vcmp.ge.f32.partialorder %v3195, 0.0
      %vm3228 = vcmp.ge.f32.partialorder %v3196, 0.0
      %v3229 = vmul.f32 %v3165, 0.1
      %v3230 = vmul.f32 %v3166, 0.1
      %v3231 = vmul.f32 %v3167, 0.1
      %v3232 = vmul.f32 %v3168, 0.1
      %v3233 = vmul.f32 %v3169, 0.1
      %v3234 = vmul.f32 %v3170, 0.1
      %v3235 = vmul.f32 %v3171, 0.1
      %v3236 = vmul.f32 %v3172, 0.1
      %v3237 = vmul.f32 %v3173, 0.1
      %v3238 = vmul.f32 %v3174, 0.1
      %v3239 = vmul.f32 %v3175, 0.1
      %v3240 = vmul.f32 %v3176, 0.1
      %v3241 = vmul.f32 %v3177, 0.1
      %v3242 = vmul.f32 %v3178, 0.1
      %v3243 = vmul.f32 %v3179, 0.1
      %v3244 = vmul.f32 %v3180, 0.1
      %v3245 = vmul.f32 %v3181, 0.1
      %v3246 = vmul.f32 %v3182, 0.1
      %v3247 = vmul.f32 %v3183, 0.1
      %v3248 = vmul.f32 %v3184, 0.1
      %v3249 = vmul.f32 %v3185, 0.1
      %v3250 = vmul.f32 %v3186, 0.1
      %v3251 = vmul.f32 %v3187, 0.1
      %v3252 = vmul.f32 %v3188, 0.1
      %v3253 = vmul.f32 %v3189, 0.1
      %v3254 = vmul.f32 %v3190, 0.1
      %v3255 = vmul.f32 %v3191, 0.1
      %v3256 = vmul.f32 %v3192, 0.1
      %v3257 = vmul.f32 %v3193, 0.1
      %v3258 = vmul.f32 %v3194, 0.1
      %v3259 = vmul.f32 %v3195, 0.1
      %v3260 = vmul.f32 %v3196, 0.1
      %v3261 = vsel %vm3197, %v3165, %v3229
      %v3262 = vsel %vm3198, %v3166, %v3230
      %v3263 = vsel %vm3199, %v3167, %v3231
      %v3264 = vsel %vm3200, %v3168, %v3232
      %v3265 = vsel %vm3201, %v3169, %v3233
      %v3266 = vsel %vm3202, %v3170, %v3234
      %v3267 = vsel %vm3203, %v3171, %v3235
      %v3268 = vsel %vm3204, %v3172, %v3236
      %v3269 = vsel %vm3205, %v3173, %v3237
      %v3270 = vsel %vm3206, %v3174, %v3238
      %v3271 = vsel %vm3207, %v3175, %v3239
      %v3272 = vsel %vm3208, %v3176, %v3240
      %v3273 = vsel %vm3209, %v3177, %v3241
      %v3274 = vsel %vm3210, %v3178, %v3242
      %v3275 = vsel %vm3211, %v3179, %v3243
      %v3276 = vsel %vm3212, %v3180, %v3244
      %v3277 = vsel %vm3213, %v3181, %v3245
      %v3278 = vsel %vm3214, %v3182, %v3246
      %v3279 = vsel %vm3215, %v3183, %v3247
      %v3280 = vsel %vm3216, %v3184, %v3248
      %v3281 = vsel %vm3217, %v3185, %v3249
      %v3282 = vsel %vm3218, %v3186, %v3250
      %v3283 = vsel %vm3219, %v3187, %v3251
      %v3284 = vsel %vm3220, %v3188, %v3252
      %v3285 = vsel %vm3221, %v3189, %v3253
      %v3286 = vsel %vm3222, %v3190, %v3254
      %v3287 = vsel %vm3223, %v3191, %v3255
      %v3288 = vsel %vm3224, %v3192, %v3256
      %v3289 = vsel %vm3225, %v3193, %v3257
      %v3290 = vsel %vm3226, %v3194, %v3258
      %v3291 = vsel %vm3227, %v3195, %v3259
      %v3292 = vsel %vm3228, %v3196, %v3260
      %vm3293 = vcmask 64512
      %3294 = vst.msk [vmem:[%s197] sm:$0xff] %vm3293, %v3261
      %3295 = vst.msk [vmem:[%s197 + $0x8] sm:$0xff] %vm3293, %v3262
      %3296 = vst.msk [vmem:[%s197 + $0x10] sm:$0xff] %vm3293, %v3263
      %3297 = vst.msk [vmem:[%s197 + $0x18] sm:$0xff] %vm3293, %v3264
      %3298 = vst.msk [vmem:[%s197 + $0x20] sm:$0xff] %vm3293, %v3265
      %3299 = vst.msk [vmem:[%s197 + $0x28] sm:$0xff] %vm3293, %v3266
      %3300 = vst.msk [vmem:[%s197 + $0x30] sm:$0xff] %vm3293, %v3267
      %3301 = vst.msk [vmem:[%s197 + $0x38] sm:$0xff] %vm3293, %v3268
      %3302 = vst.msk [vmem:[%s197 + $0x40] sm:$0xff] %vm3293, %v3269
      %3303 = vst.msk [vmem:[%s197 + $0x48] sm:$0xff] %vm3293, %v3270
      %3304 = vst.msk [vmem:[%s197 + $0x50] sm:$0xff] %vm3293, %v3271
      %3305 = vst.msk [vmem:[%s197 + $0x58] sm:$0xff] %vm3293, %v3272
      %3306 = vst.msk [vmem:[%s197 + $0x60] sm:$0xff] %vm3293, %v3273
      %3307 = vst.msk [vmem:[%s197 + $0x68] sm:$0xff] %vm3293, %v3274
      %3308 = vst.msk [vmem:[%s197 + $0x70] sm:$0xff] %vm3293, %v3275
      %3309 = vst.msk [vmem:[%s197 + $0x78] sm:$0xff] %vm3293, %v3276
      %3310 = vst.msk [vmem:[%s197 + $0x80] sm:$0xff] %vm3293, %v3277
      %3311 = vst.msk [vmem:[%s197 + $0x88] sm:$0xff] %vm3293, %v3278
      %3312 = vst.msk [vmem:[%s197 + $0x90] sm:$0xff] %vm3293, %v3279
      %3313 = vst.msk [vmem:[%s197 + $0x98] sm:$0xff] %vm3293, %v3280
      %3314 = vst.msk [vmem:[%s197 + $0xa0] sm:$0xff] %vm3293, %v3281
      %3315 = vst.msk [vmem:[%s197 + $0xa8] sm:$0xff] %vm3293, %v3282
      %3316 = vst.msk [vmem:[%s197 + $0xb0] sm:$0xff] %vm3293, %v3283
      %3317 = vst.msk [vmem:[%s197 + $0xb8] sm:$0xff] %vm3293, %v3284
      %3318 = vst.msk [vmem:[%s197 + $0xc0] sm:$0xff] %vm3293, %v3285
      %3319 = vst.msk [vmem:[%s197 + $0xc8] sm:$0xff] %vm3293, %v3286
      %3320 = vst.msk [vmem:[%s197 + $0xd0] sm:$0xff] %vm3293, %v3287
      %3321 = vst.msk [vmem:[%s197 + $0xd8] sm:$0xff] %vm3293, %v3288
      %3322 = vst.msk [vmem:[%s197 + $0xe0] sm:$0xff] %vm3293, %v3289
      %3323 = vst.msk [vmem:[%s197 + $0xe8] sm:$0xff] %vm3293, %v3290
      %3324 = vst.msk [vmem:[%s197 + $0xf0] sm:$0xff] %vm3293, %v3291
      %3325 = vst.msk [vmem:[%s197 + $0xf8] sm:$0xff] %vm3293, %v3292
      %p3326 = scmp.lt.s32.totalorder %s15, 1
      %s3327 = scalar_select %p3326, %s15, 1
      %s3328 = smul.addr %s3327, 32
      %s3329 = smul.addr %s3328, 8
      %s3330 = scalar_lea.vmem %s4, %s3329
      // Predicated region
      $region37: #{tpu_custom_call.1} parent=35 // pred_check
        %p3331 = pneg %p122
      $region38: #{tpu_custom_call.1} parent=35 // pred_check_branch
        %3333 = sbr.rel (%p3331) target = $region40
      $region39: #{tpu_custom_call.1} parent=35 // pred_region
        _
      $region40: #{tpu_custom_call.1} parent=35 // pred_fallthru
        _
    $region36: #{tpu_custom_call.1} parent=5 // pred_fallthru
      _
    %p3334 = scmp.le.s32.totalorder 2, %s10
    // Predicated region
    $region41: #{tpu_custom_call.1} parent=5 // pred_check
      %p3335 = pneg %p3334
    $region42: #{tpu_custom_call.1} parent=5 // pred_check_branch
      %3337 = sbr.rel (%p3335) target = $region44
    $region43: #{tpu_custom_call.1} parent=5 // pred_region
      %s3338 = ssub.s32 %s10, 2
      // Predicated region
      $region45: #{tpu_custom_call.1} parent=43 // pred_check
        %p3339 = pneg %p128
      $region46: #{tpu_custom_call.1} parent=43 // pred_check_branch
        %3341 = sbr.rel (%p3339) target = $region48
      $region47: #{tpu_custom_call.1} parent=43 // pred_region
        %p3342 = scmp.lt.s32.totalorder %s16, 1
        %s3343 = scalar_select %p3342, %s16, 1
        %s3344 = smul.addr %s3343, 32
        %s3345 = smul.addr %s3344, 8
        %s3346 = scalar_lea.vmem %s4, %s3345
      $region48: #{tpu_custom_call.1} parent=43 // pred_fallthru
        _
    $region44: #{tpu_custom_call.1} parent=5 // pred_fallthru
      _
  $region6: #{tpu_custom_call.1} parent=0 // loop_footer
    %s14 = sadd.s32 1, %s10
  $region7: #{tpu_custom_call.1} parent=0 // loop_footer_branch
    %9 = sbr.rel target = $region3
  $region8: #{tpu_custom_call.1} parent=0 // loop_exit
    _

</llo_original>
